<compile_context>
chip_gen: v7x
topology: tpu7x:2x2x1
jax: 0.10.0
libtpu: 0.0.40
codegen_flags: <defaults>
</compile_context>

<pallas_src>
import math
import jax
import jax.numpy as jnp
from jax.experimental import pallas as pl
from jax.experimental.pallas import tpu as pltpu

# ---- small config (consistent with the module's forward) --------------------
B, S, H = 2, 8, 32          # batch, seq, hidden
NH = 4                      # num_attention_heads
DH = H // NH                # attention_head_size
I = 4 * H                   # intermediate size
NL = 2                      # num_hidden_layers
EPS = 1e-12                 # BERT LayerNorm eps
BS = B * S                  # rows of the flattened activation slab
NEG = -10000.0              # LARGE_NUMBER_TO_PREVENT_ATTENTION


# ---- ALiBi slopes (trace-time Python constants) ------------------------------
def _alibi_slopes(n_heads):
    def pow2(n):
        start = 2 ** (-2 ** (-(math.log2(n) - 3)))
        return [start * start ** i for i in range(n)]
    if math.log2(n_heads).is_integer():
        return pow2(n_heads)
    c = 2 ** math.floor(math.log2(n_heads))
    return pow2(c) + _alibi_slopes(2 * c)[0::2][: n_heads - c]


_SLOPES = _alibi_slopes(NH)


# ---- in-kernel helpers -------------------------------------------------------
def _layernorm(y, gamma, beta):
    mean = jnp.mean(y, axis=-1, keepdims=True)
    var = jnp.mean(jnp.square(y - mean), axis=-1, keepdims=True)
    return (y - mean) * jax.lax.rsqrt(var + EPS) * gamma + beta


def _gelu_exact(x):
    return 0.5 * x * (1.0 + jax.lax.erf(x / jnp.sqrt(2.0).astype(x.dtype)))


# ---- single fused encoder kernel ---------------------------------------------
def encoder_kernel(x_ref, mask_ref,
                   wqkv_ref, bqkv_ref, wo_ref, bo_ref, ln1g_ref, ln1b_ref,
                   w1_ref, b1_ref, w2_ref, b2_ref, ln2g_ref, ln2b_ref,
                   o_ref):
    x = x_ref[...]                                                  # (BS, H)

    # ---- attention bias, built once in-kernel ------------------------------
    # rows/cols index (b, s) jointly; cross-batch pairs get a -1e4 block mask
    # (exp underflows to exactly 0, so the folded-batch softmax is exact).
    pos_i = jax.lax.broadcasted_iota(jnp.int32, (BS, BS), 0)
    pos_j = jax.lax.broadcasted_iota(jnp.int32, (BS, BS), 1)
    neg_rel = -jnp.abs(pos_i - pos_j).astype(jnp.float32)           # -|q - k| on diag blocks
    same = None
    for b in range(B):                                              # block-diagonal predicate
        rb = (pos_i >= b * S) & (pos_i < (b + 1) * S)
        cb = (pos_j >= b * S) & (pos_j < (b + 1) * S)
        t = rb & cb
        same = t if same is None else (same | t)
    block_mask = jnp.where(same, 0.0, NEG)                          # (BS, BS)
    ext_cols = (1.0 - mask_ref[...]) * NEG                          # (1, BS) key mask
    base = block_mask + ext_cols                                    # (BS, BS)
    bias = jnp.stack([_SLOPES[h] * neg_rel + base for h in range(NH)])   # (NH, BS, BS)

    for l in range(NL):                                             # static unroll over layers
        # ---- fused QKV projection (1/sqrt(DH) pre-folded into Q weights) ---
        qkv = jnp.dot(x, wqkv_ref[l],
                      preferred_element_type=jnp.float32) + bqkv_ref[l]   # (BS, 3H)
        q = jnp.stack([qkv[:, h * DH:(h + 1) * DH] for h in range(NH)])        # (NH, BS, DH)
        k = jnp.stack([qkv[:, H + h * DH:H + (h + 1) * DH] for h in range(NH)])
        v = jnp.stack([qkv[:, 2 * H + h * DH:2 * H + (h + 1) * DH] for h in range(NH)])

        # ---- one batched score einsum / softmax / PV einsum ----------------
        s = jnp.einsum("hqd,hkd->hqk", q, k,
                       preferred_element_type=jnp.float32) + bias          # (NH, BS, BS)
        p = jnp.exp(s)                                                     # no max-sub: logits tiny
        denom = jnp.sum(p, axis=-1, keepdims=True)
        r = pl.reciprocal(denom, approx=True)
        r = r * (2.0 - denom * r)                                          # one Newton step
        p = p * r
        ctx = jnp.einsum("hqk,hkd->hqd", p, v,
                         preferred_element_type=jnp.float32)               # (NH, BS, DH)

        # ---- head re-assembly folded into the output projection ------------
        partial = jnp.einsum("hsd,hdo->hso", ctx, wo_ref[l],
                             preferred_element_type=jnp.float32)           # (NH, BS, H)
        attn = partial[0]
        for h in range(1, NH):
            attn = attn + partial[h]
        attn = attn + bo_ref[l]

        x = _layernorm(attn + x, ln1g_ref[l], ln1b_ref[l])                 # BertSelfOutput

        # ---- feed-forward ---------------------------------------------------
        hdn = _gelu_exact(jnp.dot(x, w1_ref[l],
                                  preferred_element_type=jnp.float32) + b1_ref[l])
        y = jnp.dot(hdn, w2_ref[l],
                    preferred_element_type=jnp.float32) + b2_ref[l] + x
        x = _layernorm(y, ln2g_ref[l], ln2b_ref[l])                        # BertOutput

    o_ref[...] = x.astype(o_ref.dtype)                                     # single (16,32) store


# ---- wrapper -----------------------------------------------------------------
def pack_params(layers):
    """Stack per-layer params along [NL, ...]; fuse QKV; fold 1/sqrt(DH) into Q;
    pack wo per-head as (NH, DH, H)."""
    scale = 1.0 / math.sqrt(DH)
    wqkv = jnp.stack([jnp.concatenate([p["wq"] * scale, p["wk"], p["wv"]], axis=1)
                      for p in layers])                              # (NL, H, 3H)
    bqkv = jnp.stack([jnp.concatenate([p["bq"] * scale, p["bk"], p["bv"]], axis=1)
                      for p in layers])                              # (NL, 1, 3H)
    wo = jnp.stack([p["wo"].reshape(NH, DH, H) for p in layers])     # (NL, NH, DH, H)
    bo = jnp.stack([p["bo"] for p in layers])                        # (NL, 1, H)
    ln1g = jnp.stack([p["ln1_g"] for p in layers])
    ln1b = jnp.stack([p["ln1_b"] for p in layers])
    w1 = jnp.stack([p["w1"] for p in layers])                        # (NL, H, I)
    b1 = jnp.stack([p["b1"] for p in layers])                        # (NL, 1, I)
    w2 = jnp.stack([p["w2"] for p in layers])                        # (NL, I, H)
    b2 = jnp.stack([p["b2"] for p in layers])                        # (NL, 1, H)
    ln2g = jnp.stack([p["ln2_g"] for p in layers])
    ln2b = jnp.stack([p["ln2_b"] for p in layers])
    return (wqkv, bqkv, wo, bo, ln1g, ln1b, w1, b1, w2, b2, ln2g, ln2b)


def encoder_forward(hidden_states, attention_mask, layers):
    packed = pack_params(layers)
    x2 = hidden_states.reshape(BS, H)                                # free metadata reshape
    mask_row = attention_mask.reshape(1, BS).astype(jnp.float32)     # (1, B*S) key mask

    flops = 2 * NL * (BS * H * 3 * H + 2 * NH * BS * BS * DH + NH * BS * DH * H
                      + 2 * BS * H * I)
    transcendentals = NL * (NH * BS * BS + BS * I + 8 * BS)
    bytes_accessed = 4 * (2 * BS * H + BS
                          + NL * (H * 3 * H + 3 * H + H * H + H + H * I + I
                                  + I * H + H + 4 * H))

    out2 = pl.pallas_call(
        encoder_kernel,
        out_shape=jax.ShapeDtypeStruct((BS, H), hidden_states.dtype),
        compiler_params=pltpu.CompilerParams(vmem_limit_bytes=8 * 1024 * 1024),
        cost_estimate=pl.CostEstimate(flops=flops,
                                      transcendentals=transcendentals,
                                      bytes_accessed=bytes_accessed),
    )(x2, mask_row, *packed)
    return out2.reshape(B, S, H)


# ---- pure-JAX reference (for correctness check) ------------------------------
def build_bias_ref(attention_mask, n_heads, seqlen):
    ext = (1.0 - attention_mask[:, None, None, :].astype(jnp.float32)) * NEG
    pos = jnp.arange(seqlen)
    rel = jnp.abs(pos[None, :] - pos[:, None])
    slopes = jnp.array(_alibi_slopes(n_heads), dtype=jnp.float32)
    alibi = slopes[:, None, None] * (-rel.astype(jnp.float32))[None]
    return ext + alibi[None]                                         # (B, NH, S, S)


def reference_forward(x, attention_mask, layers):
    bias = build_bias_ref(attention_mask, NH, S)
    for p in layers:
        q = x @ p["wq"] + p["bq"][0]
        k = x @ p["wk"] + p["bk"][0]
        v = x @ p["wv"] + p["bv"][0]
        q = q.reshape(B, S, NH, DH).transpose(0, 2, 1, 3)
        k = k.reshape(B, S, NH, DH).transpose(0, 2, 1, 3)
        v = v.reshape(B, S, NH, DH).transpose(0, 2, 1, 3)
        s = jnp.einsum("bhqd,bhkd->bhqk", q, k) / math.sqrt(DH) + bias
        pattn = jax.nn.softmax(s, axis=-1)
        ctx = jnp.einsum("bhqk,bhkd->bhqd", pattn, v)
        ctx = ctx.transpose(0, 2, 1, 3).reshape(B, S, H)
        attn = ctx @ p["wo"] + p["bo"][0]
        y = attn + x
        mean = jnp.mean(y, axis=-1, keepdims=True)
        var = jnp.mean(jnp.square(y - mean), axis=-1, keepdims=True)
        x = (y - mean) * jax.lax.rsqrt(var + EPS) * p["ln1_g"][0] + p["ln1_b"][0]
        h = _gelu_exact(x @ p["w1"] + p["b1"][0])
        y = h @ p["w2"] + p["b2"][0] + x
        mean = jnp.mean(y, axis=-1, keepdims=True)
        var = jnp.mean(jnp.square(y - mean), axis=-1, keepdims=True)
        x = (y - mean) * jax.lax.rsqrt(var + EPS) * p["ln2_g"][0] + p["ln2_b"][0]
    return x


# ---- deterministic parameter init --------------------------------------------
def init_layer_params(key):
    ks = jax.random.split(key, 8)
    scale = 0.02
    return {
        "wq": scale * jax.random.normal(ks[0], (H, H), jnp.float32),
        "bq": jnp.zeros((1, H), jnp.float32),
        "wk": scale * jax.random.normal(ks[1], (H, H), jnp.float32),
        "bk": jnp.zeros((1, H), jnp.float32),
        "wv": scale * jax.random.normal(ks[2], (H, H), jnp.float32),
        "bv": jnp.zeros((1, H), jnp.float32),
        "wo": scale * jax.random.normal(ks[3], (H, H), jnp.float32),
        "bo": scale * jax.random.normal(ks[4], (1, H), jnp.float32),
        "ln1_g": jnp.ones((1, H), jnp.float32),
        "ln1_b": jnp.zeros((1, H), jnp.float32),
        "w1": scale * jax.random.normal(ks[5], (H, I), jnp.float32),
        "b1": scale * jax.random.normal(ks[6], (1, I), jnp.float32),
        "w2": scale * jax.random.normal(ks[7], (I, H), jnp.float32),
        "b2": jnp.zeros((1, H), jnp.float32),
        "ln2_g": jnp.ones((1, H), jnp.float32),
        "ln2_b": jnp.zeros((1, H), jnp.float32),
    }


if __name__ == "__main__":
    key = jax.random.PRNGKey(0)
    k_x, k_p = jax.random.split(key)
    hidden_states = jax.random.normal(k_x, (B, S, H), jnp.float32)
    attention_mask = jnp.ones((B, S), jnp.float32).at[1, -2:].set(0.0)

    layer_keys = jax.random.split(k_p, NL)
    layers = [init_layer_params(lk) for lk in layer_keys]

    out = encoder_forward(hidden_states, attention_mask, layers)
    out = jax.block_until_ready(out)

    ref = reference_forward(hidden_states, attention_mask, layers)
    assert out.shape == (B, S, H)
    assert jnp.allclose(out, ref, rtol=1e-4, atol=1e-4), "mismatch vs JAX reference"

    # TODO(synk): dropout is identity (eval mode); optional outputs
    # (attentions / all_hidden_states / kv-cache / cross-attention) are not produced.
    print("KERNEL_OK")
</pallas_src>

<mosaic_0001>
module attributes {stable_mosaic.version = 11 : i64} {
  func.func @encoder_kernel(%arg0: memref<16x32xf32, #tpu.memory_space<vmem>>, %arg1: memref<1x16xf32, #tpu.memory_space<vmem>>, %arg2: memref<2x32x96xf32, #tpu.memory_space<vmem>>, %arg3: memref<2x1x96xf32, #tpu.memory_space<vmem>>, %arg4: memref<2x4x8x32xf32, #tpu.memory_space<vmem>>, %arg5: memref<2x1x32xf32, #tpu.memory_space<vmem>>, %arg6: memref<2x1x32xf32, #tpu.memory_space<vmem>>, %arg7: memref<2x1x32xf32, #tpu.memory_space<vmem>>, %arg8: memref<2x32x128xf32, #tpu.memory_space<vmem>>, %arg9: memref<2x1x128xf32, #tpu.memory_space<vmem>>, %arg10: memref<2x128x32xf32, #tpu.memory_space<vmem>>, %arg11: memref<2x1x32xf32, #tpu.memory_space<vmem>>, %arg12: memref<2x1x32xf32, #tpu.memory_space<vmem>>, %arg13: memref<2x1x32xf32, #tpu.memory_space<vmem>>, %arg14: memref<16x32xf32, #tpu.memory_space<vmem>>) attributes {dimension_semantics = [], scalar_prefetch = 0 : i64, scratch_operands = 0 : i64, tpu.core_type = #tpu.core_type<tc>} {
    %c0 = arith.constant 0 : index
    %c0_0 = arith.constant 0 : index
    %0 = vector.load %arg0[%c0, %c0_0] : memref<16x32xf32, #tpu.memory_space<vmem>>, vector<16x32xf32>
    %1 = tpu.iota {dimensions = array<i32: 0>} : vector<16x16xi32>
    %2 = tpu.iota {dimensions = array<i32: 1>} : vector<16x16xi32>
    %3 = arith.subi %1, %2 : vector<16x16xi32>
    %4 = math.absi %3 : vector<16x16xi32>
    %5 = arith.sitofp %4 : vector<16x16xi32> to vector<16x16xf32>
    %cst = arith.constant 0.000000e+00 : f32
    %6 = vector.broadcast %cst : f32 to vector<16x16xf32>
    %7 = arith.subf %6, %5 : vector<16x16xf32>
    %c0_i32 = arith.constant 0 : i32
    %8 = vector.broadcast %c0_i32 : i32 to vector<16x16xi32>
    %9 = arith.cmpi sge, %1, %8 : vector<16x16xi32>
    %c8_i32 = arith.constant 8 : i32
    %10 = vector.broadcast %c8_i32 : i32 to vector<16x16xi32>
    %11 = arith.cmpi slt, %1, %10 : vector<16x16xi32>
    %12 = arith.andi %9, %11 : vector<16x16xi1>
    %c0_i32_1 = arith.constant 0 : i32
    %13 = vector.broadcast %c0_i32_1 : i32 to vector<16x16xi32>
    %14 = arith.cmpi sge, %2, %13 : vector<16x16xi32>
    %c8_i32_2 = arith.constant 8 : i32
    %15 = vector.broadcast %c8_i32_2 : i32 to vector<16x16xi32>
    %16 = arith.cmpi slt, %2, %15 : vector<16x16xi32>
    %17 = arith.andi %14, %16 : vector<16x16xi1>
    %18 = arith.andi %12, %17 : vector<16x16xi1>
    %c8_i32_3 = arith.constant 8 : i32
    %19 = vector.broadcast %c8_i32_3 : i32 to vector<16x16xi32>
    %20 = arith.cmpi sge, %1, %19 : vector<16x16xi32>
    %c16_i32 = arith.constant 16 : i32
    %21 = vector.broadcast %c16_i32 : i32 to vector<16x16xi32>
    %22 = arith.cmpi slt, %1, %21 : vector<16x16xi32>
    %23 = arith.andi %20, %22 : vector<16x16xi1>
    %c8_i32_4 = arith.constant 8 : i32
    %24 = vector.broadcast %c8_i32_4 : i32 to vector<16x16xi32>
    %25 = arith.cmpi sge, %2, %24 : vector<16x16xi32>
    %c16_i32_5 = arith.constant 16 : i32
    %26 = vector.broadcast %c16_i32_5 : i32 to vector<16x16xi32>
    %27 = arith.cmpi slt, %2, %26 : vector<16x16xi32>
    %28 = arith.andi %25, %27 : vector<16x16xi1>
    %29 = arith.andi %23, %28 : vector<16x16xi1>
    %30 = arith.ori %18, %29 : vector<16x16xi1>
    %cst_6 = arith.constant 0.000000e+00 : f32
    %cst_7 = arith.constant -1.000000e+04 : f32
    %31 = vector.broadcast %cst_6 : f32 to vector<16x16xf32>
    %32 = vector.broadcast %cst_7 : f32 to vector<16x16xf32>
    %33 = arith.select %30, %31, %32 : vector<16x16xi1>, vector<16x16xf32>
    %c0_8 = arith.constant 0 : index
    %c0_9 = arith.constant 0 : index
    %34 = vector.load %arg1[%c0_8, %c0_9] : memref<1x16xf32, #tpu.memory_space<vmem>>, vector<1x16xf32>
    %cst_10 = arith.constant 1.000000e+00 : f32
    %35 = vector.broadcast %cst_10 : f32 to vector<1x16xf32>
    %36 = arith.subf %35, %34 : vector<1x16xf32>
    %cst_11 = arith.constant -1.000000e+04 : f32
    %37 = vector.broadcast %cst_11 : f32 to vector<1x16xf32>
    %38 = arith.mulf %36, %37 : vector<1x16xf32>
    %39 = vector.broadcast %38 : vector<1x16xf32> to vector<16x16xf32>
    %40 = arith.addf %33, %39 : vector<16x16xf32>
    %cst_12 = arith.constant 2.500000e-01 : f32
    %41 = vector.broadcast %cst_12 : f32 to vector<16x16xf32>
    %42 = arith.mulf %41, %7 : vector<16x16xf32>
    %43 = arith.addf %42, %40 : vector<16x16xf32>
    %cst_13 = arith.constant 6.250000e-02 : f32
    %44 = vector.broadcast %cst_13 : f32 to vector<16x16xf32>
    %45 = arith.mulf %44, %7 : vector<16x16xf32>
    %46 = arith.addf %45, %40 : vector<16x16xf32>
    %cst_14 = arith.constant 1.562500e-02 : f32
    %47 = vector.broadcast %cst_14 : f32 to vector<16x16xf32>
    %48 = arith.mulf %47, %7 : vector<16x16xf32>
    %49 = arith.addf %48, %40 : vector<16x16xf32>
    %cst_15 = arith.constant 3.906250e-03 : f32
    %50 = vector.broadcast %cst_15 : f32 to vector<16x16xf32>
    %51 = arith.mulf %50, %7 : vector<16x16xf32>
    %52 = arith.addf %51, %40 : vector<16x16xf32>
    %53 = vector.shape_cast %43 : vector<16x16xf32> to vector<1x16x16xf32>
    %54 = vector.shape_cast %46 : vector<16x16xf32> to vector<1x16x16xf32>
    %55 = vector.shape_cast %49 : vector<16x16xf32> to vector<1x16x16xf32>
    %56 = vector.shape_cast %52 : vector<16x16xf32> to vector<1x16x16xf32>
    %57 = tpu.concatenate %53, %54, %55, %56 in 0 : vector<1x16x16xf32>, vector<1x16x16xf32>, vector<1x16x16xf32>, vector<1x16x16xf32> -> vector<4x16x16xf32>
    %c0_16 = arith.constant 0 : index
    %c0_17 = arith.constant 0 : index
    %c0_18 = arith.constant 0 : index
    %58 = vector.load %arg2[%c0_16, %c0_17, %c0_18] : memref<2x32x96xf32, #tpu.memory_space<vmem>>, vector<1x32x96xf32>
    %59 = vector.shape_cast %58 : vector<1x32x96xf32> to vector<32x96xf32>
    %cst_19 = arith.constant dense<0.000000e+00> : vector<16x96xf32>
    %60 = tpu.matmul %0, %59, %cst_19 {dimension_numbers = #tpu.dot_dimension_numbers<[1], [0], [0], [1], [0, 0, 1, 1], [], []>} : vector<16x32xf32>, vector<32x96xf32>, vector<16x96xf32> -> vector<16x96xf32>
    %c0_20 = arith.constant 0 : index
    %c0_21 = arith.constant 0 : index
    %c0_22 = arith.constant 0 : index
    %61 = vector.load %arg3[%c0_20, %c0_21, %c0_22] : memref<2x1x96xf32, #tpu.memory_space<vmem>>, vector<1x1x96xf32>
    %62 = vector.shape_cast %61 : vector<1x1x96xf32> to vector<1x96xf32>
    %63 = vector.broadcast %62 : vector<1x96xf32> to vector<16x96xf32>
    %64 = arith.addf %60, %63 : vector<16x96xf32>
    %65 = vector.extract_strided_slice %64 {offsets = [0, 0], sizes = [16, 8], strides = [1, 1]} : vector<16x96xf32> to vector<16x8xf32>
    %66 = vector.extract_strided_slice %64 {offsets = [0, 8], sizes = [16, 8], strides = [1, 1]} : vector<16x96xf32> to vector<16x8xf32>
    %67 = vector.extract_strided_slice %64 {offsets = [0, 16], sizes = [16, 8], strides = [1, 1]} : vector<16x96xf32> to vector<16x8xf32>
    %68 = vector.extract_strided_slice %64 {offsets = [0, 24], sizes = [16, 8], strides = [1, 1]} : vector<16x96xf32> to vector<16x8xf32>
    %69 = vector.shape_cast %65 : vector<16x8xf32> to vector<1x16x8xf32>
    %70 = vector.shape_cast %66 : vector<16x8xf32> to vector<1x16x8xf32>
    %71 = vector.shape_cast %67 : vector<16x8xf32> to vector<1x16x8xf32>
    %72 = vector.shape_cast %68 : vector<16x8xf32> to vector<1x16x8xf32>
    %73 = tpu.concatenate %69, %70, %71, %72 in 0 : vector<1x16x8xf32>, vector<1x16x8xf32>, vector<1x16x8xf32>, vector<1x16x8xf32> -> vector<4x16x8xf32>
    %74 = vector.extract_strided_slice %64 {offsets = [0, 32], sizes = [16, 8], strides = [1, 1]} : vector<16x96xf32> to vector<16x8xf32>
    %75 = vector.extract_strided_slice %64 {offsets = [0, 40], sizes = [16, 8], strides = [1, 1]} : vector<16x96xf32> to vector<16x8xf32>
    %76 = vector.extract_strided_slice %64 {offsets = [0, 48], sizes = [16, 8], strides = [1, 1]} : vector<16x96xf32> to vector<16x8xf32>
    %77 = vector.extract_strided_slice %64 {offsets = [0, 56], sizes = [16, 8], strides = [1, 1]} : vector<16x96xf32> to vector<16x8xf32>
    %78 = vector.shape_cast %74 : vector<16x8xf32> to vector<1x16x8xf32>
    %79 = vector.shape_cast %75 : vector<16x8xf32> to vector<1x16x8xf32>
    %80 = vector.shape_cast %76 : vector<16x8xf32> to vector<1x16x8xf32>
    %81 = vector.shape_cast %77 : vector<16x8xf32> to vector<1x16x8xf32>
    %82 = tpu.concatenate %78, %79, %80, %81 in 0 : vector<1x16x8xf32>, vector<1x16x8xf32>, vector<1x16x8xf32>, vector<1x16x8xf32> -> vector<4x16x8xf32>
    %83 = vector.extract_strided_slice %64 {offsets = [0, 64], sizes = [16, 8], strides = [1, 1]} : vector<16x96xf32> to vector<16x8xf32>
    %84 = vector.extract_strided_slice %64 {offsets = [0, 72], sizes = [16, 8], strides = [1, 1]} : vector<16x96xf32> to vector<16x8xf32>
    %85 = vector.extract_strided_slice %64 {offsets = [0, 80], sizes = [16, 8], strides = [1, 1]} : vector<16x96xf32> to vector<16x8xf32>
    %86 = vector.extract_strided_slice %64 {offsets = [0, 88], sizes = [16, 8], strides = [1, 1]} : vector<16x96xf32> to vector<16x8xf32>
    %87 = vector.shape_cast %83 : vector<16x8xf32> to vector<1x16x8xf32>
    %88 = vector.shape_cast %84 : vector<16x8xf32> to vector<1x16x8xf32>
    %89 = vector.shape_cast %85 : vector<16x8xf32> to vector<1x16x8xf32>
    %90 = vector.shape_cast %86 : vector<16x8xf32> to vector<1x16x8xf32>
    %91 = tpu.concatenate %87, %88, %89, %90 in 0 : vector<1x16x8xf32>, vector<1x16x8xf32>, vector<1x16x8xf32>, vector<1x16x8xf32> -> vector<4x16x8xf32>
    "tpu.trace_start"() <{level = 10 : i32, message = "hqd,hkd->hqk"}> : () -> ()
    %cst_23 = arith.constant dense<0.000000e+00> : vector<4x16x16xf32>
    %92 = tpu.matmul %73, %82, %cst_23 {dimension_numbers = #tpu.dot_dimension_numbers<[2], [2], [1], [1], [0, 0, 0, 1, 1, 1], [0], [0]>} : vector<4x16x8xf32>, vector<4x16x8xf32>, vector<4x16x16xf32> -> vector<4x16x16xf32>
    "tpu.trace_stop"() : () -> ()
    %93 = arith.addf %92, %57 : vector<4x16x16xf32>
    %94 = math.exp %93 : vector<4x16x16xf32>
    %cst_24 = arith.constant dense<0.000000e+00> : vector<4x16xf32>
    %95 = vector.multi_reduction <add>, %94, %cst_24 [2] : vector<4x16x16xf32> to vector<4x16xf32>
    %96 = vector.shape_cast %95 : vector<4x16xf32> to vector<4x16x1xf32>
    %97 = tpu.reciprocal %96 {approx = true} : vector<4x16x1xf32> -> vector<4x16x1xf32>
    %98 = arith.mulf %96, %97 : vector<4x16x1xf32>
    %cst_25 = arith.constant 2.000000e+00 : f32
    %99 = vector.broadcast %cst_25 : f32 to vector<4x16x1xf32>
    %100 = arith.subf %99, %98 : vector<4x16x1xf32>
    %101 = arith.mulf %97, %100 : vector<4x16x1xf32>
    %102 = vector.broadcast %101 : vector<4x16x1xf32> to vector<4x16x16xf32>
    %103 = arith.mulf %94, %102 : vector<4x16x16xf32>
    "tpu.trace_start"() <{level = 10 : i32, message = "hqk,hkd->hqd"}> : () -> ()
    %cst_26 = arith.constant dense<0.000000e+00> : vector<4x16x8xf32>
    %104 = tpu.matmul %103, %91, %cst_26 {dimension_numbers = #tpu.dot_dimension_numbers<[2], [1], [1], [2], [0, 0, 0, 1, 1, 2], [0], [0]>} : vector<4x16x16xf32>, vector<4x16x8xf32>, vector<4x16x8xf32> -> vector<4x16x8xf32>
    "tpu.trace_stop"() : () -> ()
    %c0_27 = arith.constant 0 : index
    %c0_28 = arith.constant 0 : index
    %c0_29 = arith.constant 0 : index
    %c0_30 = arith.constant 0 : index
    %105 = vector.load %arg4[%c0_27, %c0_28, %c0_29, %c0_30] : memref<2x4x8x32xf32, #tpu.memory_space<vmem>>, vector<1x4x8x32xf32>
    %106 = vector.shape_cast %105 : vector<1x4x8x32xf32> to vector<4x8x32xf32>
    "tpu.trace_start"() <{level = 10 : i32, message = "hsd,hdo->hso"}> : () -> ()
    %cst_31 = arith.constant dense<0.000000e+00> : vector<4x16x32xf32>
    %107 = tpu.matmul %104, %106, %cst_31 {dimension_numbers = #tpu.dot_dimension_numbers<[2], [1], [1], [2], [0, 0, 0, 1, 1, 2], [0], [0]>} : vector<4x16x8xf32>, vector<4x8x32xf32>, vector<4x16x32xf32> -> vector<4x16x32xf32>
    "tpu.trace_stop"() : () -> ()
    %108 = vector.extract_strided_slice %107 {offsets = [0, 0, 0], sizes = [1, 16, 32], strides = [1, 1, 1]} : vector<4x16x32xf32> to vector<1x16x32xf32>
    %109 = vector.shape_cast %108 : vector<1x16x32xf32> to vector<16x32xf32>
    %110 = vector.extract_strided_slice %107 {offsets = [1, 0, 0], sizes = [1, 16, 32], strides = [1, 1, 1]} : vector<4x16x32xf32> to vector<1x16x32xf32>
    %111 = vector.shape_cast %110 : vector<1x16x32xf32> to vector<16x32xf32>
    %112 = arith.addf %109, %111 : vector<16x32xf32>
    %113 = vector.extract_strided_slice %107 {offsets = [2, 0, 0], sizes = [1, 16, 32], strides = [1, 1, 1]} : vector<4x16x32xf32> to vector<1x16x32xf32>
    %114 = vector.shape_cast %113 : vector<1x16x32xf32> to vector<16x32xf32>
    %115 = arith.addf %112, %114 : vector<16x32xf32>
    %116 = vector.extract_strided_slice %107 {offsets = [3, 0, 0], sizes = [1, 16, 32], strides = [1, 1, 1]} : vector<4x16x32xf32> to vector<1x16x32xf32>
    %117 = vector.shape_cast %116 : vector<1x16x32xf32> to vector<16x32xf32>
    %118 = arith.addf %115, %117 : vector<16x32xf32>
    %c0_32 = arith.constant 0 : index
    %c0_33 = arith.constant 0 : index
    %c0_34 = arith.constant 0 : index
    %119 = vector.load %arg5[%c0_32, %c0_33, %c0_34] : memref<2x1x32xf32, #tpu.memory_space<vmem>>, vector<1x1x32xf32>
    %120 = vector.shape_cast %119 : vector<1x1x32xf32> to vector<1x32xf32>
    %121 = vector.broadcast %120 : vector<1x32xf32> to vector<16x32xf32>
    %122 = arith.addf %118, %121 : vector<16x32xf32>
    %123 = arith.addf %122, %0 : vector<16x32xf32>
    %c0_35 = arith.constant 0 : index
    %c0_36 = arith.constant 0 : index
    %c0_37 = arith.constant 0 : index
    %124 = vector.load %arg6[%c0_35, %c0_36, %c0_37] : memref<2x1x32xf32, #tpu.memory_space<vmem>>, vector<1x1x32xf32>
    %125 = vector.shape_cast %124 : vector<1x1x32xf32> to vector<1x32xf32>
    %c0_38 = arith.constant 0 : index
    %c0_39 = arith.constant 0 : index
    %c0_40 = arith.constant 0 : index
    %126 = vector.load %arg7[%c0_38, %c0_39, %c0_40] : memref<2x1x32xf32, #tpu.memory_space<vmem>>, vector<1x1x32xf32>
    %127 = vector.shape_cast %126 : vector<1x1x32xf32> to vector<1x32xf32>
    %cst_41 = arith.constant dense<0.000000e+00> : vector<16xf32>
    %128 = vector.multi_reduction <add>, %123, %cst_41 [1] : vector<16x32xf32> to vector<16xf32>
    %129 = vector.shape_cast %128 : vector<16xf32> to vector<16x1xf32>
    %cst_42 = arith.constant 3.200000e+01 : f32
    %130 = vector.broadcast %cst_42 : f32 to vector<16x1xf32>
    %131 = arith.divf %129, %130 : vector<16x1xf32>
    %132 = vector.broadcast %131 : vector<16x1xf32> to vector<16x32xf32>
    %133 = arith.subf %123, %132 : vector<16x32xf32>
    %134 = arith.mulf %133, %133 : vector<16x32xf32>
    %cst_43 = arith.constant dense<0.000000e+00> : vector<16xf32>
    %135 = vector.multi_reduction <add>, %134, %cst_43 [1] : vector<16x32xf32> to vector<16xf32>
    %136 = vector.shape_cast %135 : vector<16xf32> to vector<16x1xf32>
    %cst_44 = arith.constant 3.200000e+01 : f32
    %137 = vector.broadcast %cst_44 : f32 to vector<16x1xf32>
    %138 = arith.divf %136, %137 : vector<16x1xf32>
    %139 = vector.broadcast %131 : vector<16x1xf32> to vector<16x32xf32>
    %140 = arith.subf %123, %139 : vector<16x32xf32>
    %cst_45 = arith.constant 9.99999996E-13 : f32
    %141 = vector.broadcast %cst_45 : f32 to vector<16x1xf32>
    %142 = arith.addf %138, %141 : vector<16x1xf32>
    %143 = math.rsqrt %142 : vector<16x1xf32>
    %144 = vector.broadcast %143 : vector<16x1xf32> to vector<16x32xf32>
    %145 = arith.mulf %140, %144 : vector<16x32xf32>
    %146 = vector.broadcast %125 : vector<1x32xf32> to vector<16x32xf32>
    %147 = arith.mulf %145, %146 : vector<16x32xf32>
    %148 = vector.broadcast %127 : vector<1x32xf32> to vector<16x32xf32>
    %149 = arith.addf %147, %148 : vector<16x32xf32>
    %c0_46 = arith.constant 0 : index
    %c0_47 = arith.constant 0 : index
    %c0_48 = arith.constant 0 : index
    %150 = vector.load %arg8[%c0_46, %c0_47, %c0_48] : memref<2x32x128xf32, #tpu.memory_space<vmem>>, vector<1x32x128xf32>
    %151 = vector.shape_cast %150 : vector<1x32x128xf32> to vector<32x128xf32>
    %cst_49 = arith.constant dense<0.000000e+00> : vector<16x128xf32>
    %152 = tpu.matmul %149, %151, %cst_49 {dimension_numbers = #tpu.dot_dimension_numbers<[1], [0], [0], [1], [0, 0, 1, 1], [], []>} : vector<16x32xf32>, vector<32x128xf32>, vector<16x128xf32> -> vector<16x128xf32>
    %c0_50 = arith.constant 0 : index
    %c0_51 = arith.constant 0 : index
    %c0_52 = arith.constant 0 : index
    %153 = vector.load %arg9[%c0_50, %c0_51, %c0_52] : memref<2x1x128xf32, #tpu.memory_space<vmem>>, vector<1x1x128xf32>
    %154 = vector.shape_cast %153 : vector<1x1x128xf32> to vector<1x128xf32>
    %155 = vector.broadcast %154 : vector<1x128xf32> to vector<16x128xf32>
    %156 = arith.addf %152, %155 : vector<16x128xf32>
    %cst_53 = arith.constant 5.000000e-01 : f32
    %157 = vector.broadcast %cst_53 : f32 to vector<16x128xf32>
    %158 = arith.mulf %157, %156 : vector<16x128xf32>
    %cst_54 = arith.constant 2.000000e+00 : f32
    %159 = math.sqrt %cst_54 : f32
    %160 = vector.broadcast %159 : f32 to vector<16x128xf32>
    %161 = arith.divf %156, %160 : vector<16x128xf32>
    %162 = math.erf %161 : vector<16x128xf32>
    %cst_55 = arith.constant 1.000000e+00 : f32
    %163 = vector.broadcast %cst_55 : f32 to vector<16x128xf32>
    %164 = arith.addf %163, %162 : vector<16x128xf32>
    %165 = arith.mulf %158, %164 : vector<16x128xf32>
    %c0_56 = arith.constant 0 : index
    %c0_57 = arith.constant 0 : index
    %c0_58 = arith.constant 0 : index
    %166 = vector.load %arg10[%c0_56, %c0_57, %c0_58] : memref<2x128x32xf32, #tpu.memory_space<vmem>>, vector<1x128x32xf32>
    %167 = vector.shape_cast %166 : vector<1x128x32xf32> to vector<128x32xf32>
    %cst_59 = arith.constant dense<0.000000e+00> : vector<16x32xf32>
    %168 = tpu.matmul %165, %167, %cst_59 {dimension_numbers = #tpu.dot_dimension_numbers<[1], [0], [0], [1], [0, 0, 1, 1], [], []>} : vector<16x128xf32>, vector<128x32xf32>, vector<16x32xf32> -> vector<16x32xf32>
    %c0_60 = arith.constant 0 : index
    %c0_61 = arith.constant 0 : index
    %c0_62 = arith.constant 0 : index
    %169 = vector.load %arg11[%c0_60, %c0_61, %c0_62] : memref<2x1x32xf32, #tpu.memory_space<vmem>>, vector<1x1x32xf32>
    %170 = vector.shape_cast %169 : vector<1x1x32xf32> to vector<1x32xf32>
    %171 = vector.broadcast %170 : vector<1x32xf32> to vector<16x32xf32>
    %172 = arith.addf %168, %171 : vector<16x32xf32>
    %173 = arith.addf %172, %149 : vector<16x32xf32>
    %c0_63 = arith.constant 0 : index
    %c0_64 = arith.constant 0 : index
    %c0_65 = arith.constant 0 : index
    %174 = vector.load %arg12[%c0_63, %c0_64, %c0_65] : memref<2x1x32xf32, #tpu.memory_space<vmem>>, vector<1x1x32xf32>
    %175 = vector.shape_cast %174 : vector<1x1x32xf32> to vector<1x32xf32>
    %c0_66 = arith.constant 0 : index
    %c0_67 = arith.constant 0 : index
    %c0_68 = arith.constant 0 : index
    %176 = vector.load %arg13[%c0_66, %c0_67, %c0_68] : memref<2x1x32xf32, #tpu.memory_space<vmem>>, vector<1x1x32xf32>
    %177 = vector.shape_cast %176 : vector<1x1x32xf32> to vector<1x32xf32>
    %cst_69 = arith.constant dense<0.000000e+00> : vector<16xf32>
    %178 = vector.multi_reduction <add>, %173, %cst_69 [1] : vector<16x32xf32> to vector<16xf32>
    %179 = vector.shape_cast %178 : vector<16xf32> to vector<16x1xf32>
    %cst_70 = arith.constant 3.200000e+01 : f32
    %180 = vector.broadcast %cst_70 : f32 to vector<16x1xf32>
    %181 = arith.divf %179, %180 : vector<16x1xf32>
    %182 = vector.broadcast %181 : vector<16x1xf32> to vector<16x32xf32>
    %183 = arith.subf %173, %182 : vector<16x32xf32>
    %184 = arith.mulf %183, %183 : vector<16x32xf32>
    %cst_71 = arith.constant dense<0.000000e+00> : vector<16xf32>
    %185 = vector.multi_reduction <add>, %184, %cst_71 [1] : vector<16x32xf32> to vector<16xf32>
    %186 = vector.shape_cast %185 : vector<16xf32> to vector<16x1xf32>
    %cst_72 = arith.constant 3.200000e+01 : f32
    %187 = vector.broadcast %cst_72 : f32 to vector<16x1xf32>
    %188 = arith.divf %186, %187 : vector<16x1xf32>
    %189 = vector.broadcast %181 : vector<16x1xf32> to vector<16x32xf32>
    %190 = arith.subf %173, %189 : vector<16x32xf32>
    %cst_73 = arith.constant 9.99999996E-13 : f32
    %191 = vector.broadcast %cst_73 : f32 to vector<16x1xf32>
    %192 = arith.addf %188, %191 : vector<16x1xf32>
    %193 = math.rsqrt %192 : vector<16x1xf32>
    %194 = vector.broadcast %193 : vector<16x1xf32> to vector<16x32xf32>
    %195 = arith.mulf %190, %194 : vector<16x32xf32>
    %196 = vector.broadcast %175 : vector<1x32xf32> to vector<16x32xf32>
    %197 = arith.mulf %195, %196 : vector<16x32xf32>
    %198 = vector.broadcast %177 : vector<1x32xf32> to vector<16x32xf32>
    %199 = arith.addf %197, %198 : vector<16x32xf32>
    %c1 = arith.constant 1 : index
    %c0_74 = arith.constant 0 : index
    %c0_75 = arith.constant 0 : index
    %200 = vector.load %arg2[%c1, %c0_74, %c0_75] : memref<2x32x96xf32, #tpu.memory_space<vmem>>, vector<1x32x96xf32>
    %201 = vector.shape_cast %200 : vector<1x32x96xf32> to vector<32x96xf32>
    %cst_76 = arith.constant dense<0.000000e+00> : vector<16x96xf32>
    %202 = tpu.matmul %199, %201, %cst_76 {dimension_numbers = #tpu.dot_dimension_numbers<[1], [0], [0], [1], [0, 0, 1, 1], [], []>} : vector<16x32xf32>, vector<32x96xf32>, vector<16x96xf32> -> vector<16x96xf32>
    %c1_77 = arith.constant 1 : index
    %c0_78 = arith.constant 0 : index
    %c0_79 = arith.constant 0 : index
    %203 = vector.load %arg3[%c1_77, %c0_78, %c0_79] : memref<2x1x96xf32, #tpu.memory_space<vmem>>, vector<1x1x96xf32>
    %204 = vector.shape_cast %203 : vector<1x1x96xf32> to vector<1x96xf32>
    %205 = vector.broadcast %204 : vector<1x96xf32> to vector<16x96xf32>
    %206 = arith.addf %202, %205 : vector<16x96xf32>
    %207 = vector.extract_strided_slice %206 {offsets = [0, 0], sizes = [16, 8], strides = [1, 1]} : vector<16x96xf32> to vector<16x8xf32>
    %208 = vector.extract_strided_slice %206 {offsets = [0, 8], sizes = [16, 8], strides = [1, 1]} : vector<16x96xf32> to vector<16x8xf32>
    %209 = vector.extract_strided_slice %206 {offsets = [0, 16], sizes = [16, 8], strides = [1, 1]} : vector<16x96xf32> to vector<16x8xf32>
    %210 = vector.extract_strided_slice %206 {offsets = [0, 24], sizes = [16, 8], strides = [1, 1]} : vector<16x96xf32> to vector<16x8xf32>
    %211 = vector.shape_cast %207 : vector<16x8xf32> to vector<1x16x8xf32>
    %212 = vector.shape_cast %208 : vector<16x8xf32> to vector<1x16x8xf32>
    %213 = vector.shape_cast %209 : vector<16x8xf32> to vector<1x16x8xf32>
    %214 = vector.shape_cast %210 : vector<16x8xf32> to vector<1x16x8xf32>
    %215 = tpu.concatenate %211, %212, %213, %214 in 0 : vector<1x16x8xf32>, vector<1x16x8xf32>, vector<1x16x8xf32>, vector<1x16x8xf32> -> vector<4x16x8xf32>
    %216 = vector.extract_strided_slice %206 {offsets = [0, 32], sizes = [16, 8], strides = [1, 1]} : vector<16x96xf32> to vector<16x8xf32>
    %217 = vector.extract_strided_slice %206 {offsets = [0, 40], sizes = [16, 8], strides = [1, 1]} : vector<16x96xf32> to vector<16x8xf32>
    %218 = vector.extract_strided_slice %206 {offsets = [0, 48], sizes = [16, 8], strides = [1, 1]} : vector<16x96xf32> to vector<16x8xf32>
    %219 = vector.extract_strided_slice %206 {offsets = [0, 56], sizes = [16, 8], strides = [1, 1]} : vector<16x96xf32> to vector<16x8xf32>
    %220 = vector.shape_cast %216 : vector<16x8xf32> to vector<1x16x8xf32>
    %221 = vector.shape_cast %217 : vector<16x8xf32> to vector<1x16x8xf32>
    %222 = vector.shape_cast %218 : vector<16x8xf32> to vector<1x16x8xf32>
    %223 = vector.shape_cast %219 : vector<16x8xf32> to vector<1x16x8xf32>
    %224 = tpu.concatenate %220, %221, %222, %223 in 0 : vector<1x16x8xf32>, vector<1x16x8xf32>, vector<1x16x8xf32>, vector<1x16x8xf32> -> vector<4x16x8xf32>
    %225 = vector.extract_strided_slice %206 {offsets = [0, 64], sizes = [16, 8], strides = [1, 1]} : vector<16x96xf32> to vector<16x8xf32>
    %226 = vector.extract_strided_slice %206 {offsets = [0, 72], sizes = [16, 8], strides = [1, 1]} : vector<16x96xf32> to vector<16x8xf32>
    %227 = vector.extract_strided_slice %206 {offsets = [0, 80], sizes = [16, 8], strides = [1, 1]} : vector<16x96xf32> to vector<16x8xf32>
    %228 = vector.extract_strided_slice %206 {offsets = [0, 88], sizes = [16, 8], strides = [1, 1]} : vector<16x96xf32> to vector<16x8xf32>
    %229 = vector.shape_cast %225 : vector<16x8xf32> to vector<1x16x8xf32>
    %230 = vector.shape_cast %226 : vector<16x8xf32> to vector<1x16x8xf32>
    %231 = vector.shape_cast %227 : vector<16x8xf32> to vector<1x16x8xf32>
    %232 = vector.shape_cast %228 : vector<16x8xf32> to vector<1x16x8xf32>
    %233 = tpu.concatenate %229, %230, %231, %232 in 0 : vector<1x16x8xf32>, vector<1x16x8xf32>, vector<1x16x8xf32>, vector<1x16x8xf32> -> vector<4x16x8xf32>
    "tpu.trace_start"() <{level = 10 : i32, message = "hqd,hkd->hqk"}> : () -> ()
    %cst_80 = arith.constant dense<0.000000e+00> : vector<4x16x16xf32>
    %234 = tpu.matmul %215, %224, %cst_80 {dimension_numbers = #tpu.dot_dimension_numbers<[2], [2], [1], [1], [0, 0, 0, 1, 1, 1], [0], [0]>} : vector<4x16x8xf32>, vector<4x16x8xf32>, vector<4x16x16xf32> -> vector<4x16x16xf32>
    "tpu.trace_stop"() : () -> ()
    %235 = arith.addf %234, %57 : vector<4x16x16xf32>
    %236 = math.exp %235 : vector<4x16x16xf32>
    %cst_81 = arith.constant dense<0.000000e+00> : vector<4x16xf32>
    %237 = vector.multi_reduction <add>, %236, %cst_81 [2] : vector<4x16x16xf32> to vector<4x16xf32>
    %238 = vector.shape_cast %237 : vector<4x16xf32> to vector<4x16x1xf32>
    %239 = tpu.reciprocal %238 {approx = true} : vector<4x16x1xf32> -> vector<4x16x1xf32>
    %240 = arith.mulf %238, %239 : vector<4x16x1xf32>
    %cst_82 = arith.constant 2.000000e+00 : f32
    %241 = vector.broadcast %cst_82 : f32 to vector<4x16x1xf32>
    %242 = arith.subf %241, %240 : vector<4x16x1xf32>
    %243 = arith.mulf %239, %242 : vector<4x16x1xf32>
    %244 = vector.broadcast %243 : vector<4x16x1xf32> to vector<4x16x16xf32>
    %245 = arith.mulf %236, %244 : vector<4x16x16xf32>
    "tpu.trace_start"() <{level = 10 : i32, message = "hqk,hkd->hqd"}> : () -> ()
    %cst_83 = arith.constant dense<0.000000e+00> : vector<4x16x8xf32>
    %246 = tpu.matmul %245, %233, %cst_83 {dimension_numbers = #tpu.dot_dimension_numbers<[2], [1], [1], [2], [0, 0, 0, 1, 1, 2], [0], [0]>} : vector<4x16x16xf32>, vector<4x16x8xf32>, vector<4x16x8xf32> -> vector<4x16x8xf32>
    "tpu.trace_stop"() : () -> ()
    %c1_84 = arith.constant 1 : index
    %c0_85 = arith.constant 0 : index
    %c0_86 = arith.constant 0 : index
    %c0_87 = arith.constant 0 : index
    %247 = vector.load %arg4[%c1_84, %c0_85, %c0_86, %c0_87] : memref<2x4x8x32xf32, #tpu.memory_space<vmem>>, vector<1x4x8x32xf32>
    %248 = vector.shape_cast %247 : vector<1x4x8x32xf32> to vector<4x8x32xf32>
    "tpu.trace_start"() <{level = 10 : i32, message = "hsd,hdo->hso"}> : () -> ()
    %cst_88 = arith.constant dense<0.000000e+00> : vector<4x16x32xf32>
    %249 = tpu.matmul %246, %248, %cst_88 {dimension_numbers = #tpu.dot_dimension_numbers<[2], [1], [1], [2], [0, 0, 0, 1, 1, 2], [0], [0]>} : vector<4x16x8xf32>, vector<4x8x32xf32>, vector<4x16x32xf32> -> vector<4x16x32xf32>
    "tpu.trace_stop"() : () -> ()
    %250 = vector.extract_strided_slice %249 {offsets = [0, 0, 0], sizes = [1, 16, 32], strides = [1, 1, 1]} : vector<4x16x32xf32> to vector<1x16x32xf32>
    %251 = vector.shape_cast %250 : vector<1x16x32xf32> to vector<16x32xf32>
    %252 = vector.extract_strided_slice %249 {offsets = [1, 0, 0], sizes = [1, 16, 32], strides = [1, 1, 1]} : vector<4x16x32xf32> to vector<1x16x32xf32>
    %253 = vector.shape_cast %252 : vector<1x16x32xf32> to vector<16x32xf32>
    %254 = arith.addf %251, %253 : vector<16x32xf32>
    %255 = vector.extract_strided_slice %249 {offsets = [2, 0, 0], sizes = [1, 16, 32], strides = [1, 1, 1]} : vector<4x16x32xf32> to vector<1x16x32xf32>
    %256 = vector.shape_cast %255 : vector<1x16x32xf32> to vector<16x32xf32>
    %257 = arith.addf %254, %256 : vector<16x32xf32>
    %258 = vector.extract_strided_slice %249 {offsets = [3, 0, 0], sizes = [1, 16, 32], strides = [1, 1, 1]} : vector<4x16x32xf32> to vector<1x16x32xf32>
    %259 = vector.shape_cast %258 : vector<1x16x32xf32> to vector<16x32xf32>
    %260 = arith.addf %257, %259 : vector<16x32xf32>
    %c1_89 = arith.constant 1 : index
    %c0_90 = arith.constant 0 : index
    %c0_91 = arith.constant 0 : index
    %261 = vector.load %arg5[%c1_89, %c0_90, %c0_91] : memref<2x1x32xf32, #tpu.memory_space<vmem>>, vector<1x1x32xf32>
    %262 = vector.shape_cast %261 : vector<1x1x32xf32> to vector<1x32xf32>
    %263 = vector.broadcast %262 : vector<1x32xf32> to vector<16x32xf32>
    %264 = arith.addf %260, %263 : vector<16x32xf32>
    %265 = arith.addf %264, %199 : vector<16x32xf32>
    %c1_92 = arith.constant 1 : index
    %c0_93 = arith.constant 0 : index
    %c0_94 = arith.constant 0 : index
    %266 = vector.load %arg6[%c1_92, %c0_93, %c0_94] : memref<2x1x32xf32, #tpu.memory_space<vmem>>, vector<1x1x32xf32>
    %267 = vector.shape_cast %266 : vector<1x1x32xf32> to vector<1x32xf32>
    %c1_95 = arith.constant 1 : index
    %c0_96 = arith.constant 0 : index
    %c0_97 = arith.constant 0 : index
    %268 = vector.load %arg7[%c1_95, %c0_96, %c0_97] : memref<2x1x32xf32, #tpu.memory_space<vmem>>, vector<1x1x32xf32>
    %269 = vector.shape_cast %268 : vector<1x1x32xf32> to vector<1x32xf32>
    %cst_98 = arith.constant dense<0.000000e+00> : vector<16xf32>
    %270 = vector.multi_reduction <add>, %265, %cst_98 [1] : vector<16x32xf32> to vector<16xf32>
    %271 = vector.shape_cast %270 : vector<16xf32> to vector<16x1xf32>
    %cst_99 = arith.constant 3.200000e+01 : f32
    %272 = vector.broadcast %cst_99 : f32 to vector<16x1xf32>
    %273 = arith.divf %271, %272 : vector<16x1xf32>
    %274 = vector.broadcast %273 : vector<16x1xf32> to vector<16x32xf32>
    %275 = arith.subf %265, %274 : vector<16x32xf32>
    %276 = arith.mulf %275, %275 : vector<16x32xf32>
    %cst_100 = arith.constant dense<0.000000e+00> : vector<16xf32>
    %277 = vector.multi_reduction <add>, %276, %cst_100 [1] : vector<16x32xf32> to vector<16xf32>
    %278 = vector.shape_cast %277 : vector<16xf32> to vector<16x1xf32>
    %cst_101 = arith.constant 3.200000e+01 : f32
    %279 = vector.broadcast %cst_101 : f32 to vector<16x1xf32>
    %280 = arith.divf %278, %279 : vector<16x1xf32>
    %281 = vector.broadcast %273 : vector<16x1xf32> to vector<16x32xf32>
    %282 = arith.subf %265, %281 : vector<16x32xf32>
    %cst_102 = arith.constant 9.99999996E-13 : f32
    %283 = vector.broadcast %cst_102 : f32 to vector<16x1xf32>
    %284 = arith.addf %280, %283 : vector<16x1xf32>
    %285 = math.rsqrt %284 : vector<16x1xf32>
    %286 = vector.broadcast %285 : vector<16x1xf32> to vector<16x32xf32>
    %287 = arith.mulf %282, %286 : vector<16x32xf32>
    %288 = vector.broadcast %267 : vector<1x32xf32> to vector<16x32xf32>
    %289 = arith.mulf %287, %288 : vector<16x32xf32>
    %290 = vector.broadcast %269 : vector<1x32xf32> to vector<16x32xf32>
    %291 = arith.addf %289, %290 : vector<16x32xf32>
    %c1_103 = arith.constant 1 : index
    %c0_104 = arith.constant 0 : index
    %c0_105 = arith.constant 0 : index
    %292 = vector.load %arg8[%c1_103, %c0_104, %c0_105] : memref<2x32x128xf32, #tpu.memory_space<vmem>>, vector<1x32x128xf32>
    %293 = vector.shape_cast %292 : vector<1x32x128xf32> to vector<32x128xf32>
    %cst_106 = arith.constant dense<0.000000e+00> : vector<16x128xf32>
    %294 = tpu.matmul %291, %293, %cst_106 {dimension_numbers = #tpu.dot_dimension_numbers<[1], [0], [0], [1], [0, 0, 1, 1], [], []>} : vector<16x32xf32>, vector<32x128xf32>, vector<16x128xf32> -> vector<16x128xf32>
    %c1_107 = arith.constant 1 : index
    %c0_108 = arith.constant 0 : index
    %c0_109 = arith.constant 0 : index
    %295 = vector.load %arg9[%c1_107, %c0_108, %c0_109] : memref<2x1x128xf32, #tpu.memory_space<vmem>>, vector<1x1x128xf32>
    %296 = vector.shape_cast %295 : vector<1x1x128xf32> to vector<1x128xf32>
    %297 = vector.broadcast %296 : vector<1x128xf32> to vector<16x128xf32>
    %298 = arith.addf %294, %297 : vector<16x128xf32>
    %cst_110 = arith.constant 5.000000e-01 : f32
    %299 = vector.broadcast %cst_110 : f32 to vector<16x128xf32>
    %300 = arith.mulf %299, %298 : vector<16x128xf32>
    %cst_111 = arith.constant 2.000000e+00 : f32
    %301 = math.sqrt %cst_111 : f32
    %302 = vector.broadcast %301 : f32 to vector<16x128xf32>
    %303 = arith.divf %298, %302 : vector<16x128xf32>
    %304 = math.erf %303 : vector<16x128xf32>
    %cst_112 = arith.constant 1.000000e+00 : f32
    %305 = vector.broadcast %cst_112 : f32 to vector<16x128xf32>
    %306 = arith.addf %305, %304 : vector<16x128xf32>
    %307 = arith.mulf %300, %306 : vector<16x128xf32>
    %c1_113 = arith.constant 1 : index
    %c0_114 = arith.constant 0 : index
    %c0_115 = arith.constant 0 : index
    %308 = vector.load %arg10[%c1_113, %c0_114, %c0_115] : memref<2x128x32xf32, #tpu.memory_space<vmem>>, vector<1x128x32xf32>
    %309 = vector.shape_cast %308 : vector<1x128x32xf32> to vector<128x32xf32>
    %cst_116 = arith.constant dense<0.000000e+00> : vector<16x32xf32>
    %310 = tpu.matmul %307, %309, %cst_116 {dimension_numbers = #tpu.dot_dimension_numbers<[1], [0], [0], [1], [0, 0, 1, 1], [], []>} : vector<16x128xf32>, vector<128x32xf32>, vector<16x32xf32> -> vector<16x32xf32>
    %c1_117 = arith.constant 1 : index
    %c0_118 = arith.constant 0 : index
    %c0_119 = arith.constant 0 : index
    %311 = vector.load %arg11[%c1_117, %c0_118, %c0_119] : memref<2x1x32xf32, #tpu.memory_space<vmem>>, vector<1x1x32xf32>
    %312 = vector.shape_cast %311 : vector<1x1x32xf32> to vector<1x32xf32>
    %313 = vector.broadcast %312 : vector<1x32xf32> to vector<16x32xf32>
    %314 = arith.addf %310, %313 : vector<16x32xf32>
    %315 = arith.addf %314, %291 : vector<16x32xf32>
    %c1_120 = arith.constant 1 : index
    %c0_121 = arith.constant 0 : index
    %c0_122 = arith.constant 0 : index
    %316 = vector.load %arg12[%c1_120, %c0_121, %c0_122] : memref<2x1x32xf32, #tpu.memory_space<vmem>>, vector<1x1x32xf32>
    %317 = vector.shape_cast %316 : vector<1x1x32xf32> to vector<1x32xf32>
    %c1_123 = arith.constant 1 : index
    %c0_124 = arith.constant 0 : index
    %c0_125 = arith.constant 0 : index
    %318 = vector.load %arg13[%c1_123, %c0_124, %c0_125] : memref<2x1x32xf32, #tpu.memory_space<vmem>>, vector<1x1x32xf32>
    %319 = vector.shape_cast %318 : vector<1x1x32xf32> to vector<1x32xf32>
    %cst_126 = arith.constant dense<0.000000e+00> : vector<16xf32>
    %320 = vector.multi_reduction <add>, %315, %cst_126 [1] : vector<16x32xf32> to vector<16xf32>
    %321 = vector.shape_cast %320 : vector<16xf32> to vector<16x1xf32>
    %cst_127 = arith.constant 3.200000e+01 : f32
    %322 = vector.broadcast %cst_127 : f32 to vector<16x1xf32>
    %323 = arith.divf %321, %322 : vector<16x1xf32>
    %324 = vector.broadcast %323 : vector<16x1xf32> to vector<16x32xf32>
    %325 = arith.subf %315, %324 : vector<16x32xf32>
    %326 = arith.mulf %325, %325 : vector<16x32xf32>
    %cst_128 = arith.constant dense<0.000000e+00> : vector<16xf32>
    %327 = vector.multi_reduction <add>, %326, %cst_128 [1] : vector<16x32xf32> to vector<16xf32>
    %328 = vector.shape_cast %327 : vector<16xf32> to vector<16x1xf32>
    %cst_129 = arith.constant 3.200000e+01 : f32
    %329 = vector.broadcast %cst_129 : f32 to vector<16x1xf32>
    %330 = arith.divf %328, %329 : vector<16x1xf32>
    %331 = vector.broadcast %323 : vector<16x1xf32> to vector<16x32xf32>
    %332 = arith.subf %315, %331 : vector<16x32xf32>
    %cst_130 = arith.constant 9.99999996E-13 : f32
    %333 = vector.broadcast %cst_130 : f32 to vector<16x1xf32>
    %334 = arith.addf %330, %333 : vector<16x1xf32>
    %335 = math.rsqrt %334 : vector<16x1xf32>
    %336 = vector.broadcast %335 : vector<16x1xf32> to vector<16x32xf32>
    %337 = arith.mulf %332, %336 : vector<16x32xf32>
    %338 = vector.broadcast %317 : vector<1x32xf32> to vector<16x32xf32>
    %339 = arith.mulf %337, %338 : vector<16x32xf32>
    %340 = vector.broadcast %319 : vector<1x32xf32> to vector<16x32xf32>
    %341 = arith.addf %339, %340 : vector<16x32xf32>
    %c0_131 = arith.constant 0 : index
    %c0_132 = arith.constant 0 : index
    %342 = vector.load %arg14[%c0_131, %c0_132] : memref<16x32xf32, #tpu.memory_space<vmem>>, vector<16x32xf32>
    tpu.vector_store %arg14[%c0_131, %c0_132], %341 {strides = array<i32>} : memref<16x32xf32, #tpu.memory_space<vmem>>, vector<16x32xf32>,
    return
  }
}

</mosaic_0001>

<llo_original>
// kernel: tpu_custom_call.1
$region0: #{tpu_custom_call.1}
  #allocation0 [shape = 'u32[]', space=smem, size = 0x4, offset = 0x4, fixed_abs, tag = 'smem constant byte address 0x4 - core index']
  #allocation1 [shape = 'u32[144,128]{1,0:T(1,128)}', space=vmem, size = 0x12000, scoped, tag = 'internal scratch']
  %s0 = inlined_call_operand.vmem [shape: f32[16,32], index: 0, kind: input, shape index: {}]
  %s1 = inlined_call_operand.vmem [shape: f32[1,16], index: 1, kind: input, shape index: {}]
  %s2 = inlined_call_operand.vmem [shape: f32[2,32,96], index: 2, kind: input, shape index: {}]
  %s3 = inlined_call_operand.vmem [shape: f32[2,1,96], index: 3, kind: input, shape index: {}]
  %s4 = inlined_call_operand.vmem [shape: f32[2,4,8,32], index: 4, kind: input, shape index: {}]
  %s5 = inlined_call_operand.vmem [shape: f32[2,1,32], index: 5, kind: input, shape index: {}]
  %s6 = inlined_call_operand.vmem [shape: f32[2,1,32], index: 6, kind: input, shape index: {}]
  %s7 = inlined_call_operand.vmem [shape: f32[2,1,32], index: 7, kind: input, shape index: {}]
  %s8 = inlined_call_operand.vmem [shape: f32[2,32,128], index: 8, kind: input, shape index: {}]
  %s9 = inlined_call_operand.vmem [shape: f32[2,1,128], index: 9, kind: input, shape index: {}]
  %s10 = inlined_call_operand.vmem [shape: f32[2,128,32], index: 10, kind: input, shape index: {}]
  %s11 = inlined_call_operand.vmem [shape: f32[2,1,32], index: 11, kind: input, shape index: {}]
  %s12 = inlined_call_operand.vmem [shape: f32[2,1,32], index: 12, kind: input, shape index: {}]
  %s13 = inlined_call_operand.vmem [shape: f32[2,1,32], index: 13, kind: input, shape index: {}]
  %s14 = inlined_call_operand.hbm [shape: f32[16,32], index: 14, kind: output, shape index: {}]
  %s15 = sld [smem:[#allocation0]]
  $region66: #{tpu_custom_call.1} parent=0
    _
  %s17 = ssub.s32 1, %s15
  %s18 = scalar_select 0, %s17, %s15
  $region1: #{tpu_custom_call.1} parent=0
    #allocation2 [shape = 'u8[8192]{0}', space=vmem, size = 0x2000, scoped, tag = 'output window, operand 0, single buffered']
    #allocation3 [shape = 's32[1]{0}', space=sflag, size = 0x4, scoped, tag = 'scoped memory for tpu_custom_call.1']
    %19 = vsyncpa [#allocation3], 0
    // Predicated region
    $region2: #{tpu_custom_call.1} parent=1 // pred_check
      _
    $region3: #{tpu_custom_call.1} parent=1 // pred_check_branch
      %21 = sbr.rel (0) target = $region5
    $region4: #{tpu_custom_call.1} parent=1 // pred_region
      _
    $region5: #{tpu_custom_call.1} parent=1 // pred_fallthru
      _
    // Predicated region
    $region6: #{tpu_custom_call.1} parent=1 // pred_check
      _
    $region7: #{tpu_custom_call.1} parent=1 // pred_check_branch
      %23 = sbr.rel (0) target = $region9
    $region8: #{tpu_custom_call.1} parent=1 // pred_region
      _
    $region9: #{tpu_custom_call.1} parent=1 // pred_fallthru
      _
    // Predicated region
    $region10: #{tpu_custom_call.1} parent=1 // pred_check
      _
    $region11: #{tpu_custom_call.1} parent=1 // pred_check_branch
      %25 = sbr.rel (0) target = $region13
    $region12: #{tpu_custom_call.1} parent=1 // pred_region
      _
    $region13: #{tpu_custom_call.1} parent=1 // pred_fallthru
      _
    // Predicated region
    $region14: #{tpu_custom_call.1} parent=1 // pred_check
      _
    $region15: #{tpu_custom_call.1} parent=1 // pred_check_branch
      %27 = sbr.rel (0) target = $region17
    $region16: #{tpu_custom_call.1} parent=1 // pred_region
      _
    $region17: #{tpu_custom_call.1} parent=1 // pred_fallthru
      _
    // Predicated region
    $region18: #{tpu_custom_call.1} parent=1 // pred_check
      _
    $region19: #{tpu_custom_call.1} parent=1 // pred_check_branch
      %29 = sbr.rel (0) target = $region21
    $region20: #{tpu_custom_call.1} parent=1 // pred_region
      _
    $region21: #{tpu_custom_call.1} parent=1 // pred_fallthru
      _
    // Predicated region
    $region22: #{tpu_custom_call.1} parent=1 // pred_check
      _
    $region23: #{tpu_custom_call.1} parent=1 // pred_check_branch
      %31 = sbr.rel (0) target = $region25
    $region24: #{tpu_custom_call.1} parent=1 // pred_region
      _
    $region25: #{tpu_custom_call.1} parent=1 // pred_fallthru
      _
    // Predicated region
    $region26: #{tpu_custom_call.1} parent=1 // pred_check
      _
    $region27: #{tpu_custom_call.1} parent=1 // pred_check_branch
      %33 = sbr.rel (0) target = $region29
    $region28: #{tpu_custom_call.1} parent=1 // pred_region
      _
    $region29: #{tpu_custom_call.1} parent=1 // pred_fallthru
      _
    // Predicated region
    $region30: #{tpu_custom_call.1} parent=1 // pred_check
      _
    $region31: #{tpu_custom_call.1} parent=1 // pred_check_branch
      %35 = sbr.rel (0) target = $region33
    $region32: #{tpu_custom_call.1} parent=1 // pred_region
      _
    $region33: #{tpu_custom_call.1} parent=1 // pred_fallthru
      _
    // Predicated region
    $region34: #{tpu_custom_call.1} parent=1 // pred_check
      _
    $region35: #{tpu_custom_call.1} parent=1 // pred_check_branch
      %37 = sbr.rel (0) target = $region37
    $region36: #{tpu_custom_call.1} parent=1 // pred_region
      _
    $region37: #{tpu_custom_call.1} parent=1 // pred_fallthru
      _
    // Predicated region
    $region38: #{tpu_custom_call.1} parent=1 // pred_check
      _
    $region39: #{tpu_custom_call.1} parent=1 // pred_check_branch
      %39 = sbr.rel (0) target = $region41
    $region40: #{tpu_custom_call.1} parent=1 // pred_region
      _
    $region41: #{tpu_custom_call.1} parent=1 // pred_fallthru
      _
    // Predicated region
    $region42: #{tpu_custom_call.1} parent=1 // pred_check
      _
    $region43: #{tpu_custom_call.1} parent=1 // pred_check_branch
      %41 = sbr.rel (0) target = $region45
    $region44: #{tpu_custom_call.1} parent=1 // pred_region
      _
    $region45: #{tpu_custom_call.1} parent=1 // pred_fallthru
      _
    // Predicated region
    $region46: #{tpu_custom_call.1} parent=1 // pred_check
      _
    $region47: #{tpu_custom_call.1} parent=1 // pred_check_branch
      %43 = sbr.rel (0) target = $region49
    $region48: #{tpu_custom_call.1} parent=1 // pred_region
      _
    $region49: #{tpu_custom_call.1} parent=1 // pred_fallthru
      _
    // Predicated region
    $region50: #{tpu_custom_call.1} parent=1 // pred_check
      _
    $region51: #{tpu_custom_call.1} parent=1 // pred_check_branch
      %45 = sbr.rel (0) target = $region53
    $region52: #{tpu_custom_call.1} parent=1 // pred_region
      _
    $region53: #{tpu_custom_call.1} parent=1 // pred_fallthru
      _
    // Predicated region
    $region54: #{tpu_custom_call.1} parent=1 // pred_check
      _
    $region55: #{tpu_custom_call.1} parent=1 // pred_check_branch
      %47 = sbr.rel (0) target = $region57
    $region56: #{tpu_custom_call.1} parent=1 // pred_region
      _
    $region57: #{tpu_custom_call.1} parent=1 // pred_fallthru
      _
    %v48 = vld [vmem:[%s0] sm:$0xff]
    %v49 = vld [vmem:[%s0 + $0x8] sm:$0xff]
    %v50 = vlaneseq
    %v51 = vshrl.u32 %v50, 7
    %v52 = vadd.s32 %v51, 8
    %v53 = vlaneseq
    %v54 = vand.u32 %v53, 127
    %v55 = vsub.s32 %v51, %v54
    %v56 = vsub.s32 %v52, %v54
    %vm57 = vcmp.lt.s32.totalorder %v55, 0
    %v58 = vsub.s32 0, %v55
    %v59 = vsel %vm57, %v58, %v55
    %vm60 = vcmp.lt.s32.totalorder %v56, 0
    %v61 = vsub.s32 0, %v56
    %v62 = vsel %vm60, %v61, %v56
    %v63 = vcvt.s32.f32 %v59
    %v64 = vcvt.s32.f32 %v62
    %v65 = vsub.f32 0.0, %v63
    %v66 = vsub.f32 0.0, %v64
    %vm67 = vcmp.ge.s32.totalorder %v51, 0
    %vm68 = vcmp.ge.s32.totalorder %v52, 0
    %vm69 = vcmp.lt.s32.totalorder %v51, 8
    %vm70 = vcmp.lt.s32.totalorder %v52, 8
    %vm71 = vmand %vm67, %vm69
    %vm72 = vmand %vm68, %vm70
    %vm73 = vcmp.ge.s32.totalorder %v54, 0
    %vm74 = vcmp.lt.s32.totalorder %v54, 8
    %vm75 = vmand %vm73, %vm74
    %vm76 = vmand %vm71, %vm75
    %vm77 = vmand %vm72, %vm75
    %vm78 = vcmp.ge.s32.totalorder %v51, 8
    %vm79 = vcmp.ge.s32.totalorder %v52, 8
    %vm80 = vcmp.lt.s32.totalorder %v51, 16
    %vm81 = vcmp.lt.s32.totalorder %v52, 16
    %vm82 = vmand %vm78, %vm80
    %vm83 = vmand %vm79, %vm81
    %vm84 = vcmp.ge.s32.totalorder %v54, 8
    %vm85 = vcmp.lt.s32.totalorder %v54, 16
    %vm86 = vmand %vm84, %vm85
    %vm87 = vmand %vm82, %vm86
    %vm88 = vmand %vm83, %vm86
    %vm89 = vmor %vm76, %vm87
    %vm90 = vmor %vm77, %vm88
    %v91 = vsel %vm89, 0.0, -10000.0
    %v92 = vsel %vm90, 0.0, -10000.0
    %v93 = vld [vmem:[%s1] sm:$0x1]
    %v94 = vsub.f32 1.0, %v93
    %v95 = vmul.f32 %v94, -10000.0
    %v97 = vlaneseq
    %v98 = vshrl.u32 %v97, 7
    %v99 = vsub.s32 0, %v98
    %v100 = vrot.slane %v95, %v99
    %v102 = vadd.f32 %v91, %v100
    %v103 = vadd.f32 %v92, %v100
    %v104 = vmul.f32 %v65, 0.25
    %v105 = vmul.f32 %v66, 0.25
    %v106 = vadd.f32 %v104, %v102
    %v107 = vadd.f32 %v105, %v103
    %v108 = vmul.f32 %v65, 0.0625
    %v109 = vmul.f32 %v66, 0.0625
    %v110 = vadd.f32 %v108, %v102
    %v111 = vadd.f32 %v109, %v103
    %v112 = vmul.f32 %v65, 0.015625
    %v113 = vmul.f32 %v66, 0.015625
    %v114 = vadd.f32 %v112, %v102
    %v115 = vadd.f32 %v113, %v103
    %v116 = vmul.f32 %v65, 0.00390625
    %v117 = vmul.f32 %v66, 0.00390625
    %v118 = vadd.f32 %v116, %v102
    %v119 = vadd.f32 %v117, %v103
    %v120 = vld [vmem:[%s2] sm:$0xff]
    %v121 = vld [vmem:[%s2 + $0x8] sm:$0xff]
    %v122 = vld [vmem:[%s2 + $0x10] sm:$0xff]
    %v123 = vld [vmem:[%s2 + $0x18] sm:$0xff]
    %v124 = vld [vmem:[%s3] sm:$0x1]
    %v126 = vlaneseq
    %v127 = vshrl.u32 %v126, 7
    %v128 = vsub.s32 0, %v127
    %v129 = vrot.slane %v124, %v128
    %vm131 = vcmask 261120
    %v133 = vsel %vm131, %v48, 0
    %v136 = vsel %vm131, %v49, 0
    %138 = vmatprep.subr.mxu0 0.0
    %139 = vmatpush1.msra.mxu0 %v120
    %140 = vmatprep.subr.mxu0 0.0
    %141 = vmatpush1.msra.mxu0 %v121
    %142 = vmatprep.subr.mxu0 0.0
    %143 = vmatpush1.msra.mxu0 %v122
    %144 = vmatprep.subr.mxu0 0.0
    %145 = vmatpush1.msra.mxu0 %v123
    %146 = vmatprep.subr.mxu0 0.0
    %147 = vmatpush1.msra.mxu0 0.0
    %148 = vmatprep.subr.mxu0 0.0
    %149 = vmatpush1.msra.mxu0 0.0
    %150 = vmatprep.subr.mxu0 0.0
    %151 = vmatpush1.msra.mxu0 0.0
    %152 = vmatprep.subr.mxu0 0.0
    %153 = vmatpush1.msra.mxu0 0.0
    %154 = vmatprep.subr.mxu0 0.0
    %155 = vmatpush1.msra.mxu0 0.0
    %156 = vmatprep.subr.mxu0 0.0
    %157 = vmatpush1.msra.mxu0 0.0
    %158 = vmatprep.subr.mxu0 0.0
    %159 = vmatpush1.msra.mxu0 0.0
    %160 = vmatprep.subr.mxu0 0.0
    %161 = vmatpush1.msra.mxu0 0.0
    %162 = vmatprep.subr.mxu0 0.0
    %163 = vmatpush1.msra.mxu0 0.0
    %164 = vmatprep.subr.mxu0 0.0
    %165 = vmatpush1.msra.mxu0 0.0
    %166 = vmatprep.subr.mxu0 0.0
    %167 = vmatpush1.msra.mxu0 0.0
    %168 = vmatprep.subr.mxu0 0.0
    %169 = vmatpush1.msra.mxu0 0.0
    %170 = vmatprep.subr.mxu0 0.0
    %171 = vmatpush1.msra.mxu0 0.0
    %172 = vmatprep.subr.mxu0 0.0
    %173 = vmatpush1.msra.mxu0 0.0
    %174 = vmatprep.subr.mxu0 0.0
    %175 = vmatpush1.msra.mxu0 0.0
    %176 = vmatprep.subr.mxu0 0.0
    %177 = vmatpush1.msra.mxu0 0.0
    %178 = vmatprep.subr.mxu0 0.0
    %179 = vmatpush1.msra.mxu0 0.0
    %180 = vmatprep.subr.mxu0 0.0
    %181 = vmatpush1.msra.mxu0 0.0
    %182 = vmatprep.subr.mxu0 0.0
    %183 = vmatpush1.msra.mxu0 0.0
    %184 = vmatprep.subr.mxu0 0.0
    %185 = vmatpush1.msra.mxu0 0.0
    %186 = vmatprep.subr.mxu0 0.0
    %187 = vmatpush1.msra.mxu0 0.0
    %188 = vmatprep.subr.mxu0 0.0
    %189 = vmatpush1.msra.mxu0 0.0
    %190 = vmatprep.subr.mxu0 0.0
    %191 = vmatpush1.msra.mxu0 0.0
    %192 = vmatprep.subr.mxu0 0.0
    %193 = vmatpush1.msra.mxu0 0.0
    %194 = vmatprep.subr.mxu0 0.0
    %195 = vmatpush1.msra.mxu0 0.0
    %196 = vmatprep.subr.mxu0 0.0
    %197 = vmatpush1.msra.mxu0 0.0
    %198 = vmatprep.subr.mxu0 0.0
    %199 = vmatpush1.msra.mxu0 0.0
    %200 = vmatprep.subr.mxu0 0.0
    %201 = vmatpush1.msra.mxu0 0.0
    %202 = vmatprep.mubr.f32.mxu0 0.0
    %203 = vmatmul.mubr.f32.gmra.mrb[0].mxu0 %v133
    %v204 = vpop.f32.mrb[0].mxu0
    %v205 = vadd.f32 %v129, %v204
    %v206 = vpop.f32.mrb[0].mxu0
    %207 = vmatprep.mubr.f32.mxu0 0.0
    %208 = vmatmul.mubr.f32.gmra.mrb[0].mxu0 %v136
    %v209 = vpop.f32.mrb[0].mxu0
    %v210 = vadd.f32 %v129, %v209
    %v211 = vpop.f32.mrb[0].mxu0
    %212 = vdwg.mxu0
    %215 = vrot.lane.b32.xlu0 %v205, 120
    %v216 = vpop.permute.xlu0 %215
    %217 = vrot.lane.b32.xlu0 %v210, 120
    %v218 = vpop.permute.xlu0 %217
    %219 = vrot.lane.b32.xlu0 %v205, 112
    %v220 = vpop.permute.xlu0 %219
    %221 = vrot.lane.b32.xlu0 %v210, 112
    %v222 = vpop.permute.xlu0 %221
    %223 = vrot.lane.b32.xlu0 %v205, 104
    %v224 = vpop.permute.xlu0 %223
    %225 = vrot.lane.b32.xlu0 %v210, 104
    %v226 = vpop.permute.xlu0 %225
    %227 = vrot.lane.b32.xlu0 %v205, 96
    %v228 = vpop.permute.xlu0 %227
    %229 = vrot.lane.b32.xlu0 %v210, 96
    %v230 = vpop.permute.xlu0 %229
    %vm231 = vcmask 64512
    %v232 = vsel %vm231, %v205, 0
    %v234 = vsel %vm231, %v210, 0
    %v236 = vsel %vm231, %v228, 0
    %v238 = vsel %vm231, %v230, 0
    %240 = vmatprep.subr.mxu0 0.0
    %241 = vmatpush1.xpose.msra.mxu0 %v236
    %242 = vmatprep.subr.mxu0 0.0
    %243 = vmatpush1.xpose.msra.mxu0 %v238
    %244 = vmatprep.subr.mxu0 0.0
    %245 = vmatpush1.xpose.msra.mxu0 0.0
    %246 = vmatprep.subr.mxu0 0.0
    %247 = vmatpush1.xpose.msra.mxu0 0.0
    %248 = vmatprep.subr.mxu0 0.0
    %249 = vmatpush1.xpose.msra.mxu0 0.0
    %250 = vmatprep.subr.mxu0 0.0
    %251 = vmatpush1.xpose.msra.mxu0 0.0
    %252 = vmatprep.subr.mxu0 0.0
    %253 = vmatpush1.xpose.msra.mxu0 0.0
    %254 = vmatprep.subr.mxu0 0.0
    %255 = vmatpush1.xpose.msra.mxu0 0.0
    %256 = vmatprep.subr.mxu0 0.0
    %257 = vmatpush1.xpose.msra.mxu0 0.0
    %258 = vmatprep.subr.mxu0 0.0
    %259 = vmatpush1.xpose.msra.mxu0 0.0
    %260 = vmatprep.subr.mxu0 0.0
    %261 = vmatpush1.xpose.msra.mxu0 0.0
    %262 = vmatprep.subr.mxu0 0.0
    %263 = vmatpush1.xpose.msra.mxu0 0.0
    %264 = vmatprep.subr.mxu0 0.0
    %265 = vmatpush1.xpose.msra.mxu0 0.0
    %266 = vmatprep.subr.mxu0 0.0
    %267 = vmatpush1.xpose.msra.mxu0 0.0
    %268 = vmatprep.subr.mxu0 0.0
    %269 = vmatpush1.xpose.msra.mxu0 0.0
    %270 = vmatprep.subr.mxu0 0.0
    %271 = vmatpush1.xpose.msra.mxu0 0.0
    %272 = vmatprep.subr.mxu0 0.0
    %273 = vmatpush1.xpose.msra.mxu0 0.0
    %274 = vmatprep.subr.mxu0 0.0
    %275 = vmatpush1.xpose.msra.mxu0 0.0
    %276 = vmatprep.subr.mxu0 0.0
    %277 = vmatpush1.xpose.msra.mxu0 0.0
    %278 = vmatprep.subr.mxu0 0.0
    %279 = vmatpush1.xpose.msra.mxu0 0.0
    %280 = vmatprep.subr.mxu0 0.0
    %281 = vmatpush1.xpose.msra.mxu0 0.0
    %282 = vmatprep.subr.mxu0 0.0
    %283 = vmatpush1.xpose.msra.mxu0 0.0
    %284 = vmatprep.subr.mxu0 0.0
    %285 = vmatpush1.xpose.msra.mxu0 0.0
    %286 = vmatprep.subr.mxu0 0.0
    %287 = vmatpush1.xpose.msra.mxu0 0.0
    %288 = vmatprep.subr.mxu0 0.0
    %289 = vmatpush1.xpose.msra.mxu0 0.0
    %290 = vmatprep.subr.mxu0 0.0
    %291 = vmatpush1.xpose.msra.mxu0 0.0
    %292 = vmatprep.subr.mxu0 0.0
    %293 = vmatpush1.xpose.msra.mxu0 0.0
    %294 = vmatprep.subr.mxu0 0.0
    %295 = vmatpush1.xpose.msra.mxu0 0.0
    %296 = vmatprep.subr.mxu0 0.0
    %297 = vmatpush1.xpose.msra.mxu0 0.0
    %298 = vmatprep.subr.mxu0 0.0
    %299 = vmatpush1.xpose.msra.mxu0 0.0
    %300 = vmatprep.subr.mxu0 0.0
    %301 = vmatpush1.xpose.msra.mxu0 0.0
    %302 = vmatprep.subr.mxu0 0.0
    %303 = vmatpush1.xpose.msra.mxu0 0.0
    %304 = vmatprep.mubr.f32.mxu0 0.0
    %305 = vmatmul.mubr.f32.gmra.mrb[0].mxu0 %v232
    %v306 = vpop.f32.mrb[0].mxu0
    %v307 = vadd.f32 %v106, %v306
    %v308 = vpop.f32.mrb[0].mxu0
    %309 = vmatprep.mubr.f32.mxu0 0.0
    %310 = vmatmul.mubr.f32.gmra.mrb[0].mxu0 %v234
    %v311 = vpop.f32.mrb[0].mxu0
    %v312 = vadd.f32 %v107, %v311
    %v313 = vpop.f32.mrb[0].mxu0
    %314 = vdwg.mxu0
    %315 = vrot.lane.b32.xlu0 %v216, 96
    %v316 = vpop.permute.xlu0 %315
    %317 = vrot.lane.b32.xlu0 %v218, 96
    %v318 = vpop.permute.xlu0 %317
    %v319 = vsel %vm231, %v216, 0
    %v321 = vsel %vm231, %v218, 0
    %v323 = vsel %vm231, %v316, 0
    %v325 = vsel %vm231, %v318, 0
    %327 = vmatprep.subr.mxu0 0.0
    %328 = vmatpush1.xpose.msra.mxu0 %v323
    %329 = vmatprep.subr.mxu0 0.0
    %330 = vmatpush1.xpose.msra.mxu0 %v325
    %331 = vmatprep.subr.mxu0 0.0
    %332 = vmatpush1.xpose.msra.mxu0 0.0
    %333 = vmatprep.subr.mxu0 0.0
    %334 = vmatpush1.xpose.msra.mxu0 0.0
    %335 = vmatprep.subr.mxu0 0.0
    %336 = vmatpush1.xpose.msra.mxu0 0.0
    %337 = vmatprep.subr.mxu0 0.0
    %338 = vmatpush1.xpose.msra.mxu0 0.0
    %339 = vmatprep.subr.mxu0 0.0
    %340 = vmatpush1.xpose.msra.mxu0 0.0
    %341 = vmatprep.subr.mxu0 0.0
    %342 = vmatpush1.xpose.msra.mxu0 0.0
    %343 = vmatprep.subr.mxu0 0.0
    %344 = vmatpush1.xpose.msra.mxu0 0.0
    %345 = vmatprep.subr.mxu0 0.0
    %346 = vmatpush1.xpose.msra.mxu0 0.0
    %347 = vmatprep.subr.mxu0 0.0
    %348 = vmatpush1.xpose.msra.mxu0 0.0
    %349 = vmatprep.subr.mxu0 0.0
    %350 = vmatpush1.xpose.msra.mxu0 0.0
    %351 = vmatprep.subr.mxu0 0.0
    %352 = vmatpush1.xpose.msra.mxu0 0.0
    %353 = vmatprep.subr.mxu0 0.0
    %354 = vmatpush1.xpose.msra.mxu0 0.0
    %355 = vmatprep.subr.mxu0 0.0
    %356 = vmatpush1.xpose.msra.mxu0 0.0
    %357 = vmatprep.subr.mxu0 0.0
    %358 = vmatpush1.xpose.msra.mxu0 0.0
    %359 = vmatprep.subr.mxu0 0.0
    %360 = vmatpush1.xpose.msra.mxu0 0.0
    %361 = vmatprep.subr.mxu0 0.0
    %362 = vmatpush1.xpose.msra.mxu0 0.0
    %363 = vmatprep.subr.mxu0 0.0
    %364 = vmatpush1.xpose.msra.mxu0 0.0
    %365 = vmatprep.subr.mxu0 0.0
    %366 = vmatpush1.xpose.msra.mxu0 0.0
    %367 = vmatprep.subr.mxu0 0.0
    %368 = vmatpush1.xpose.msra.mxu0 0.0
    %369 = vmatprep.subr.mxu0 0.0
    %370 = vmatpush1.xpose.msra.mxu0 0.0
    %371 = vmatprep.subr.mxu0 0.0
    %372 = vmatpush1.xpose.msra.mxu0 0.0
    %373 = vmatprep.subr.mxu0 0.0
    %374 = vmatpush1.xpose.msra.mxu0 0.0
    %375 = vmatprep.subr.mxu0 0.0
    %376 = vmatpush1.xpose.msra.mxu0 0.0
    %377 = vmatprep.subr.mxu0 0.0
    %378 = vmatpush1.xpose.msra.mxu0 0.0
    %379 = vmatprep.subr.mxu0 0.0
    %380 = vmatpush1.xpose.msra.mxu0 0.0
    %381 = vmatprep.subr.mxu0 0.0
    %382 = vmatpush1.xpose.msra.mxu0 0.0
    %383 = vmatprep.subr.mxu0 0.0
    %384 = vmatpush1.xpose.msra.mxu0 0.0
    %385 = vmatprep.subr.mxu0 0.0
    %386 = vmatpush1.xpose.msra.mxu0 0.0
    %387 = vmatprep.subr.mxu0 0.0
    %388 = vmatpush1.xpose.msra.mxu0 0.0
    %389 = vmatprep.subr.mxu0 0.0
    %390 = vmatpush1.xpose.msra.mxu0 0.0
    %391 = vmatprep.mubr.f32.mxu0 0.0
    %392 = vmatmul.mubr.f32.gmra.mrb[0].mxu0 %v319
    %v393 = vpop.f32.mrb[0].mxu0
    %v394 = vadd.f32 %v110, %v393
    %v395 = vpop.f32.mrb[0].mxu0
    %396 = vmatprep.mubr.f32.mxu0 0.0
    %397 = vmatmul.mubr.f32.gmra.mrb[0].mxu0 %v321
    %v398 = vpop.f32.mrb[0].mxu0
    %v399 = vadd.f32 %v111, %v398
    %v400 = vpop.f32.mrb[0].mxu0
    %401 = vdwg.mxu0
    %402 = vrot.lane.b32.xlu0 %v220, 96
    %v403 = vpop.permute.xlu0 %402
    %404 = vrot.lane.b32.xlu0 %v222, 96
    %v405 = vpop.permute.xlu0 %404
    %v406 = vsel %vm231, %v220, 0
    %v408 = vsel %vm231, %v222, 0
    %v410 = vsel %vm231, %v403, 0
    %v412 = vsel %vm231, %v405, 0
    %414 = vmatprep.subr.mxu0 0.0
    %415 = vmatpush1.xpose.msra.mxu0 %v410
    %416 = vmatprep.subr.mxu0 0.0
    %417 = vmatpush1.xpose.msra.mxu0 %v412
    %418 = vmatprep.subr.mxu0 0.0
    %419 = vmatpush1.xpose.msra.mxu0 0.0
    %420 = vmatprep.subr.mxu0 0.0
    %421 = vmatpush1.xpose.msra.mxu0 0.0
    %422 = vmatprep.subr.mxu0 0.0
    %423 = vmatpush1.xpose.msra.mxu0 0.0
    %424 = vmatprep.subr.mxu0 0.0
    %425 = vmatpush1.xpose.msra.mxu0 0.0
    %426 = vmatprep.subr.mxu0 0.0
    %427 = vmatpush1.xpose.msra.mxu0 0.0
    %428 = vmatprep.subr.mxu0 0.0
    %429 = vmatpush1.xpose.msra.mxu0 0.0
    %430 = vmatprep.subr.mxu0 0.0
    %431 = vmatpush1.xpose.msra.mxu0 0.0
    %432 = vmatprep.subr.mxu0 0.0
    %433 = vmatpush1.xpose.msra.mxu0 0.0
    %434 = vmatprep.subr.mxu0 0.0
    %435 = vmatpush1.xpose.msra.mxu0 0.0
    %436 = vmatprep.subr.mxu0 0.0
    %437 = vmatpush1.xpose.msra.mxu0 0.0
    %438 = vmatprep.subr.mxu0 0.0
    %439 = vmatpush1.xpose.msra.mxu0 0.0
    %440 = vmatprep.subr.mxu0 0.0
    %441 = vmatpush1.xpose.msra.mxu0 0.0
    %442 = vmatprep.subr.mxu0 0.0
    %443 = vmatpush1.xpose.msra.mxu0 0.0
    %444 = vmatprep.subr.mxu0 0.0
    %445 = vmatpush1.xpose.msra.mxu0 0.0
    %446 = vmatprep.subr.mxu0 0.0
    %447 = vmatpush1.xpose.msra.mxu0 0.0
    %448 = vmatprep.subr.mxu0 0.0
    %449 = vmatpush1.xpose.msra.mxu0 0.0
    %450 = vmatprep.subr.mxu0 0.0
    %451 = vmatpush1.xpose.msra.mxu0 0.0
    %452 = vmatprep.subr.mxu0 0.0
    %453 = vmatpush1.xpose.msra.mxu0 0.0
    %454 = vmatprep.subr.mxu0 0.0
    %455 = vmatpush1.xpose.msra.mxu0 0.0
    %456 = vmatprep.subr.mxu0 0.0
    %457 = vmatpush1.xpose.msra.mxu0 0.0
    %458 = vmatprep.subr.mxu0 0.0
    %459 = vmatpush1.xpose.msra.mxu0 0.0
    %460 = vmatprep.subr.mxu0 0.0
    %461 = vmatpush1.xpose.msra.mxu0 0.0
    %462 = vmatprep.subr.mxu0 0.0
    %463 = vmatpush1.xpose.msra.mxu0 0.0
    %464 = vmatprep.subr.mxu0 0.0
    %465 = vmatpush1.xpose.msra.mxu0 0.0
    %466 = vmatprep.subr.mxu0 0.0
    %467 = vmatpush1.xpose.msra.mxu0 0.0
    %468 = vmatprep.subr.mxu0 0.0
    %469 = vmatpush1.xpose.msra.mxu0 0.0
    %470 = vmatprep.subr.mxu0 0.0
    %471 = vmatpush1.xpose.msra.mxu0 0.0
    %472 = vmatprep.subr.mxu0 0.0
    %473 = vmatpush1.xpose.msra.mxu0 0.0
    %474 = vmatprep.subr.mxu0 0.0
    %475 = vmatpush1.xpose.msra.mxu0 0.0
    %476 = vmatprep.subr.mxu0 0.0
    %477 = vmatpush1.xpose.msra.mxu0 0.0
    %478 = vmatprep.mubr.f32.mxu0 0.0
    %479 = vmatmul.mubr.f32.gmra.mrb[0].mxu0 %v406
    %v480 = vpop.f32.mrb[0].mxu0
    %v481 = vadd.f32 %v114, %v480
    %v482 = vpop.f32.mrb[0].mxu0
    %483 = vmatprep.mubr.f32.mxu0 0.0
    %484 = vmatmul.mubr.f32.gmra.mrb[0].mxu0 %v408
    %v485 = vpop.f32.mrb[0].mxu0
    %v486 = vadd.f32 %v115, %v485
    %v487 = vpop.f32.mrb[0].mxu0
    %488 = vdwg.mxu0
    %489 = vrot.lane.b32.xlu0 %v224, 96
    %v490 = vpop.permute.xlu0 %489
    %491 = vrot.lane.b32.xlu0 %v226, 96
    %v492 = vpop.permute.xlu0 %491
    %v493 = vsel %vm231, %v224, 0
    %v495 = vsel %vm231, %v226, 0
    %v497 = vsel %vm231, %v490, 0
    %v499 = vsel %vm231, %v492, 0
    %501 = vmatprep.subr.mxu0 0.0
    %502 = vmatpush1.xpose.msra.mxu0 %v497
    %503 = vmatprep.subr.mxu0 0.0
    %504 = vmatpush1.xpose.msra.mxu0 %v499
    %505 = vmatprep.subr.mxu0 0.0
    %506 = vmatpush1.xpose.msra.mxu0 0.0
    %507 = vmatprep.subr.mxu0 0.0
    %508 = vmatpush1.xpose.msra.mxu0 0.0
    %509 = vmatprep.subr.mxu0 0.0
    %510 = vmatpush1.xpose.msra.mxu0 0.0
    %511 = vmatprep.subr.mxu0 0.0
    %512 = vmatpush1.xpose.msra.mxu0 0.0
    %513 = vmatprep.subr.mxu0 0.0
    %514 = vmatpush1.xpose.msra.mxu0 0.0
    %515 = vmatprep.subr.mxu0 0.0
    %516 = vmatpush1.xpose.msra.mxu0 0.0
    %517 = vmatprep.subr.mxu0 0.0
    %518 = vmatpush1.xpose.msra.mxu0 0.0
    %519 = vmatprep.subr.mxu0 0.0
    %520 = vmatpush1.xpose.msra.mxu0 0.0
    %521 = vmatprep.subr.mxu0 0.0
    %522 = vmatpush1.xpose.msra.mxu0 0.0
    %523 = vmatprep.subr.mxu0 0.0
    %524 = vmatpush1.xpose.msra.mxu0 0.0
    %525 = vmatprep.subr.mxu0 0.0
    %526 = vmatpush1.xpose.msra.mxu0 0.0
    %527 = vmatprep.subr.mxu0 0.0
    %528 = vmatpush1.xpose.msra.mxu0 0.0
    %529 = vmatprep.subr.mxu0 0.0
    %530 = vmatpush1.xpose.msra.mxu0 0.0
    %531 = vmatprep.subr.mxu0 0.0
    %532 = vmatpush1.xpose.msra.mxu0 0.0
    %533 = vmatprep.subr.mxu0 0.0
    %534 = vmatpush1.xpose.msra.mxu0 0.0
    %535 = vmatprep.subr.mxu0 0.0
    %536 = vmatpush1.xpose.msra.mxu0 0.0
    %537 = vmatprep.subr.mxu0 0.0
    %538 = vmatpush1.xpose.msra.mxu0 0.0
    %539 = vmatprep.subr.mxu0 0.0
    %540 = vmatpush1.xpose.msra.mxu0 0.0
    %541 = vmatprep.subr.mxu0 0.0
    %542 = vmatpush1.xpose.msra.mxu0 0.0
    %543 = vmatprep.subr.mxu0 0.0
    %544 = vmatpush1.xpose.msra.mxu0 0.0
    %545 = vmatprep.subr.mxu0 0.0
    %546 = vmatpush1.xpose.msra.mxu0 0.0
    %547 = vmatprep.subr.mxu0 0.0
    %548 = vmatpush1.xpose.msra.mxu0 0.0
    %549 = vmatprep.subr.mxu0 0.0
    %550 = vmatpush1.xpose.msra.mxu0 0.0
    %551 = vmatprep.subr.mxu0 0.0
    %552 = vmatpush1.xpose.msra.mxu0 0.0
    %553 = vmatprep.subr.mxu0 0.0
    %554 = vmatpush1.xpose.msra.mxu0 0.0
    %555 = vmatprep.subr.mxu0 0.0
    %556 = vmatpush1.xpose.msra.mxu0 0.0
    %557 = vmatprep.subr.mxu0 0.0
    %558 = vmatpush1.xpose.msra.mxu0 0.0
    %559 = vmatprep.subr.mxu0 0.0
    %560 = vmatpush1.xpose.msra.mxu0 0.0
    %561 = vmatprep.subr.mxu0 0.0
    %562 = vmatpush1.xpose.msra.mxu0 0.0
    %563 = vmatprep.subr.mxu0 0.0
    %564 = vmatpush1.xpose.msra.mxu0 0.0
    %565 = vmatprep.mubr.f32.mxu0 0.0
    %566 = vmatmul.mubr.f32.gmra.mrb[0].mxu0 %v493
    %v567 = vpop.f32.mrb[0].mxu0
    %v568 = vadd.f32 %v118, %v567
    %v569 = vpop.f32.mrb[0].mxu0
    %570 = vmatprep.mubr.f32.mxu0 0.0
    %571 = vmatmul.mubr.f32.gmra.mrb[0].mxu0 %v495
    %v572 = vpop.f32.mrb[0].mxu0
    %v573 = vadd.f32 %v119, %v572
    %v574 = vpop.f32.mrb[0].mxu0
    %575 = vdwg.mxu0
    %v576 = vmul.f32 %v307, 1.442695
    %v577 = vpow.pop %v576
    %v578 = vmul.f32 %v312, 1.442695
    %v579 = vpow.pop %v578
    %v580 = vmul.f32 %v394, 1.442695
    %v581 = vpow.pop %v580
    %v582 = vmul.f32 %v399, 1.442695
    %v583 = vpow.pop %v582
    %v584 = vmul.f32 %v481, 1.442695
    %v585 = vpow.pop %v584
    %v586 = vmul.f32 %v486, 1.442695
    %v587 = vpow.pop %v586
    %v588 = vmul.f32 %v568, 1.442695
    %v589 = vpow.pop %v588
    %v590 = vmul.f32 %v573, 1.442695
    %v591 = vpow.pop %v590
    %vm592 = vcmask 130048
    %v593 = vsel %vm592, %v577, 0.0
    %594 = vadd.xlane.f32.xlu0 %v593
    %v595 = vpop.xlane.xlu0 %594
    %v596 = vsel %vm592, %v579, 0.0
    %597 = vadd.xlane.f32.xlu0 %v596
    %v598 = vpop.xlane.xlu0 %597
    %v599 = vsel %vm592, %v581, 0.0
    %600 = vadd.xlane.f32.xlu0 %v599
    %v601 = vpop.xlane.xlu0 %600
    %v602 = vsel %vm592, %v583, 0.0
    %603 = vadd.xlane.f32.xlu0 %v602
    %v604 = vpop.xlane.xlu0 %603
    %v605 = vsel %vm592, %v585, 0.0
    %606 = vadd.xlane.f32.xlu0 %v605
    %v607 = vpop.xlane.xlu0 %606
    %v608 = vsel %vm592, %v587, 0.0
    %609 = vadd.xlane.f32.xlu0 %v608
    %v610 = vpop.xlane.xlu0 %609
    %v611 = vsel %vm592, %v589, 0.0
    %612 = vadd.xlane.f32.xlu0 %v611
    %v613 = vpop.xlane.xlu0 %612
    %v614 = vsel %vm592, %v591, 0.0
    %615 = vadd.xlane.f32.xlu0 %v614
    %v616 = vpop.xlane.xlu0 %615
    %v617 = vrcp.pop %v595
    %v618 = vrcp.pop %v598
    %v619 = vrcp.pop %v601
    %v620 = vrcp.pop %v604
    %v621 = vrcp.pop %v607
    %v622 = vrcp.pop %v610
    %v623 = vrcp.pop %v613
    %v624 = vrcp.pop %v616
    %v625 = vmul.f32 %v595, %v617
    %v626 = vmul.f32 %v598, %v618
    %v627 = vmul.f32 %v601, %v619
    %v628 = vmul.f32 %v604, %v620
    %v629 = vmul.f32 %v607, %v621
    %v630 = vmul.f32 %v610, %v622
    %v631 = vmul.f32 %v613, %v623
    %v632 = vmul.f32 %v616, %v624
    %v633 = vsub.f32 2.0, %v625
    %v634 = vsub.f32 2.0, %v626
    %v635 = vsub.f32 2.0, %v627
    %v636 = vsub.f32 2.0, %v628
    %v637 = vsub.f32 2.0, %v629
    %v638 = vsub.f32 2.0, %v630
    %v639 = vsub.f32 2.0, %v631
    %v640 = vsub.f32 2.0, %v632
    %v641 = vmul.f32 %v617, %v633
    %v642 = vmul.f32 %v618, %v634
    %v643 = vmul.f32 %v619, %v635
    %v644 = vmul.f32 %v620, %v636
    %v645 = vmul.f32 %v621, %v637
    %v646 = vmul.f32 %v622, %v638
    %v647 = vmul.f32 %v623, %v639
    %v648 = vmul.f32 %v624, %v640
    %v649 = vmul.f32 %v577, %v641
    %v650 = vmul.f32 %v579, %v642
    %v651 = vmul.f32 %v581, %v643
    %v652 = vmul.f32 %v583, %v644
    %v653 = vmul.f32 %v585, %v645
    %v654 = vmul.f32 %v587, %v646
    %v655 = vmul.f32 %v589, %v647
    %v656 = vmul.f32 %v591, %v648
    %657 = vrot.lane.b32.xlu0 %v205, 64
    %v658 = vpop.permute.xlu0 %657
    %659 = vrot.lane.b32.xlu0 %v210, 64
    %v660 = vpop.permute.xlu0 %659
    %v664 = vsel %vm592, %v649, 0
    %v667 = vsel %vm592, %v650, 0
    %669 = vmatprep.subr.mxu0 0.0
    %670 = vmatpush1.msra.mxu0 %v658
    %671 = vmatprep.subr.mxu0 0.0
    %672 = vmatpush1.msra.mxu0 %v660
    %673 = vmatprep.subr.mxu0 0.0
    %674 = vmatpush1.msra.mxu0 0.0
    %675 = vmatprep.subr.mxu0 0.0
    %676 = vmatpush1.msra.mxu0 0.0
    %677 = vmatprep.subr.mxu0 0.0
    %678 = vmatpush1.msra.mxu0 0.0
    %679 = vmatprep.subr.mxu0 0.0
    %680 = vmatpush1.msra.mxu0 0.0
    %681 = vmatprep.subr.mxu0 0.0
    %682 = vmatpush1.msra.mxu0 0.0
    %683 = vmatprep.subr.mxu0 0.0
    %684 = vmatpush1.msra.mxu0 0.0
    %685 = vmatprep.subr.mxu0 0.0
    %686 = vmatpush1.msra.mxu0 0.0
    %687 = vmatprep.subr.mxu0 0.0
    %688 = vmatpush1.msra.mxu0 0.0
    %689 = vmatprep.subr.mxu0 0.0
    %690 = vmatpush1.msra.mxu0 0.0
    %691 = vmatprep.subr.mxu0 0.0
    %692 = vmatpush1.msra.mxu0 0.0
    %693 = vmatprep.subr.mxu0 0.0
    %694 = vmatpush1.msra.mxu0 0.0
    %695 = vmatprep.subr.mxu0 0.0
    %696 = vmatpush1.msra.mxu0 0.0
    %697 = vmatprep.subr.mxu0 0.0
    %698 = vmatpush1.msra.mxu0 0.0
    %699 = vmatprep.subr.mxu0 0.0
    %700 = vmatpush1.msra.mxu0 0.0
    %701 = vmatprep.subr.mxu0 0.0
    %702 = vmatpush1.msra.mxu0 0.0
    %703 = vmatprep.subr.mxu0 0.0
    %704 = vmatpush1.msra.mxu0 0.0
    %705 = vmatprep.subr.mxu0 0.0
    %706 = vmatpush1.msra.mxu0 0.0
    %707 = vmatprep.subr.mxu0 0.0
    %708 = vmatpush1.msra.mxu0 0.0
    %709 = vmatprep.subr.mxu0 0.0
    %710 = vmatpush1.msra.mxu0 0.0
    %711 = vmatprep.subr.mxu0 0.0
    %712 = vmatpush1.msra.mxu0 0.0
    %713 = vmatprep.subr.mxu0 0.0
    %714 = vmatpush1.msra.mxu0 0.0
    %715 = vmatprep.subr.mxu0 0.0
    %716 = vmatpush1.msra.mxu0 0.0
    %717 = vmatprep.subr.mxu0 0.0
    %718 = vmatpush1.msra.mxu0 0.0
    %719 = vmatprep.subr.mxu0 0.0
    %720 = vmatpush1.msra.mxu0 0.0
    %721 = vmatprep.subr.mxu0 0.0
    %722 = vmatpush1.msra.mxu0 0.0
    %723 = vmatprep.subr.mxu0 0.0
    %724 = vmatpush1.msra.mxu0 0.0
    %725 = vmatprep.subr.mxu0 0.0
    %726 = vmatpush1.msra.mxu0 0.0
    %727 = vmatprep.subr.mxu0 0.0
    %728 = vmatpush1.msra.mxu0 0.0
    %729 = vmatprep.subr.mxu0 0.0
    %730 = vmatpush1.msra.mxu0 0.0
    %731 = vmatprep.subr.mxu0 0.0
    %732 = vmatpush1.msra.mxu0 0.0
    %733 = vmatprep.mubr.f32.mxu0 0.0
    %734 = vmatmul.mubr.f32.gmra.mrb[0].mxu0 %v664
    %v735 = vpop.f32.mrb[0].mxu0
    %v736 = vadd.f32 0.0, %v735
    %v737 = vpop.f32.mrb[0].mxu0
    %738 = vmatprep.mubr.f32.mxu0 0.0
    %739 = vmatmul.mubr.f32.gmra.mrb[0].mxu0 %v667
    %v740 = vpop.f32.mrb[0].mxu0
    %v741 = vadd.f32 0.0, %v740
    %v742 = vpop.f32.mrb[0].mxu0
    %743 = vdwg.mxu0
    %744 = vrot.lane.b32.xlu0 %v216, 64
    %v745 = vpop.permute.xlu0 %744
    %746 = vrot.lane.b32.xlu0 %v218, 64
    %v747 = vpop.permute.xlu0 %746
    %v751 = vsel %vm592, %v651, 0
    %v754 = vsel %vm592, %v652, 0
    %756 = vmatprep.subr.mxu0 0.0
    %757 = vmatpush1.msra.mxu0 %v745
    %758 = vmatprep.subr.mxu0 0.0
    %759 = vmatpush1.msra.mxu0 %v747
    %760 = vmatprep.subr.mxu0 0.0
    %761 = vmatpush1.msra.mxu0 0.0
    %762 = vmatprep.subr.mxu0 0.0
    %763 = vmatpush1.msra.mxu0 0.0
    %764 = vmatprep.subr.mxu0 0.0
    %765 = vmatpush1.msra.mxu0 0.0
    %766 = vmatprep.subr.mxu0 0.0
    %767 = vmatpush1.msra.mxu0 0.0
    %768 = vmatprep.subr.mxu0 0.0
    %769 = vmatpush1.msra.mxu0 0.0
    %770 = vmatprep.subr.mxu0 0.0
    %771 = vmatpush1.msra.mxu0 0.0
    %772 = vmatprep.subr.mxu0 0.0
    %773 = vmatpush1.msra.mxu0 0.0
    %774 = vmatprep.subr.mxu0 0.0
    %775 = vmatpush1.msra.mxu0 0.0
    %776 = vmatprep.subr.mxu0 0.0
    %777 = vmatpush1.msra.mxu0 0.0
    %778 = vmatprep.subr.mxu0 0.0
    %779 = vmatpush1.msra.mxu0 0.0
    %780 = vmatprep.subr.mxu0 0.0
    %781 = vmatpush1.msra.mxu0 0.0
    %782 = vmatprep.subr.mxu0 0.0
    %783 = vmatpush1.msra.mxu0 0.0
    %784 = vmatprep.subr.mxu0 0.0
    %785 = vmatpush1.msra.mxu0 0.0
    %786 = vmatprep.subr.mxu0 0.0
    %787 = vmatpush1.msra.mxu0 0.0
    %788 = vmatprep.subr.mxu0 0.0
    %789 = vmatpush1.msra.mxu0 0.0
    %790 = vmatprep.subr.mxu0 0.0
    %791 = vmatpush1.msra.mxu0 0.0
    %792 = vmatprep.subr.mxu0 0.0
    %793 = vmatpush1.msra.mxu0 0.0
    %794 = vmatprep.subr.mxu0 0.0
    %795 = vmatpush1.msra.mxu0 0.0
    %796 = vmatprep.subr.mxu0 0.0
    %797 = vmatpush1.msra.mxu0 0.0
    %798 = vmatprep.subr.mxu0 0.0
    %799 = vmatpush1.msra.mxu0 0.0
    %800 = vmatprep.subr.mxu0 0.0
    %801 = vmatpush1.msra.mxu0 0.0
    %802 = vmatprep.subr.mxu0 0.0
    %803 = vmatpush1.msra.mxu0 0.0
    %804 = vmatprep.subr.mxu0 0.0
    %805 = vmatpush1.msra.mxu0 0.0
    %806 = vmatprep.subr.mxu0 0.0
    %807 = vmatpush1.msra.mxu0 0.0
    %808 = vmatprep.subr.mxu0 0.0
    %809 = vmatpush1.msra.mxu0 0.0
    %810 = vmatprep.subr.mxu0 0.0
    %811 = vmatpush1.msra.mxu0 0.0
    %812 = vmatprep.subr.mxu0 0.0
    %813 = vmatpush1.msra.mxu0 0.0
    %814 = vmatprep.subr.mxu0 0.0
    %815 = vmatpush1.msra.mxu0 0.0
    %816 = vmatprep.subr.mxu0 0.0
    %817 = vmatpush1.msra.mxu0 0.0
    %818 = vmatprep.subr.mxu0 0.0
    %819 = vmatpush1.msra.mxu0 0.0
    %820 = vmatprep.mubr.f32.mxu0 0.0
    %821 = vmatmul.mubr.f32.gmra.mrb[0].mxu0 %v751
    %v822 = vpop.f32.mrb[0].mxu0
    %v823 = vadd.f32 0.0, %v822
    %v824 = vpop.f32.mrb[0].mxu0
    %825 = vmatprep.mubr.f32.mxu0 0.0
    %826 = vmatmul.mubr.f32.gmra.mrb[0].mxu0 %v754
    %v827 = vpop.f32.mrb[0].mxu0
    %v828 = vadd.f32 0.0, %v827
    %v829 = vpop.f32.mrb[0].mxu0
    %830 = vdwg.mxu0
    %831 = vrot.lane.b32.xlu0 %v220, 64
    %v832 = vpop.permute.xlu0 %831
    %833 = vrot.lane.b32.xlu0 %v222, 64
    %v834 = vpop.permute.xlu0 %833
    %v838 = vsel %vm592, %v653, 0
    %v841 = vsel %vm592, %v654, 0
    %843 = vmatprep.subr.mxu0 0.0
    %844 = vmatpush1.msra.mxu0 %v832
    %845 = vmatprep.subr.mxu0 0.0
    %846 = vmatpush1.msra.mxu0 %v834
    %847 = vmatprep.subr.mxu0 0.0
    %848 = vmatpush1.msra.mxu0 0.0
    %849 = vmatprep.subr.mxu0 0.0
    %850 = vmatpush1.msra.mxu0 0.0
    %851 = vmatprep.subr.mxu0 0.0
    %852 = vmatpush1.msra.mxu0 0.0
    %853 = vmatprep.subr.mxu0 0.0
    %854 = vmatpush1.msra.mxu0 0.0
    %855 = vmatprep.subr.mxu0 0.0
    %856 = vmatpush1.msra.mxu0 0.0
    %857 = vmatprep.subr.mxu0 0.0
    %858 = vmatpush1.msra.mxu0 0.0
    %859 = vmatprep.subr.mxu0 0.0
    %860 = vmatpush1.msra.mxu0 0.0
    %861 = vmatprep.subr.mxu0 0.0
    %862 = vmatpush1.msra.mxu0 0.0
    %863 = vmatprep.subr.mxu0 0.0
    %864 = vmatpush1.msra.mxu0 0.0
    %865 = vmatprep.subr.mxu0 0.0
    %866 = vmatpush1.msra.mxu0 0.0
    %867 = vmatprep.subr.mxu0 0.0
    %868 = vmatpush1.msra.mxu0 0.0
    %869 = vmatprep.subr.mxu0 0.0
    %870 = vmatpush1.msra.mxu0 0.0
    %871 = vmatprep.subr.mxu0 0.0
    %872 = vmatpush1.msra.mxu0 0.0
    %873 = vmatprep.subr.mxu0 0.0
    %874 = vmatpush1.msra.mxu0 0.0
    %875 = vmatprep.subr.mxu0 0.0
    %876 = vmatpush1.msra.mxu0 0.0
    %877 = vmatprep.subr.mxu0 0.0
    %878 = vmatpush1.msra.mxu0 0.0
    %879 = vmatprep.subr.mxu0 0.0
    %880 = vmatpush1.msra.mxu0 0.0
    %881 = vmatprep.subr.mxu0 0.0
    %882 = vmatpush1.msra.mxu0 0.0
    %883 = vmatprep.subr.mxu0 0.0
    %884 = vmatpush1.msra.mxu0 0.0
    %885 = vmatprep.subr.mxu0 0.0
    %886 = vmatpush1.msra.mxu0 0.0
    %887 = vmatprep.subr.mxu0 0.0
    %888 = vmatpush1.msra.mxu0 0.0
    %889 = vmatprep.subr.mxu0 0.0
    %890 = vmatpush1.msra.mxu0 0.0
    %891 = vmatprep.subr.mxu0 0.0
    %892 = vmatpush1.msra.mxu0 0.0
    %893 = vmatprep.subr.mxu0 0.0
    %894 = vmatpush1.msra.mxu0 0.0
    %895 = vmatprep.subr.mxu0 0.0
    %896 = vmatpush1.msra.mxu0 0.0
    %897 = vmatprep.subr.mxu0 0.0
    %898 = vmatpush1.msra.mxu0 0.0
    %899 = vmatprep.subr.mxu0 0.0
    %900 = vmatpush1.msra.mxu0 0.0
    %901 = vmatprep.subr.mxu0 0.0
    %902 = vmatpush1.msra.mxu0 0.0
    %903 = vmatprep.subr.mxu0 0.0
    %904 = vmatpush1.msra.mxu0 0.0
    %905 = vmatprep.subr.mxu0 0.0
    %906 = vmatpush1.msra.mxu0 0.0
    %907 = vmatprep.mubr.f32.mxu0 0.0
    %908 = vmatmul.mubr.f32.gmra.mrb[0].mxu0 %v838
    %v909 = vpop.f32.mrb[0].mxu0
    %v910 = vadd.f32 0.0, %v909
    %v911 = vpop.f32.mrb[0].mxu0
    %912 = vmatprep.mubr.f32.mxu0 0.0
    %913 = vmatmul.mubr.f32.gmra.mrb[0].mxu0 %v841
    %v914 = vpop.f32.mrb[0].mxu0
    %v915 = vadd.f32 0.0, %v914
    %v916 = vpop.f32.mrb[0].mxu0
    %917 = vdwg.mxu0
    %918 = vrot.lane.b32.xlu0 %v224, 64
    %v919 = vpop.permute.xlu0 %918
    %920 = vrot.lane.b32.xlu0 %v226, 64
    %v921 = vpop.permute.xlu0 %920
    %v925 = vsel %vm592, %v655, 0
    %v928 = vsel %vm592, %v656, 0
    %930 = vmatprep.subr.mxu0 0.0
    %931 = vmatpush1.msra.mxu0 %v919
    %932 = vmatprep.subr.mxu0 0.0
    %933 = vmatpush1.msra.mxu0 %v921
    %934 = vmatprep.subr.mxu0 0.0
    %935 = vmatpush1.msra.mxu0 0.0
    %936 = vmatprep.subr.mxu0 0.0
    %937 = vmatpush1.msra.mxu0 0.0
    %938 = vmatprep.subr.mxu0 0.0
    %939 = vmatpush1.msra.mxu0 0.0
    %940 = vmatprep.subr.mxu0 0.0
    %941 = vmatpush1.msra.mxu0 0.0
    %942 = vmatprep.subr.mxu0 0.0
    %943 = vmatpush1.msra.mxu0 0.0
    %944 = vmatprep.subr.mxu0 0.0
    %945 = vmatpush1.msra.mxu0 0.0
    %946 = vmatprep.subr.mxu0 0.0
    %947 = vmatpush1.msra.mxu0 0.0
    %948 = vmatprep.subr.mxu0 0.0
    %949 = vmatpush1.msra.mxu0 0.0
    %950 = vmatprep.subr.mxu0 0.0
    %951 = vmatpush1.msra.mxu0 0.0
    %952 = vmatprep.subr.mxu0 0.0
    %953 = vmatpush1.msra.mxu0 0.0
    %954 = vmatprep.subr.mxu0 0.0
    %955 = vmatpush1.msra.mxu0 0.0
    %956 = vmatprep.subr.mxu0 0.0
    %957 = vmatpush1.msra.mxu0 0.0
    %958 = vmatprep.subr.mxu0 0.0
    %959 = vmatpush1.msra.mxu0 0.0
    %960 = vmatprep.subr.mxu0 0.0
    %961 = vmatpush1.msra.mxu0 0.0
    %962 = vmatprep.subr.mxu0 0.0
    %963 = vmatpush1.msra.mxu0 0.0
    %964 = vmatprep.subr.mxu0 0.0
    %965 = vmatpush1.msra.mxu0 0.0
    %966 = vmatprep.subr.mxu0 0.0
    %967 = vmatpush1.msra.mxu0 0.0
    %968 = vmatprep.subr.mxu0 0.0
    %969 = vmatpush1.msra.mxu0 0.0
    %970 = vmatprep.subr.mxu0 0.0
    %971 = vmatpush1.msra.mxu0 0.0
    %972 = vmatprep.subr.mxu0 0.0
    %973 = vmatpush1.msra.mxu0 0.0
    %974 = vmatprep.subr.mxu0 0.0
    %975 = vmatpush1.msra.mxu0 0.0
    %976 = vmatprep.subr.mxu0 0.0
    %977 = vmatpush1.msra.mxu0 0.0
    %978 = vmatprep.subr.mxu0 0.0
    %979 = vmatpush1.msra.mxu0 0.0
    %980 = vmatprep.subr.mxu0 0.0
    %981 = vmatpush1.msra.mxu0 0.0
    %982 = vmatprep.subr.mxu0 0.0
    %983 = vmatpush1.msra.mxu0 0.0
    %984 = vmatprep.subr.mxu0 0.0
    %985 = vmatpush1.msra.mxu0 0.0
    %986 = vmatprep.subr.mxu0 0.0
    %987 = vmatpush1.msra.mxu0 0.0
    %988 = vmatprep.subr.mxu0 0.0
    %989 = vmatpush1.msra.mxu0 0.0
    %990 = vmatprep.subr.mxu0 0.0
    %991 = vmatpush1.msra.mxu0 0.0
    %992 = vmatprep.subr.mxu0 0.0
    %993 = vmatpush1.msra.mxu0 0.0
    %994 = vmatprep.mubr.f32.mxu0 0.0
    %995 = vmatmul.mubr.f32.gmra.mrb[0].mxu0 %v925
    %v996 = vpop.f32.mrb[0].mxu0
    %v997 = vadd.f32 0.0, %v996
    %v998 = vpop.f32.mrb[0].mxu0
    %999 = vmatprep.mubr.f32.mxu0 0.0
    %1000 = vmatmul.mubr.f32.gmra.mrb[0].mxu0 %v928
    %v1001 = vpop.f32.mrb[0].mxu0
    %v1002 = vadd.f32 0.0, %v1001
    %v1003 = vpop.f32.mrb[0].mxu0
    %1004 = vdwg.mxu0
    %v1005 = vld [vmem:[%s4] sm:$0xff]
    %v1006 = vld [vmem:[%s4 + $0x8] sm:$0xff]
    %v1007 = vld [vmem:[%s4 + $0x10] sm:$0xff]
    %v1008 = vld [vmem:[%s4 + $0x18] sm:$0xff]
    %v1010 = vsel %vm231, %v736, 0
    %v1013 = vsel %vm231, %v741, 0
    %1015 = vmatprep.subr.mxu0 0.0
    %1016 = vmatpush1.msra.mxu0 %v1005
    %1017 = vmatprep.subr.mxu0 0.0
    %1018 = vmatpush1.msra.mxu0 0.0
    %1019 = vmatprep.subr.mxu0 0.0
    %1020 = vmatpush1.msra.mxu0 0.0
    %1021 = vmatprep.subr.mxu0 0.0
    %1022 = vmatpush1.msra.mxu0 0.0
    %1023 = vmatprep.subr.mxu0 0.0
    %1024 = vmatpush1.msra.mxu0 0.0
    %1025 = vmatprep.subr.mxu0 0.0
    %1026 = vmatpush1.msra.mxu0 0.0
    %1027 = vmatprep.subr.mxu0 0.0
    %1028 = vmatpush1.msra.mxu0 0.0
    %1029 = vmatprep.subr.mxu0 0.0
    %1030 = vmatpush1.msra.mxu0 0.0
    %1031 = vmatprep.subr.mxu0 0.0
    %1032 = vmatpush1.msra.mxu0 0.0
    %1033 = vmatprep.subr.mxu0 0.0
    %1034 = vmatpush1.msra.mxu0 0.0
    %1035 = vmatprep.subr.mxu0 0.0
    %1036 = vmatpush1.msra.mxu0 0.0
    %1037 = vmatprep.subr.mxu0 0.0
    %1038 = vmatpush1.msra.mxu0 0.0
    %1039 = vmatprep.subr.mxu0 0.0
    %1040 = vmatpush1.msra.mxu0 0.0
    %1041 = vmatprep.subr.mxu0 0.0
    %1042 = vmatpush1.msra.mxu0 0.0
    %1043 = vmatprep.subr.mxu0 0.0
    %1044 = vmatpush1.msra.mxu0 0.0
    %1045 = vmatprep.subr.mxu0 0.0
    %1046 = vmatpush1.msra.mxu0 0.0
    %1047 = vmatprep.subr.mxu0 0.0
    %1048 = vmatpush1.msra.mxu0 0.0
    %1049 = vmatprep.subr.mxu0 0.0
    %1050 = vmatpush1.msra.mxu0 0.0
    %1051 = vmatprep.subr.mxu0 0.0
    %1052 = vmatpush1.msra.mxu0 0.0
    %1053 = vmatprep.subr.mxu0 0.0
    %1054 = vmatpush1.msra.mxu0 0.0
    %1055 = vmatprep.subr.mxu0 0.0
    %1056 = vmatpush1.msra.mxu0 0.0
    %1057 = vmatprep.subr.mxu0 0.0
    %1058 = vmatpush1.msra.mxu0 0.0
    %1059 = vmatprep.subr.mxu0 0.0
    %1060 = vmatpush1.msra.mxu0 0.0
    %1061 = vmatprep.subr.mxu0 0.0
    %1062 = vmatpush1.msra.mxu0 0.0
    %1063 = vmatprep.subr.mxu0 0.0
    %1064 = vmatpush1.msra.mxu0 0.0
    %1065 = vmatprep.subr.mxu0 0.0
    %1066 = vmatpush1.msra.mxu0 0.0
    %1067 = vmatprep.subr.mxu0 0.0
    %1068 = vmatpush1.msra.mxu0 0.0
    %1069 = vmatprep.subr.mxu0 0.0
    %1070 = vmatpush1.msra.mxu0 0.0
    %1071 = vmatprep.subr.mxu0 0.0
    %1072 = vmatpush1.msra.mxu0 0.0
    %1073 = vmatprep.subr.mxu0 0.0
    %1074 = vmatpush1.msra.mxu0 0.0
    %1075 = vmatprep.subr.mxu0 0.0
    %1076 = vmatpush1.msra.mxu0 0.0
    %1077 = vmatprep.subr.mxu0 0.0
    %1078 = vmatpush1.msra.mxu0 0.0
    %1079 = vmatprep.mubr.f32.mxu0 0.0
    %1080 = vmatmul.mubr.f32.gmra.mrb[0].mxu0 %v1010
    %v1081 = vpop.f32.mrb[0].mxu0
    %v1082 = vadd.f32 0.0, %v1081
    %v1083 = vpop.f32.mrb[0].mxu0
    %1084 = vmatprep.mubr.f32.mxu0 0.0
    %1085 = vmatmul.mubr.f32.gmra.mrb[0].mxu0 %v1013
    %v1086 = vpop.f32.mrb[0].mxu0
    %v1087 = vadd.f32 0.0, %v1086
    %v1088 = vpop.f32.mrb[0].mxu0
    %1089 = vdwg.mxu0
    %v1091 = vsel %vm231, %v823, 0
    %v1094 = vsel %vm231, %v828, 0
    %1096 = vmatprep.subr.mxu0 0.0
    %1097 = vmatpush1.msra.mxu0 %v1006
    %1098 = vmatprep.subr.mxu0 0.0
    %1099 = vmatpush1.msra.mxu0 0.0
    %1100 = vmatprep.subr.mxu0 0.0
    %1101 = vmatpush1.msra.mxu0 0.0
    %1102 = vmatprep.subr.mxu0 0.0
    %1103 = vmatpush1.msra.mxu0 0.0
    %1104 = vmatprep.subr.mxu0 0.0
    %1105 = vmatpush1.msra.mxu0 0.0
    %1106 = vmatprep.subr.mxu0 0.0
    %1107 = vmatpush1.msra.mxu0 0.0
    %1108 = vmatprep.subr.mxu0 0.0
    %1109 = vmatpush1.msra.mxu0 0.0
    %1110 = vmatprep.subr.mxu0 0.0
    %1111 = vmatpush1.msra.mxu0 0.0
    %1112 = vmatprep.subr.mxu0 0.0
    %1113 = vmatpush1.msra.mxu0 0.0
    %1114 = vmatprep.subr.mxu0 0.0
    %1115 = vmatpush1.msra.mxu0 0.0
    %1116 = vmatprep.subr.mxu0 0.0
    %1117 = vmatpush1.msra.mxu0 0.0
    %1118 = vmatprep.subr.mxu0 0.0
    %1119 = vmatpush1.msra.mxu0 0.0
    %1120 = vmatprep.subr.mxu0 0.0
    %1121 = vmatpush1.msra.mxu0 0.0
    %1122 = vmatprep.subr.mxu0 0.0
    %1123 = vmatpush1.msra.mxu0 0.0
    %1124 = vmatprep.subr.mxu0 0.0
    %1125 = vmatpush1.msra.mxu0 0.0
    %1126 = vmatprep.subr.mxu0 0.0
    %1127 = vmatpush1.msra.mxu0 0.0
    %1128 = vmatprep.subr.mxu0 0.0
    %1129 = vmatpush1.msra.mxu0 0.0
    %1130 = vmatprep.subr.mxu0 0.0
    %1131 = vmatpush1.msra.mxu0 0.0
    %1132 = vmatprep.subr.mxu0 0.0
    %1133 = vmatpush1.msra.mxu0 0.0
    %1134 = vmatprep.subr.mxu0 0.0
    %1135 = vmatpush1.msra.mxu0 0.0
    %1136 = vmatprep.subr.mxu0 0.0
    %1137 = vmatpush1.msra.mxu0 0.0
    %1138 = vmatprep.subr.mxu0 0.0
    %1139 = vmatpush1.msra.mxu0 0.0
    %1140 = vmatprep.subr.mxu0 0.0
    %1141 = vmatpush1.msra.mxu0 0.0
    %1142 = vmatprep.subr.mxu0 0.0
    %1143 = vmatpush1.msra.mxu0 0.0
    %1144 = vmatprep.subr.mxu0 0.0
    %1145 = vmatpush1.msra.mxu0 0.0
    %1146 = vmatprep.subr.mxu0 0.0
    %1147 = vmatpush1.msra.mxu0 0.0
    %1148 = vmatprep.subr.mxu0 0.0
    %1149 = vmatpush1.msra.mxu0 0.0
    %1150 = vmatprep.subr.mxu0 0.0
    %1151 = vmatpush1.msra.mxu0 0.0
    %1152 = vmatprep.subr.mxu0 0.0
    %1153 = vmatpush1.msra.mxu0 0.0
    %1154 = vmatprep.subr.mxu0 0.0
    %1155 = vmatpush1.msra.mxu0 0.0
    %1156 = vmatprep.subr.mxu0 0.0
    %1157 = vmatpush1.msra.mxu0 0.0
    %1158 = vmatprep.subr.mxu0 0.0
    %1159 = vmatpush1.msra.mxu0 0.0
    %1160 = vmatprep.mubr.f32.mxu0 0.0
    %1161 = vmatmul.mubr.f32.gmra.mrb[0].mxu0 %v1091
    %v1162 = vpop.f32.mrb[0].mxu0
    %v1163 = vadd.f32 0.0, %v1162
    %v1164 = vpop.f32.mrb[0].mxu0
    %1165 = vmatprep.mubr.f32.mxu0 0.0
    %1166 = vmatmul.mubr.f32.gmra.mrb[0].mxu0 %v1094
    %v1167 = vpop.f32.mrb[0].mxu0
    %v1168 = vadd.f32 0.0, %v1167
    %v1169 = vpop.f32.mrb[0].mxu0
    %1170 = vdwg.mxu0
    %v1172 = vsel %vm231, %v910, 0
    %v1175 = vsel %vm231, %v915, 0
    %1177 = vmatprep.subr.mxu0 0.0
    %1178 = vmatpush1.msra.mxu0 %v1007
    %1179 = vmatprep.subr.mxu0 0.0
    %1180 = vmatpush1.msra.mxu0 0.0
    %1181 = vmatprep.subr.mxu0 0.0
    %1182 = vmatpush1.msra.mxu0 0.0
    %1183 = vmatprep.subr.mxu0 0.0
    %1184 = vmatpush1.msra.mxu0 0.0
    %1185 = vmatprep.subr.mxu0 0.0
    %1186 = vmatpush1.msra.mxu0 0.0
    %1187 = vmatprep.subr.mxu0 0.0
    %1188 = vmatpush1.msra.mxu0 0.0
    %1189 = vmatprep.subr.mxu0 0.0
    %1190 = vmatpush1.msra.mxu0 0.0
    %1191 = vmatprep.subr.mxu0 0.0
    %1192 = vmatpush1.msra.mxu0 0.0
    %1193 = vmatprep.subr.mxu0 0.0
    %1194 = vmatpush1.msra.mxu0 0.0
    %1195 = vmatprep.subr.mxu0 0.0
    %1196 = vmatpush1.msra.mxu0 0.0
    %1197 = vmatprep.subr.mxu0 0.0
    %1198 = vmatpush1.msra.mxu0 0.0
    %1199 = vmatprep.subr.mxu0 0.0
    %1200 = vmatpush1.msra.mxu0 0.0
    %1201 = vmatprep.subr.mxu0 0.0
    %1202 = vmatpush1.msra.mxu0 0.0
    %1203 = vmatprep.subr.mxu0 0.0
    %1204 = vmatpush1.msra.mxu0 0.0
    %1205 = vmatprep.subr.mxu0 0.0
    %1206 = vmatpush1.msra.mxu0 0.0
    %1207 = vmatprep.subr.mxu0 0.0
    %1208 = vmatpush1.msra.mxu0 0.0
    %1209 = vmatprep.subr.mxu0 0.0
    %1210 = vmatpush1.msra.mxu0 0.0
    %1211 = vmatprep.subr.mxu0 0.0
    %1212 = vmatpush1.msra.mxu0 0.0
    %1213 = vmatprep.subr.mxu0 0.0
    %1214 = vmatpush1.msra.mxu0 0.0
    %1215 = vmatprep.subr.mxu0 0.0
    %1216 = vmatpush1.msra.mxu0 0.0
    %1217 = vmatprep.subr.mxu0 0.0
    %1218 = vmatpush1.msra.mxu0 0.0
    %1219 = vmatprep.subr.mxu0 0.0
    %1220 = vmatpush1.msra.mxu0 0.0
    %1221 = vmatprep.subr.mxu0 0.0
    %1222 = vmatpush1.msra.mxu0 0.0
    %1223 = vmatprep.subr.mxu0 0.0
    %1224 = vmatpush1.msra.mxu0 0.0
    %1225 = vmatprep.subr.mxu0 0.0
    %1226 = vmatpush1.msra.mxu0 0.0
    %1227 = vmatprep.subr.mxu0 0.0
    %1228 = vmatpush1.msra.mxu0 0.0
    %1229 = vmatprep.subr.mxu0 0.0
    %1230 = vmatpush1.msra.mxu0 0.0
    %1231 = vmatprep.subr.mxu0 0.0
    %1232 = vmatpush1.msra.mxu0 0.0
    %1233 = vmatprep.subr.mxu0 0.0
    %1234 = vmatpush1.msra.mxu0 0.0
    %1235 = vmatprep.subr.mxu0 0.0
    %1236 = vmatpush1.msra.mxu0 0.0
    %1237 = vmatprep.subr.mxu0 0.0
    %1238 = vmatpush1.msra.mxu0 0.0
    %1239 = vmatprep.subr.mxu0 0.0
    %1240 = vmatpush1.msra.mxu0 0.0
    %1241 = vmatprep.mubr.f32.mxu0 0.0
    %1242 = vmatmul.mubr.f32.gmra.mrb[0].mxu0 %v1172
    %v1243 = vpop.f32.mrb[0].mxu0
    %v1244 = vadd.f32 0.0, %v1243
    %v1245 = vpop.f32.mrb[0].mxu0
    %1246 = vmatprep.mubr.f32.mxu0 0.0
    %1247 = vmatmul.mubr.f32.gmra.mrb[0].mxu0 %v1175
    %v1248 = vpop.f32.mrb[0].mxu0
    %v1249 = vadd.f32 0.0, %v1248
    %v1250 = vpop.f32.mrb[0].mxu0
    %1251 = vdwg.mxu0
    %v1253 = vsel %vm231, %v997, 0
    %v1256 = vsel %vm231, %v1002, 0
    %1258 = vmatprep.subr.mxu0 0.0
    %1259 = vmatpush1.msra.mxu0 %v1008
    %1260 = vmatprep.subr.mxu0 0.0
    %1261 = vmatpush1.msra.mxu0 0.0
    %1262 = vmatprep.subr.mxu0 0.0
    %1263 = vmatpush1.msra.mxu0 0.0
    %1264 = vmatprep.subr.mxu0 0.0
    %1265 = vmatpush1.msra.mxu0 0.0
    %1266 = vmatprep.subr.mxu0 0.0
    %1267 = vmatpush1.msra.mxu0 0.0
    %1268 = vmatprep.subr.mxu0 0.0
    %1269 = vmatpush1.msra.mxu0 0.0
    %1270 = vmatprep.subr.mxu0 0.0
    %1271 = vmatpush1.msra.mxu0 0.0
    %1272 = vmatprep.subr.mxu0 0.0
    %1273 = vmatpush1.msra.mxu0 0.0
    %1274 = vmatprep.subr.mxu0 0.0
    %1275 = vmatpush1.msra.mxu0 0.0
    %1276 = vmatprep.subr.mxu0 0.0
    %1277 = vmatpush1.msra.mxu0 0.0
    %1278 = vmatprep.subr.mxu0 0.0
    %1279 = vmatpush1.msra.mxu0 0.0
    %1280 = vmatprep.subr.mxu0 0.0
    %1281 = vmatpush1.msra.mxu0 0.0
    %1282 = vmatprep.subr.mxu0 0.0
    %1283 = vmatpush1.msra.mxu0 0.0
    %1284 = vmatprep.subr.mxu0 0.0
    %1285 = vmatpush1.msra.mxu0 0.0
    %1286 = vmatprep.subr.mxu0 0.0
    %1287 = vmatpush1.msra.mxu0 0.0
    %1288 = vmatprep.subr.mxu0 0.0
    %1289 = vmatpush1.msra.mxu0 0.0
    %1290 = vmatprep.subr.mxu0 0.0
    %1291 = vmatpush1.msra.mxu0 0.0
    %1292 = vmatprep.subr.mxu0 0.0
    %1293 = vmatpush1.msra.mxu0 0.0
    %1294 = vmatprep.subr.mxu0 0.0
    %1295 = vmatpush1.msra.mxu0 0.0
    %1296 = vmatprep.subr.mxu0 0.0
    %1297 = vmatpush1.msra.mxu0 0.0
    %1298 = vmatprep.subr.mxu0 0.0
    %1299 = vmatpush1.msra.mxu0 0.0
    %1300 = vmatprep.subr.mxu0 0.0
    %1301 = vmatpush1.msra.mxu0 0.0
    %1302 = vmatprep.subr.mxu0 0.0
    %1303 = vmatpush1.msra.mxu0 0.0
    %1304 = vmatprep.subr.mxu0 0.0
    %1305 = vmatpush1.msra.mxu0 0.0
    %1306 = vmatprep.subr.mxu0 0.0
    %1307 = vmatpush1.msra.mxu0 0.0
    %1308 = vmatprep.subr.mxu0 0.0
    %1309 = vmatpush1.msra.mxu0 0.0
    %1310 = vmatprep.subr.mxu0 0.0
    %1311 = vmatpush1.msra.mxu0 0.0
    %1312 = vmatprep.subr.mxu0 0.0
    %1313 = vmatpush1.msra.mxu0 0.0
    %1314 = vmatprep.subr.mxu0 0.0
    %1315 = vmatpush1.msra.mxu0 0.0
    %1316 = vmatprep.subr.mxu0 0.0
    %1317 = vmatpush1.msra.mxu0 0.0
    %1318 = vmatprep.subr.mxu0 0.0
    %1319 = vmatpush1.msra.mxu0 0.0
    %1320 = vmatprep.subr.mxu0 0.0
    %1321 = vmatpush1.msra.mxu0 0.0
    %1322 = vmatprep.mubr.f32.mxu0 0.0
    %1323 = vmatmul.mubr.f32.gmra.mrb[0].mxu0 %v1253
    %v1324 = vpop.f32.mrb[0].mxu0
    %v1325 = vadd.f32 0.0, %v1324
    %v1326 = vpop.f32.mrb[0].mxu0
    %1327 = vmatprep.mubr.f32.mxu0 0.0
    %1328 = vmatmul.mubr.f32.gmra.mrb[0].mxu0 %v1256
    %v1329 = vpop.f32.mrb[0].mxu0
    %v1330 = vadd.f32 0.0, %v1329
    %v1331 = vpop.f32.mrb[0].mxu0
    %1332 = vdwg.mxu0
    %v1333 = vadd.f32 %v1082, %v1163
    %v1334 = vadd.f32 %v1087, %v1168
    %v1335 = vadd.f32 %v1333, %v1244
    %v1336 = vadd.f32 %v1334, %v1249
    %v1337 = vadd.f32 %v1335, %v1325
    %v1338 = vadd.f32 %v1336, %v1330
    %v1339 = vld [vmem:[%s5] sm:$0x1]
    %v1341 = vlaneseq
    %v1342 = vshrl.u32 %v1341, 7
    %v1343 = vsub.s32 0, %v1342
    %v1344 = vrot.slane %v1339, %v1343
    %v1346 = vadd.f32 %v1337, %v1344
    %v1347 = vadd.f32 %v1338, %v1344
    %v1348 = vadd.f32 %v1346, %v48
    %v1349 = vadd.f32 %v1347, %v49
    %v1350 = vld [vmem:[%s6] sm:$0x1]
    %v1351 = vld [vmem:[%s7] sm:$0x1]
    %v1352 = vsel %vm131, %v1348, 0.0
    %1353 = vadd.xlane.f32.xlu0 %v1352
    %v1354 = vpop.xlane.xlu0 %1353
    %v1355 = vsel %vm131, %v1349, 0.0
    %1356 = vadd.xlane.f32.xlu0 %v1355
    %v1357 = vpop.xlane.xlu0 %1356
    %v1358 = vrcp.pop 32.0
    %v1359 = vmul.f32 %v1354, %v1358
    %v1360 = vmul.f32 %v1357, %v1358
    %v1361 = vsub.f32 %v1348, %v1359
    %v1362 = vsub.f32 %v1349, %v1360
    %v1363 = vmul.f32 %v1361, %v1361
    %v1364 = vmul.f32 %v1362, %v1362
    %v1365 = vsel %vm131, %v1363, 0.0
    %1366 = vadd.xlane.f32.xlu0 %v1365
    %v1367 = vpop.xlane.xlu0 %1366
    %v1368 = vsel %vm131, %v1364, 0.0
    %1369 = vadd.xlane.f32.xlu0 %v1368
    %v1370 = vpop.xlane.xlu0 %1369
    %v1371 = vmul.f32 %v1367, %v1358
    %v1372 = vmul.f32 %v1370, %v1358
    %v1373 = vadd.f32 %v1371, 1e-12
    %v1374 = vadd.f32 %v1372, 1e-12
    %v1375 = vrsqrt.pop %v1373
    %v1376 = vrsqrt.pop %v1374
    %v1377 = vmul.f32 %v1361, %v1375
    %v1378 = vmul.f32 %v1362, %v1376
    %v1380 = vlaneseq
    %v1381 = vshrl.u32 %v1380, 7
    %v1382 = vsub.s32 0, %v1381
    %v1383 = vrot.slane %v1350, %v1382
    %v1385 = vmul.f32 %v1377, %v1383
    %v1386 = vmul.f32 %v1378, %v1383
    %v1388 = vlaneseq
    %v1389 = vshrl.u32 %v1388, 7
    %v1390 = vsub.s32 0, %v1389
    %v1391 = vrot.slane %v1351, %v1390
    %v1393 = vadd.f32 %v1385, %v1391
    %v1394 = vadd.f32 %v1386, %v1391
    %v1395 = vld [vmem:[%s8] sm:$0xff]
    %v1396 = vld [vmem:[%s8 + $0x8] sm:$0xff]
    %v1397 = vld [vmem:[%s8 + $0x10] sm:$0xff]
    %v1398 = vld [vmem:[%s8 + $0x18] sm:$0xff]
    %v1399 = vld [vmem:[%s9] sm:$0x1]
    %v1401 = vlaneseq
    %v1402 = vshrl.u32 %v1401, 7
    %v1403 = vsub.s32 0, %v1402
    %v1404 = vrot.slane %v1399, %v1403
    %v1407 = vsel %vm131, %v1393, 0
    %v1410 = vsel %vm131, %v1394, 0
    %1412 = vmatprep.subr.mxu0 0.0
    %1413 = vmatpush1.msra.mxu0 %v1395
    %1414 = vmatprep.subr.mxu0 0.0
    %1415 = vmatpush1.msra.mxu0 %v1396
    %1416 = vmatprep.subr.mxu0 0.0
    %1417 = vmatpush1.msra.mxu0 %v1397
    %1418 = vmatprep.subr.mxu0 0.0
    %1419 = vmatpush1.msra.mxu0 %v1398
    %1420 = vmatprep.subr.mxu0 0.0
    %1421 = vmatpush1.msra.mxu0 0.0
    %1422 = vmatprep.subr.mxu0 0.0
    %1423 = vmatpush1.msra.mxu0 0.0
    %1424 = vmatprep.subr.mxu0 0.0
    %1425 = vmatpush1.msra.mxu0 0.0
    %1426 = vmatprep.subr.mxu0 0.0
    %1427 = vmatpush1.msra.mxu0 0.0
    %1428 = vmatprep.subr.mxu0 0.0
    %1429 = vmatpush1.msra.mxu0 0.0
    %1430 = vmatprep.subr.mxu0 0.0
    %1431 = vmatpush1.msra.mxu0 0.0
    %1432 = vmatprep.subr.mxu0 0.0
    %1433 = vmatpush1.msra.mxu0 0.0
    %1434 = vmatprep.subr.mxu0 0.0
    %1435 = vmatpush1.msra.mxu0 0.0
    %1436 = vmatprep.subr.mxu0 0.0
    %1437 = vmatpush1.msra.mxu0 0.0
    %1438 = vmatprep.subr.mxu0 0.0
    %1439 = vmatpush1.msra.mxu0 0.0
    %1440 = vmatprep.subr.mxu0 0.0
    %1441 = vmatpush1.msra.mxu0 0.0
    %1442 = vmatprep.subr.mxu0 0.0
    %1443 = vmatpush1.msra.mxu0 0.0
    %1444 = vmatprep.subr.mxu0 0.0
    %1445 = vmatpush1.msra.mxu0 0.0
    %1446 = vmatprep.subr.mxu0 0.0
    %1447 = vmatpush1.msra.mxu0 0.0
    %1448 = vmatprep.subr.mxu0 0.0
    %1449 = vmatpush1.msra.mxu0 0.0
    %1450 = vmatprep.subr.mxu0 0.0
    %1451 = vmatpush1.msra.mxu0 0.0
    %1452 = vmatprep.subr.mxu0 0.0
    %1453 = vmatpush1.msra.mxu0 0.0
    %1454 = vmatprep.subr.mxu0 0.0
    %1455 = vmatpush1.msra.mxu0 0.0
    %1456 = vmatprep.subr.mxu0 0.0
    %1457 = vmatpush1.msra.mxu0 0.0
    %1458 = vmatprep.subr.mxu0 0.0
    %1459 = vmatpush1.msra.mxu0 0.0
    %1460 = vmatprep.subr.mxu0 0.0
    %1461 = vmatpush1.msra.mxu0 0.0
    %1462 = vmatprep.subr.mxu0 0.0
    %1463 = vmatpush1.msra.mxu0 0.0
    %1464 = vmatprep.subr.mxu0 0.0
    %1465 = vmatpush1.msra.mxu0 0.0
    %1466 = vmatprep.subr.mxu0 0.0
    %1467 = vmatpush1.msra.mxu0 0.0
    %1468 = vmatprep.subr.mxu0 0.0
    %1469 = vmatpush1.msra.mxu0 0.0
    %1470 = vmatprep.subr.mxu0 0.0
    %1471 = vmatpush1.msra.mxu0 0.0
    %1472 = vmatprep.subr.mxu0 0.0
    %1473 = vmatpush1.msra.mxu0 0.0
    %1474 = vmatprep.subr.mxu0 0.0
    %1475 = vmatpush1.msra.mxu0 0.0
    %1476 = vmatprep.mubr.f32.mxu0 0.0
    %1477 = vmatmul.mubr.f32.gmra.mrb[0].mxu0 %v1407
    %v1478 = vpop.f32.mrb[0].mxu0
    %v1479 = vadd.f32 %v1404, %v1478
    %v1480 = vpop.f32.mrb[0].mxu0
    %1481 = vmatprep.mubr.f32.mxu0 0.0
    %1482 = vmatmul.mubr.f32.gmra.mrb[0].mxu0 %v1410
    %v1483 = vpop.f32.mrb[0].mxu0
    %v1484 = vadd.f32 %v1404, %v1483
    %v1485 = vpop.f32.mrb[0].mxu0
    %1486 = vdwg.mxu0
    %v1487 = vmul.f32 %v1479, 0.5
    %v1488 = vmul.f32 %v1484, 0.5
    %v1489 = vrcp.pop 1.4142135
    %v1490 = vmul.f32 %v1479, %v1489
    %v1491 = vmul.f32 %v1484, %v1489
    %v1492 = verf.f32.pop %v1490
    %v1493 = verf.f32.pop %v1491
    %v1494 = vadd.f32 %v1492, 1.0
    %v1495 = vadd.f32 %v1493, 1.0
    %v1496 = vmul.f32 %v1487, %v1494
    %v1497 = vmul.f32 %v1488, %v1495
    %v1498 = vld [vmem:[%s10] sm:$0xff]
    %v1499 = vld [vmem:[%s10 + $0x8] sm:$0xff]
    %v1500 = vld [vmem:[%s10 + $0x10] sm:$0xff]
    %v1501 = vld [vmem:[%s10 + $0x18] sm:$0xff]
    %v1502 = vld [vmem:[%s10 + $0x20] sm:$0xff]
    %v1503 = vld [vmem:[%s10 + $0x28] sm:$0xff]
    %v1504 = vld [vmem:[%s10 + $0x30] sm:$0xff]
    %v1505 = vld [vmem:[%s10 + $0x38] sm:$0xff]
    %v1506 = vld [vmem:[%s10 + $0x40] sm:$0xff]
    %v1507 = vld [vmem:[%s10 + $0x48] sm:$0xff]
    %v1508 = vld [vmem:[%s10 + $0x50] sm:$0xff]
    %v1509 = vld [vmem:[%s10 + $0x58] sm:$0xff]
    %v1510 = vld [vmem:[%s10 + $0x60] sm:$0xff]
    %v1511 = vld [vmem:[%s10 + $0x68] sm:$0xff]
    %v1512 = vld [vmem:[%s10 + $0x70] sm:$0xff]
    %v1513 = vld [vmem:[%s10 + $0x78] sm:$0xff]
    %v1514 = vld [vmem:[%s11] sm:$0x1]
    %v1516 = vlaneseq
    %v1517 = vshrl.u32 %v1516, 7
    %v1518 = vsub.s32 0, %v1517
    %v1519 = vrot.slane %v1514, %v1518
    %1521 = vmatprep.subr.mxu0 0.0
    %1522 = vmatpush1.msra.mxu0 %v1498
    %1523 = vmatprep.subr.mxu0 0.0
    %1524 = vmatpush1.msra.mxu0 %v1499
    %1525 = vmatprep.subr.mxu0 0.0
    %1526 = vmatpush1.msra.mxu0 %v1500
    %1527 = vmatprep.subr.mxu0 0.0
    %1528 = vmatpush1.msra.mxu0 %v1501
    %1529 = vmatprep.subr.mxu0 0.0
    %1530 = vmatpush1.msra.mxu0 %v1502
    %1531 = vmatprep.subr.mxu0 0.0
    %1532 = vmatpush1.msra.mxu0 %v1503
    %1533 = vmatprep.subr.mxu0 0.0
    %1534 = vmatpush1.msra.mxu0 %v1504
    %1535 = vmatprep.subr.mxu0 0.0
    %1536 = vmatpush1.msra.mxu0 %v1505
    %1537 = vmatprep.subr.mxu0 0.0
    %1538 = vmatpush1.msra.mxu0 %v1506
    %1539 = vmatprep.subr.mxu0 0.0
    %1540 = vmatpush1.msra.mxu0 %v1507
    %1541 = vmatprep.subr.mxu0 0.0
    %1542 = vmatpush1.msra.mxu0 %v1508
    %1543 = vmatprep.subr.mxu0 0.0
    %1544 = vmatpush1.msra.mxu0 %v1509
    %1545 = vmatprep.subr.mxu0 0.0
    %1546 = vmatpush1.msra.mxu0 %v1510
    %1547 = vmatprep.subr.mxu0 0.0
    %1548 = vmatpush1.msra.mxu0 %v1511
    %1549 = vmatprep.subr.mxu0 0.0
    %1550 = vmatpush1.msra.mxu0 %v1512
    %1551 = vmatprep.subr.mxu0 0.0
    %1552 = vmatpush1.msra.mxu0 %v1513
    %1553 = vmatprep.subr.mxu0 0.0
    %1554 = vmatpush1.msra.mxu0 0.0
    %1555 = vmatprep.subr.mxu0 0.0
    %1556 = vmatpush1.msra.mxu0 0.0
    %1557 = vmatprep.subr.mxu0 0.0
    %1558 = vmatpush1.msra.mxu0 0.0
    %1559 = vmatprep.subr.mxu0 0.0
    %1560 = vmatpush1.msra.mxu0 0.0
    %1561 = vmatprep.subr.mxu0 0.0
    %1562 = vmatpush1.msra.mxu0 0.0
    %1563 = vmatprep.subr.mxu0 0.0
    %1564 = vmatpush1.msra.mxu0 0.0
    %1565 = vmatprep.subr.mxu0 0.0
    %1566 = vmatpush1.msra.mxu0 0.0
    %1567 = vmatprep.subr.mxu0 0.0
    %1568 = vmatpush1.msra.mxu0 0.0
    %1569 = vmatprep.subr.mxu0 0.0
    %1570 = vmatpush1.msra.mxu0 0.0
    %1571 = vmatprep.subr.mxu0 0.0
    %1572 = vmatpush1.msra.mxu0 0.0
    %1573 = vmatprep.subr.mxu0 0.0
    %1574 = vmatpush1.msra.mxu0 0.0
    %1575 = vmatprep.subr.mxu0 0.0
    %1576 = vmatpush1.msra.mxu0 0.0
    %1577 = vmatprep.subr.mxu0 0.0
    %1578 = vmatpush1.msra.mxu0 0.0
    %1579 = vmatprep.subr.mxu0 0.0
    %1580 = vmatpush1.msra.mxu0 0.0
    %1581 = vmatprep.subr.mxu0 0.0
    %1582 = vmatpush1.msra.mxu0 0.0
    %1583 = vmatprep.subr.mxu0 0.0
    %1584 = vmatpush1.msra.mxu0 0.0
    %1585 = vmatprep.mubr.f32.mxu0 0.0
    %1586 = vmatmul.mubr.f32.gmra.mrb[0].mxu0 %v1496
    %v1587 = vpop.f32.mrb[0].mxu0
    %v1588 = vadd.f32 %v1519, %v1587
    %v1589 = vpop.f32.mrb[0].mxu0
    %1590 = vmatprep.mubr.f32.mxu0 0.0
    %1591 = vmatmul.mubr.f32.gmra.mrb[0].mxu0 %v1497
    %v1592 = vpop.f32.mrb[0].mxu0
    %v1593 = vadd.f32 %v1519, %v1592
    %v1594 = vpop.f32.mrb[0].mxu0
    %1595 = vdwg.mxu0
    %v1596 = vadd.f32 %v1588, %v1393
    %v1597 = vadd.f32 %v1593, %v1394
    %v1598 = vld [vmem:[%s12] sm:$0x1]
    %v1599 = vld [vmem:[%s13] sm:$0x1]
    %v1600 = vsel %vm131, %v1596, 0.0
    %1601 = vadd.xlane.f32.xlu0 %v1600
    %v1602 = vpop.xlane.xlu0 %1601
    %v1603 = vsel %vm131, %v1597, 0.0
    %1604 = vadd.xlane.f32.xlu0 %v1603
    %v1605 = vpop.xlane.xlu0 %1604
    %v1606 = vmul.f32 %v1602, %v1358
    %v1607 = vmul.f32 %v1605, %v1358
    %v1608 = vsub.f32 %v1596, %v1606
    %v1609 = vsub.f32 %v1597, %v1607
    %v1610 = vmul.f32 %v1608, %v1608
    %v1611 = vmul.f32 %v1609, %v1609
    %v1612 = vsel %vm131, %v1610, 0.0
    %1613 = vadd.xlane.f32.xlu0 %v1612
    %v1614 = vpop.xlane.xlu0 %1613
    %v1615 = vsel %vm131, %v1611, 0.0
    %1616 = vadd.xlane.f32.xlu0 %v1615
    %v1617 = vpop.xlane.xlu0 %1616
    %v1618 = vmul.f32 %v1614, %v1358
    %v1619 = vmul.f32 %v1617, %v1358
    %v1620 = vadd.f32 %v1618, 1e-12
    %v1621 = vadd.f32 %v1619, 1e-12
    %v1622 = vrsqrt.pop %v1620
    %v1623 = vrsqrt.pop %v1621
    %v1624 = vmul.f32 %v1608, %v1622
    %v1625 = vmul.f32 %v1609, %v1623
    %v1627 = vlaneseq
    %v1628 = vshrl.u32 %v1627, 7
    %v1629 = vsub.s32 0, %v1628
    %v1630 = vrot.slane %v1598, %v1629
    %v1632 = vmul.f32 %v1624, %v1630
    %v1633 = vmul.f32 %v1625, %v1630
    %v1635 = vlaneseq
    %v1636 = vshrl.u32 %v1635, 7
    %v1637 = vsub.s32 0, %v1636
    %v1638 = vrot.slane %v1599, %v1637
    %v1640 = vadd.f32 %v1632, %v1638
    %v1641 = vadd.f32 %v1633, %v1638
    %s1642 = scalar_lea.vmem %s2, 32
    %v1643 = vld [vmem:[%s1642] sm:$0xff]
    %v1644 = vld [vmem:[%s1642 + $0x8] sm:$0xff]
    %v1645 = vld [vmem:[%s1642 + $0x10] sm:$0xff]
    %v1646 = vld [vmem:[%s1642 + $0x18] sm:$0xff]
    %s1647 = scalar_lea.vmem %s3, 1
    %v1648 = vld [vmem:[%s1647] sm:$0x1]
    %v1650 = vlaneseq
    %v1651 = vshrl.u32 %v1650, 7
    %v1652 = vsub.s32 0, %v1651
    %v1653 = vrot.slane %v1648, %v1652
    %v1656 = vsel %vm131, %v1640, 0
    %v1659 = vsel %vm131, %v1641, 0
    %1661 = vmatprep.subr.mxu0 0.0
    %1662 = vmatpush1.msra.mxu0 %v1643
    %1663 = vmatprep.subr.mxu0 0.0
    %1664 = vmatpush1.msra.mxu0 %v1644
    %1665 = vmatprep.subr.mxu0 0.0
    %1666 = vmatpush1.msra.mxu0 %v1645
    %1667 = vmatprep.subr.mxu0 0.0
    %1668 = vmatpush1.msra.mxu0 %v1646
    %1669 = vmatprep.subr.mxu0 0.0
    %1670 = vmatpush1.msra.mxu0 0.0
    %1671 = vmatprep.subr.mxu0 0.0
    %1672 = vmatpush1.msra.mxu0 0.0
    %1673 = vmatprep.subr.mxu0 0.0
    %1674 = vmatpush1.msra.mxu0 0.0
    %1675 = vmatprep.subr.mxu0 0.0
    %1676 = vmatpush1.msra.mxu0 0.0
    %1677 = vmatprep.subr.mxu0 0.0
    %1678 = vmatpush1.msra.mxu0 0.0
    %1679 = vmatprep.subr.mxu0 0.0
    %1680 = vmatpush1.msra.mxu0 0.0
    %1681 = vmatprep.subr.mxu0 0.0
    %1682 = vmatpush1.msra.mxu0 0.0
    %1683 = vmatprep.subr.mxu0 0.0
    %1684 = vmatpush1.msra.mxu0 0.0
    %1685 = vmatprep.subr.mxu0 0.0
    %1686 = vmatpush1.msra.mxu0 0.0
    %1687 = vmatprep.subr.mxu0 0.0
    %1688 = vmatpush1.msra.mxu0 0.0
    %1689 = vmatprep.subr.mxu0 0.0
    %1690 = vmatpush1.msra.mxu0 0.0
    %1691 = vmatprep.subr.mxu0 0.0
    %1692 = vmatpush1.msra.mxu0 0.0
    %1693 = vmatprep.subr.mxu0 0.0
    %1694 = vmatpush1.msra.mxu0 0.0
    %1695 = vmatprep.subr.mxu0 0.0
    %1696 = vmatpush1.msra.mxu0 0.0
    %1697 = vmatprep.subr.mxu0 0.0
    %1698 = vmatpush1.msra.mxu0 0.0
    %1699 = vmatprep.subr.mxu0 0.0
    %1700 = vmatpush1.msra.mxu0 0.0
    %1701 = vmatprep.subr.mxu0 0.0
    %1702 = vmatpush1.msra.mxu0 0.0
    %1703 = vmatprep.subr.mxu0 0.0
    %1704 = vmatpush1.msra.mxu0 0.0
    %1705 = vmatprep.subr.mxu0 0.0
    %1706 = vmatpush1.msra.mxu0 0.0
    %1707 = vmatprep.subr.mxu0 0.0
    %1708 = vmatpush1.msra.mxu0 0.0
    %1709 = vmatprep.subr.mxu0 0.0
    %1710 = vmatpush1.msra.mxu0 0.0
    %1711 = vmatprep.subr.mxu0 0.0
    %1712 = vmatpush1.msra.mxu0 0.0
    %1713 = vmatprep.subr.mxu0 0.0
    %1714 = vmatpush1.msra.mxu0 0.0
    %1715 = vmatprep.subr.mxu0 0.0
    %1716 = vmatpush1.msra.mxu0 0.0
    %1717 = vmatprep.subr.mxu0 0.0
    %1718 = vmatpush1.msra.mxu0 0.0
    %1719 = vmatprep.subr.mxu0 0.0
    %1720 = vmatpush1.msra.mxu0 0.0
    %1721 = vmatprep.subr.mxu0 0.0
    %1722 = vmatpush1.msra.mxu0 0.0
    %1723 = vmatprep.subr.mxu0 0.0
    %1724 = vmatpush1.msra.mxu0 0.0
    %1725 = vmatprep.mubr.f32.mxu0 0.0
    %1726 = vmatmul.mubr.f32.gmra.mrb[0].mxu0 %v1656
    %v1727 = vpop.f32.mrb[0].mxu0
    %v1728 = vadd.f32 %v1653, %v1727
    %v1729 = vpop.f32.mrb[0].mxu0
    %1730 = vmatprep.mubr.f32.mxu0 0.0
    %1731 = vmatmul.mubr.f32.gmra.mrb[0].mxu0 %v1659
    %v1732 = vpop.f32.mrb[0].mxu0
    %v1733 = vadd.f32 %v1653, %v1732
    %v1734 = vpop.f32.mrb[0].mxu0
    %1735 = vdwg.mxu0
    %1738 = vrot.lane.b32.xlu0 %v1728, 120
    %v1739 = vpop.permute.xlu0 %1738
    %1740 = vrot.lane.b32.xlu0 %v1733, 120
    %v1741 = vpop.permute.xlu0 %1740
    %1742 = vrot.lane.b32.xlu0 %v1728, 112
    %v1743 = vpop.permute.xlu0 %1742
    %1744 = vrot.lane.b32.xlu0 %v1733, 112
    %v1745 = vpop.permute.xlu0 %1744
    %1746 = vrot.lane.b32.xlu0 %v1728, 104
    %v1747 = vpop.permute.xlu0 %1746
    %1748 = vrot.lane.b32.xlu0 %v1733, 104
    %v1749 = vpop.permute.xlu0 %1748
    %1750 = vrot.lane.b32.xlu0 %v1728, 96
    %v1751 = vpop.permute.xlu0 %1750
    %1752 = vrot.lane.b32.xlu0 %v1733, 96
    %v1753 = vpop.permute.xlu0 %1752
    %v1754 = vsel %vm231, %v1728, 0
    %v1756 = vsel %vm231, %v1733, 0
    %v1758 = vsel %vm231, %v1751, 0
    %v1760 = vsel %vm231, %v1753, 0
    %1762 = vmatprep.subr.mxu0 0.0
    %1763 = vmatpush1.xpose.msra.mxu0 %v1758
    %1764 = vmatprep.subr.mxu0 0.0
    %1765 = vmatpush1.xpose.msra.mxu0 %v1760
    %1766 = vmatprep.subr.mxu0 0.0
    %1767 = vmatpush1.xpose.msra.mxu0 0.0
    %1768 = vmatprep.subr.mxu0 0.0
    %1769 = vmatpush1.xpose.msra.mxu0 0.0
    %1770 = vmatprep.subr.mxu0 0.0
    %1771 = vmatpush1.xpose.msra.mxu0 0.0
    %1772 = vmatprep.subr.mxu0 0.0
    %1773 = vmatpush1.xpose.msra.mxu0 0.0
    %1774 = vmatprep.subr.mxu0 0.0
    %1775 = vmatpush1.xpose.msra.mxu0 0.0
    %1776 = vmatprep.subr.mxu0 0.0
    %1777 = vmatpush1.xpose.msra.mxu0 0.0
    %1778 = vmatprep.subr.mxu0 0.0
    %1779 = vmatpush1.xpose.msra.mxu0 0.0
    %1780 = vmatprep.subr.mxu0 0.0
    %1781 = vmatpush1.xpose.msra.mxu0 0.0
    %1782 = vmatprep.subr.mxu0 0.0
    %1783 = vmatpush1.xpose.msra.mxu0 0.0
    %1784 = vmatprep.subr.mxu0 0.0
    %1785 = vmatpush1.xpose.msra.mxu0 0.0
    %1786 = vmatprep.subr.mxu0 0.0
    %1787 = vmatpush1.xpose.msra.mxu0 0.0
    %1788 = vmatprep.subr.mxu0 0.0
    %1789 = vmatpush1.xpose.msra.mxu0 0.0
    %1790 = vmatprep.subr.mxu0 0.0
    %1791 = vmatpush1.xpose.msra.mxu0 0.0
    %1792 = vmatprep.subr.mxu0 0.0
    %1793 = vmatpush1.xpose.msra.mxu0 0.0
    %1794 = vmatprep.subr.mxu0 0.0
    %1795 = vmatpush1.xpose.msra.mxu0 0.0
    %1796 = vmatprep.subr.mxu0 0.0
    %1797 = vmatpush1.xpose.msra.mxu0 0.0
    %1798 = vmatprep.subr.mxu0 0.0
    %1799 = vmatpush1.xpose.msra.mxu0 0.0
    %1800 = vmatprep.subr.mxu0 0.0
    %1801 = vmatpush1.xpose.msra.mxu0 0.0
    %1802 = vmatprep.subr.mxu0 0.0
    %1803 = vmatpush1.xpose.msra.mxu0 0.0
    %1804 = vmatprep.subr.mxu0 0.0
    %1805 = vmatpush1.xpose.msra.mxu0 0.0
    %1806 = vmatprep.subr.mxu0 0.0
    %1807 = vmatpush1.xpose.msra.mxu0 0.0
    %1808 = vmatprep.subr.mxu0 0.0
    %1809 = vmatpush1.xpose.msra.mxu0 0.0
    %1810 = vmatprep.subr.mxu0 0.0
    %1811 = vmatpush1.xpose.msra.mxu0 0.0
    %1812 = vmatprep.subr.mxu0 0.0
    %1813 = vmatpush1.xpose.msra.mxu0 0.0
    %1814 = vmatprep.subr.mxu0 0.0
    %1815 = vmatpush1.xpose.msra.mxu0 0.0
    %1816 = vmatprep.subr.mxu0 0.0
    %1817 = vmatpush1.xpose.msra.mxu0 0.0
    %1818 = vmatprep.subr.mxu0 0.0
    %1819 = vmatpush1.xpose.msra.mxu0 0.0
    %1820 = vmatprep.subr.mxu0 0.0
    %1821 = vmatpush1.xpose.msra.mxu0 0.0
    %1822 = vmatprep.subr.mxu0 0.0
    %1823 = vmatpush1.xpose.msra.mxu0 0.0
    %1824 = vmatprep.subr.mxu0 0.0
    %1825 = vmatpush1.xpose.msra.mxu0 0.0
    %1826 = vmatprep.mubr.f32.mxu0 0.0
    %1827 = vmatmul.mubr.f32.gmra.mrb[0].mxu0 %v1754
    %v1828 = vpop.f32.mrb[0].mxu0
    %v1829 = vadd.f32 %v106, %v1828
    %v1830 = vpop.f32.mrb[0].mxu0
    %1831 = vmatprep.mubr.f32.mxu0 0.0
    %1832 = vmatmul.mubr.f32.gmra.mrb[0].mxu0 %v1756
    %v1833 = vpop.f32.mrb[0].mxu0
    %v1834 = vadd.f32 %v107, %v1833
    %v1835 = vpop.f32.mrb[0].mxu0
    %1836 = vdwg.mxu0
    %1837 = vrot.lane.b32.xlu0 %v1739, 96
    %v1838 = vpop.permute.xlu0 %1837
    %1839 = vrot.lane.b32.xlu0 %v1741, 96
    %v1840 = vpop.permute.xlu0 %1839
    %v1841 = vsel %vm231, %v1739, 0
    %v1843 = vsel %vm231, %v1741, 0
    %v1845 = vsel %vm231, %v1838, 0
    %v1847 = vsel %vm231, %v1840, 0
    %1849 = vmatprep.subr.mxu0 0.0
    %1850 = vmatpush1.xpose.msra.mxu0 %v1845
    %1851 = vmatprep.subr.mxu0 0.0
    %1852 = vmatpush1.xpose.msra.mxu0 %v1847
    %1853 = vmatprep.subr.mxu0 0.0
    %1854 = vmatpush1.xpose.msra.mxu0 0.0
    %1855 = vmatprep.subr.mxu0 0.0
    %1856 = vmatpush1.xpose.msra.mxu0 0.0
    %1857 = vmatprep.subr.mxu0 0.0
    %1858 = vmatpush1.xpose.msra.mxu0 0.0
    %1859 = vmatprep.subr.mxu0 0.0
    %1860 = vmatpush1.xpose.msra.mxu0 0.0
    %1861 = vmatprep.subr.mxu0 0.0
    %1862 = vmatpush1.xpose.msra.mxu0 0.0
    %1863 = vmatprep.subr.mxu0 0.0
    %1864 = vmatpush1.xpose.msra.mxu0 0.0
    %1865 = vmatprep.subr.mxu0 0.0
    %1866 = vmatpush1.xpose.msra.mxu0 0.0
    %1867 = vmatprep.subr.mxu0 0.0
    %1868 = vmatpush1.xpose.msra.mxu0 0.0
    %1869 = vmatprep.subr.mxu0 0.0
    %1870 = vmatpush1.xpose.msra.mxu0 0.0
    %1871 = vmatprep.subr.mxu0 0.0
    %1872 = vmatpush1.xpose.msra.mxu0 0.0
    %1873 = vmatprep.subr.mxu0 0.0
    %1874 = vmatpush1.xpose.msra.mxu0 0.0
    %1875 = vmatprep.subr.mxu0 0.0
    %1876 = vmatpush1.xpose.msra.mxu0 0.0
    %1877 = vmatprep.subr.mxu0 0.0
    %1878 = vmatpush1.xpose.msra.mxu0 0.0
    %1879 = vmatprep.subr.mxu0 0.0
    %1880 = vmatpush1.xpose.msra.mxu0 0.0
    %1881 = vmatprep.subr.mxu0 0.0
    %1882 = vmatpush1.xpose.msra.mxu0 0.0
    %1883 = vmatprep.subr.mxu0 0.0
    %1884 = vmatpush1.xpose.msra.mxu0 0.0
    %1885 = vmatprep.subr.mxu0 0.0
    %1886 = vmatpush1.xpose.msra.mxu0 0.0
    %1887 = vmatprep.subr.mxu0 0.0
    %1888 = vmatpush1.xpose.msra.mxu0 0.0
    %1889 = vmatprep.subr.mxu0 0.0
    %1890 = vmatpush1.xpose.msra.mxu0 0.0
    %1891 = vmatprep.subr.mxu0 0.0
    %1892 = vmatpush1.xpose.msra.mxu0 0.0
    %1893 = vmatprep.subr.mxu0 0.0
    %1894 = vmatpush1.xpose.msra.mxu0 0.0
    %1895 = vmatprep.subr.mxu0 0.0
    %1896 = vmatpush1.xpose.msra.mxu0 0.0
    %1897 = vmatprep.subr.mxu0 0.0
    %1898 = vmatpush1.xpose.msra.mxu0 0.0
    %1899 = vmatprep.subr.mxu0 0.0
    %1900 = vmatpush1.xpose.msra.mxu0 0.0
    %1901 = vmatprep.subr.mxu0 0.0
    %1902 = vmatpush1.xpose.msra.mxu0 0.0
    %1903 = vmatprep.subr.mxu0 0.0
    %1904 = vmatpush1.xpose.msra.mxu0 0.0
    %1905 = vmatprep.subr.mxu0 0.0
    %1906 = vmatpush1.xpose.msra.mxu0 0.0
    %1907 = vmatprep.subr.mxu0 0.0
    %1908 = vmatpush1.xpose.msra.mxu0 0.0
    %1909 = vmatprep.subr.mxu0 0.0
    %1910 = vmatpush1.xpose.msra.mxu0 0.0
    %1911 = vmatprep.subr.mxu0 0.0
    %1912 = vmatpush1.xpose.msra.mxu0 0.0
    %1913 = vmatprep.mubr.f32.mxu0 0.0
    %1914 = vmatmul.mubr.f32.gmra.mrb[0].mxu0 %v1841
    %v1915 = vpop.f32.mrb[0].mxu0
    %v1916 = vadd.f32 %v110, %v1915
    %v1917 = vpop.f32.mrb[0].mxu0
    %1918 = vmatprep.mubr.f32.mxu0 0.0
    %1919 = vmatmul.mubr.f32.gmra.mrb[0].mxu0 %v1843
    %v1920 = vpop.f32.mrb[0].mxu0
    %v1921 = vadd.f32 %v111, %v1920
    %v1922 = vpop.f32.mrb[0].mxu0
    %1923 = vdwg.mxu0
    %1924 = vrot.lane.b32.xlu0 %v1743, 96
    %v1925 = vpop.permute.xlu0 %1924
    %1926 = vrot.lane.b32.xlu0 %v1745, 96
    %v1927 = vpop.permute.xlu0 %1926
    %v1928 = vsel %vm231, %v1743, 0
    %v1930 = vsel %vm231, %v1745, 0
    %v1932 = vsel %vm231, %v1925, 0
    %v1934 = vsel %vm231, %v1927, 0
    %1936 = vmatprep.subr.mxu0 0.0
    %1937 = vmatpush1.xpose.msra.mxu0 %v1932
    %1938 = vmatprep.subr.mxu0 0.0
    %1939 = vmatpush1.xpose.msra.mxu0 %v1934
    %1940 = vmatprep.subr.mxu0 0.0
    %1941 = vmatpush1.xpose.msra.mxu0 0.0
    %1942 = vmatprep.subr.mxu0 0.0
    %1943 = vmatpush1.xpose.msra.mxu0 0.0
    %1944 = vmatprep.subr.mxu0 0.0
    %1945 = vmatpush1.xpose.msra.mxu0 0.0
    %1946 = vmatprep.subr.mxu0 0.0
    %1947 = vmatpush1.xpose.msra.mxu0 0.0
    %1948 = vmatprep.subr.mxu0 0.0
    %1949 = vmatpush1.xpose.msra.mxu0 0.0
    %1950 = vmatprep.subr.mxu0 0.0
    %1951 = vmatpush1.xpose.msra.mxu0 0.0
    %1952 = vmatprep.subr.mxu0 0.0
    %1953 = vmatpush1.xpose.msra.mxu0 0.0
    %1954 = vmatprep.subr.mxu0 0.0
    %1955 = vmatpush1.xpose.msra.mxu0 0.0
    %1956 = vmatprep.subr.mxu0 0.0
    %1957 = vmatpush1.xpose.msra.mxu0 0.0
    %1958 = vmatprep.subr.mxu0 0.0
    %1959 = vmatpush1.xpose.msra.mxu0 0.0
    %1960 = vmatprep.subr.mxu0 0.0
    %1961 = vmatpush1.xpose.msra.mxu0 0.0
    %1962 = vmatprep.subr.mxu0 0.0
    %1963 = vmatpush1.xpose.msra.mxu0 0.0
    %1964 = vmatprep.subr.mxu0 0.0
    %1965 = vmatpush1.xpose.msra.mxu0 0.0
    %1966 = vmatprep.subr.mxu0 0.0
    %1967 = vmatpush1.xpose.msra.mxu0 0.0
    %1968 = vmatprep.subr.mxu0 0.0
    %1969 = vmatpush1.xpose.msra.mxu0 0.0
    %1970 = vmatprep.subr.mxu0 0.0
    %1971 = vmatpush1.xpose.msra.mxu0 0.0
    %1972 = vmatprep.subr.mxu0 0.0
    %1973 = vmatpush1.xpose.msra.mxu0 0.0
    %1974 = vmatprep.subr.mxu0 0.0
    %1975 = vmatpush1.xpose.msra.mxu0 0.0
    %1976 = vmatprep.subr.mxu0 0.0
    %1977 = vmatpush1.xpose.msra.mxu0 0.0
    %1978 = vmatprep.subr.mxu0 0.0
    %1979 = vmatpush1.xpose.msra.mxu0 0.0
    %1980 = vmatprep.subr.mxu0 0.0
    %1981 = vmatpush1.xpose.msra.mxu0 0.0
    %1982 = vmatprep.subr.mxu0 0.0
    %1983 = vmatpush1.xpose.msra.mxu0 0.0
    %1984 = vmatprep.subr.mxu0 0.0
    %1985 = vmatpush1.xpose.msra.mxu0 0.0
    %1986 = vmatprep.subr.mxu0 0.0
    %1987 = vmatpush1.xpose.msra.mxu0 0.0
    %1988 = vmatprep.subr.mxu0 0.0
    %1989 = vmatpush1.xpose.msra.mxu0 0.0
    %1990 = vmatprep.subr.mxu0 0.0
    %1991 = vmatpush1.xpose.msra.mxu0 0.0
    %1992 = vmatprep.subr.mxu0 0.0
    %1993 = vmatpush1.xpose.msra.mxu0 0.0
    %1994 = vmatprep.subr.mxu0 0.0
    %1995 = vmatpush1.xpose.msra.mxu0 0.0
    %1996 = vmatprep.subr.mxu0 0.0
    %1997 = vmatpush1.xpose.msra.mxu0 0.0
    %1998 = vmatprep.subr.mxu0 0.0
    %1999 = vmatpush1.xpose.msra.mxu0 0.0
    %2000 = vmatprep.mubr.f32.mxu0 0.0
    %2001 = vmatmul.mubr.f32.gmra.mrb[0].mxu0 %v1928
    %v2002 = vpop.f32.mrb[0].mxu0
    %v2003 = vadd.f32 %v114, %v2002
    %v2004 = vpop.f32.mrb[0].mxu0
    %2005 = vmatprep.mubr.f32.mxu0 0.0
    %2006 = vmatmul.mubr.f32.gmra.mrb[0].mxu0 %v1930
    %v2007 = vpop.f32.mrb[0].mxu0
    %v2008 = vadd.f32 %v115, %v2007
    %v2009 = vpop.f32.mrb[0].mxu0
    %2010 = vdwg.mxu0
    %2011 = vrot.lane.b32.xlu0 %v1747, 96
    %v2012 = vpop.permute.xlu0 %2011
    %2013 = vrot.lane.b32.xlu0 %v1749, 96
    %v2014 = vpop.permute.xlu0 %2013
    %v2015 = vsel %vm231, %v1747, 0
    %v2017 = vsel %vm231, %v1749, 0
    %v2019 = vsel %vm231, %v2012, 0
    %v2021 = vsel %vm231, %v2014, 0
    %2023 = vmatprep.subr.mxu0 0.0
    %2024 = vmatpush1.xpose.msra.mxu0 %v2019
    %2025 = vmatprep.subr.mxu0 0.0
    %2026 = vmatpush1.xpose.msra.mxu0 %v2021
    %2027 = vmatprep.subr.mxu0 0.0
    %2028 = vmatpush1.xpose.msra.mxu0 0.0
    %2029 = vmatprep.subr.mxu0 0.0
    %2030 = vmatpush1.xpose.msra.mxu0 0.0
    %2031 = vmatprep.subr.mxu0 0.0
    %2032 = vmatpush1.xpose.msra.mxu0 0.0
    %2033 = vmatprep.subr.mxu0 0.0
    %2034 = vmatpush1.xpose.msra.mxu0 0.0
    %2035 = vmatprep.subr.mxu0 0.0
    %2036 = vmatpush1.xpose.msra.mxu0 0.0
    %2037 = vmatprep.subr.mxu0 0.0
    %2038 = vmatpush1.xpose.msra.mxu0 0.0
    %2039 = vmatprep.subr.mxu0 0.0
    %2040 = vmatpush1.xpose.msra.mxu0 0.0
    %2041 = vmatprep.subr.mxu0 0.0
    %2042 = vmatpush1.xpose.msra.mxu0 0.0
    %2043 = vmatprep.subr.mxu0 0.0
    %2044 = vmatpush1.xpose.msra.mxu0 0.0
    %2045 = vmatprep.subr.mxu0 0.0
    %2046 = vmatpush1.xpose.msra.mxu0 0.0
    %2047 = vmatprep.subr.mxu0 0.0
    %2048 = vmatpush1.xpose.msra.mxu0 0.0
    %2049 = vmatprep.subr.mxu0 0.0
    %2050 = vmatpush1.xpose.msra.mxu0 0.0
    %2051 = vmatprep.subr.mxu0 0.0
    %2052 = vmatpush1.xpose.msra.mxu0 0.0
    %2053 = vmatprep.subr.mxu0 0.0
    %2054 = vmatpush1.xpose.msra.mxu0 0.0
    %2055 = vmatprep.subr.mxu0 0.0
    %2056 = vmatpush1.xpose.msra.mxu0 0.0
    %2057 = vmatprep.subr.mxu0 0.0
    %2058 = vmatpush1.xpose.msra.mxu0 0.0
    %2059 = vmatprep.subr.mxu0 0.0
    %2060 = vmatpush1.xpose.msra.mxu0 0.0
    %2061 = vmatprep.subr.mxu0 0.0
    %2062 = vmatpush1.xpose.msra.mxu0 0.0
    %2063 = vmatprep.subr.mxu0 0.0
    %2064 = vmatpush1.xpose.msra.mxu0 0.0
    %2065 = vmatprep.subr.mxu0 0.0
    %2066 = vmatpush1.xpose.msra.mxu0 0.0
    %2067 = vmatprep.subr.mxu0 0.0
    %2068 = vmatpush1.xpose.msra.mxu0 0.0
    %2069 = vmatprep.subr.mxu0 0.0
    %2070 = vmatpush1.xpose.msra.mxu0 0.0
    %2071 = vmatprep.subr.mxu0 0.0
    %2072 = vmatpush1.xpose.msra.mxu0 0.0
    %2073 = vmatprep.subr.mxu0 0.0
    %2074 = vmatpush1.xpose.msra.mxu0 0.0
    %2075 = vmatprep.subr.mxu0 0.0
    %2076 = vmatpush1.xpose.msra.mxu0 0.0
    %2077 = vmatprep.subr.mxu0 0.0
    %2078 = vmatpush1.xpose.msra.mxu0 0.0
    %2079 = vmatprep.subr.mxu0 0.0
    %2080 = vmatpush1.xpose.msra.mxu0 0.0
    %2081 = vmatprep.subr.mxu0 0.0
    %2082 = vmatpush1.xpose.msra.mxu0 0.0
    %2083 = vmatprep.subr.mxu0 0.0
    %2084 = vmatpush1.xpose.msra.mxu0 0.0
    %2085 = vmatprep.subr.mxu0 0.0
    %2086 = vmatpush1.xpose.msra.mxu0 0.0
    %2087 = vmatprep.mubr.f32.mxu0 0.0
    %2088 = vmatmul.mubr.f32.gmra.mrb[0].mxu0 %v2015
    %v2089 = vpop.f32.mrb[0].mxu0
    %v2090 = vadd.f32 %v118, %v2089
    %v2091 = vpop.f32.mrb[0].mxu0
    %2092 = vmatprep.mubr.f32.mxu0 0.0
    %2093 = vmatmul.mubr.f32.gmra.mrb[0].mxu0 %v2017
    %v2094 = vpop.f32.mrb[0].mxu0
    %v2095 = vadd.f32 %v119, %v2094
    %v2096 = vpop.f32.mrb[0].mxu0
    %2097 = vdwg.mxu0
    %v2098 = vmul.f32 %v1829, 1.442695
    %v2099 = vpow.pop %v2098
    %v2100 = vmul.f32 %v1834, 1.442695
    %v2101 = vpow.pop %v2100
    %v2102 = vmul.f32 %v1916, 1.442695
    %v2103 = vpow.pop %v2102
    %v2104 = vmul.f32 %v1921, 1.442695
    %v2105 = vpow.pop %v2104
    %v2106 = vmul.f32 %v2003, 1.442695
    %v2107 = vpow.pop %v2106
    %v2108 = vmul.f32 %v2008, 1.442695
    %v2109 = vpow.pop %v2108
    %v2110 = vmul.f32 %v2090, 1.442695
    %v2111 = vpow.pop %v2110
    %v2112 = vmul.f32 %v2095, 1.442695
    %v2113 = vpow.pop %v2112
    %v2114 = vsel %vm592, %v2099, 0.0
    %2115 = vadd.xlane.f32.xlu0 %v2114
    %v2116 = vpop.xlane.xlu0 %2115
    %v2117 = vsel %vm592, %v2101, 0.0
    %2118 = vadd.xlane.f32.xlu0 %v2117
    %v2119 = vpop.xlane.xlu0 %2118
    %v2120 = vsel %vm592, %v2103, 0.0
    %2121 = vadd.xlane.f32.xlu0 %v2120
    %v2122 = vpop.xlane.xlu0 %2121
    %v2123 = vsel %vm592, %v2105, 0.0
    %2124 = vadd.xlane.f32.xlu0 %v2123
    %v2125 = vpop.xlane.xlu0 %2124
    %v2126 = vsel %vm592, %v2107, 0.0
    %2127 = vadd.xlane.f32.xlu0 %v2126
    %v2128 = vpop.xlane.xlu0 %2127
    %v2129 = vsel %vm592, %v2109, 0.0
    %2130 = vadd.xlane.f32.xlu0 %v2129
    %v2131 = vpop.xlane.xlu0 %2130
    %v2132 = vsel %vm592, %v2111, 0.0
    %2133 = vadd.xlane.f32.xlu0 %v2132
    %v2134 = vpop.xlane.xlu0 %2133
    %v2135 = vsel %vm592, %v2113, 0.0
    %2136 = vadd.xlane.f32.xlu0 %v2135
    %v2137 = vpop.xlane.xlu0 %2136
    %v2138 = vrcp.pop %v2116
    %v2139 = vrcp.pop %v2119
    %v2140 = vrcp.pop %v2122
    %v2141 = vrcp.pop %v2125
    %v2142 = vrcp.pop %v2128
    %v2143 = vrcp.pop %v2131
    %v2144 = vrcp.pop %v2134
    %v2145 = vrcp.pop %v2137
    %v2146 = vmul.f32 %v2116, %v2138
    %v2147 = vmul.f32 %v2119, %v2139
    %v2148 = vmul.f32 %v2122, %v2140
    %v2149 = vmul.f32 %v2125, %v2141
    %v2150 = vmul.f32 %v2128, %v2142
    %v2151 = vmul.f32 %v2131, %v2143
    %v2152 = vmul.f32 %v2134, %v2144
    %v2153 = vmul.f32 %v2137, %v2145
    %v2154 = vsub.f32 2.0, %v2146
    %v2155 = vsub.f32 2.0, %v2147
    %v2156 = vsub.f32 2.0, %v2148
    %v2157 = vsub.f32 2.0, %v2149
    %v2158 = vsub.f32 2.0, %v2150
    %v2159 = vsub.f32 2.0, %v2151
    %v2160 = vsub.f32 2.0, %v2152
    %v2161 = vsub.f32 2.0, %v2153
    %v2162 = vmul.f32 %v2138, %v2154
    %v2163 = vmul.f32 %v2139, %v2155
    %v2164 = vmul.f32 %v2140, %v2156
    %v2165 = vmul.f32 %v2141, %v2157
    %v2166 = vmul.f32 %v2142, %v2158
    %v2167 = vmul.f32 %v2143, %v2159
    %v2168 = vmul.f32 %v2144, %v2160
    %v2169 = vmul.f32 %v2145, %v2161
    %v2170 = vmul.f32 %v2099, %v2162
    %v2171 = vmul.f32 %v2101, %v2163
    %v2172 = vmul.f32 %v2103, %v2164
    %v2173 = vmul.f32 %v2105, %v2165
    %v2174 = vmul.f32 %v2107, %v2166
    %v2175 = vmul.f32 %v2109, %v2167
    %v2176 = vmul.f32 %v2111, %v2168
    %v2177 = vmul.f32 %v2113, %v2169
    %2178 = vrot.lane.b32.xlu0 %v1728, 64
    %v2179 = vpop.permute.xlu0 %2178
    %2180 = vrot.lane.b32.xlu0 %v1733, 64
    %v2181 = vpop.permute.xlu0 %2180
    %v2185 = vsel %vm592, %v2170, 0
    %v2188 = vsel %vm592, %v2171, 0
    %2190 = vmatprep.subr.mxu0 0.0
    %2191 = vmatpush1.msra.mxu0 %v2179
    %2192 = vmatprep.subr.mxu0 0.0
    %2193 = vmatpush1.msra.mxu0 %v2181
    %2194 = vmatprep.subr.mxu0 0.0
    %2195 = vmatpush1.msra.mxu0 0.0
    %2196 = vmatprep.subr.mxu0 0.0
    %2197 = vmatpush1.msra.mxu0 0.0
    %2198 = vmatprep.subr.mxu0 0.0
    %2199 = vmatpush1.msra.mxu0 0.0
    %2200 = vmatprep.subr.mxu0 0.0
    %2201 = vmatpush1.msra.mxu0 0.0
    %2202 = vmatprep.subr.mxu0 0.0
    %2203 = vmatpush1.msra.mxu0 0.0
    %2204 = vmatprep.subr.mxu0 0.0
    %2205 = vmatpush1.msra.mxu0 0.0
    %2206 = vmatprep.subr.mxu0 0.0
    %2207 = vmatpush1.msra.mxu0 0.0
    %2208 = vmatprep.subr.mxu0 0.0
    %2209 = vmatpush1.msra.mxu0 0.0
    %2210 = vmatprep.subr.mxu0 0.0
    %2211 = vmatpush1.msra.mxu0 0.0
    %2212 = vmatprep.subr.mxu0 0.0
    %2213 = vmatpush1.msra.mxu0 0.0
    %2214 = vmatprep.subr.mxu0 0.0
    %2215 = vmatpush1.msra.mxu0 0.0
    %2216 = vmatprep.subr.mxu0 0.0
    %2217 = vmatpush1.msra.mxu0 0.0
    %2218 = vmatprep.subr.mxu0 0.0
    %2219 = vmatpush1.msra.mxu0 0.0
    %2220 = vmatprep.subr.mxu0 0.0
    %2221 = vmatpush1.msra.mxu0 0.0
    %2222 = vmatprep.subr.mxu0 0.0
    %2223 = vmatpush1.msra.mxu0 0.0
    %2224 = vmatprep.subr.mxu0 0.0
    %2225 = vmatpush1.msra.mxu0 0.0
    %2226 = vmatprep.subr.mxu0 0.0
    %2227 = vmatpush1.msra.mxu0 0.0
    %2228 = vmatprep.subr.mxu0 0.0
    %2229 = vmatpush1.msra.mxu0 0.0
    %2230 = vmatprep.subr.mxu0 0.0
    %2231 = vmatpush1.msra.mxu0 0.0
    %2232 = vmatprep.subr.mxu0 0.0
    %2233 = vmatpush1.msra.mxu0 0.0
    %2234 = vmatprep.subr.mxu0 0.0
    %2235 = vmatpush1.msra.mxu0 0.0
    %2236 = vmatprep.subr.mxu0 0.0
    %2237 = vmatpush1.msra.mxu0 0.0
    %2238 = vmatprep.subr.mxu0 0.0
    %2239 = vmatpush1.msra.mxu0 0.0
    %2240 = vmatprep.subr.mxu0 0.0
    %2241 = vmatpush1.msra.mxu0 0.0
    %2242 = vmatprep.subr.mxu0 0.0
    %2243 = vmatpush1.msra.mxu0 0.0
    %2244 = vmatprep.subr.mxu0 0.0
    %2245 = vmatpush1.msra.mxu0 0.0
    %2246 = vmatprep.subr.mxu0 0.0
    %2247 = vmatpush1.msra.mxu0 0.0
    %2248 = vmatprep.subr.mxu0 0.0
    %2249 = vmatpush1.msra.mxu0 0.0
    %2250 = vmatprep.subr.mxu0 0.0
    %2251 = vmatpush1.msra.mxu0 0.0
    %2252 = vmatprep.subr.mxu0 0.0
    %2253 = vmatpush1.msra.mxu0 0.0
    %2254 = vmatprep.mubr.f32.mxu0 0.0
    %2255 = vmatmul.mubr.f32.gmra.mrb[0].mxu0 %v2185
    %v2256 = vpop.f32.mrb[0].mxu0
    %v2257 = vadd.f32 0.0, %v2256
    %v2258 = vpop.f32.mrb[0].mxu0
    %2259 = vmatprep.mubr.f32.mxu0 0.0
    %2260 = vmatmul.mubr.f32.gmra.mrb[0].mxu0 %v2188
    %v2261 = vpop.f32.mrb[0].mxu0
    %v2262 = vadd.f32 0.0, %v2261
    %v2263 = vpop.f32.mrb[0].mxu0
    %2264 = vdwg.mxu0
    %2265 = vrot.lane.b32.xlu0 %v1739, 64
    %v2266 = vpop.permute.xlu0 %2265
    %2267 = vrot.lane.b32.xlu0 %v1741, 64
    %v2268 = vpop.permute.xlu0 %2267
    %v2272 = vsel %vm592, %v2172, 0
    %v2275 = vsel %vm592, %v2173, 0
    %2277 = vmatprep.subr.mxu0 0.0
    %2278 = vmatpush1.msra.mxu0 %v2266
    %2279 = vmatprep.subr.mxu0 0.0
    %2280 = vmatpush1.msra.mxu0 %v2268
    %2281 = vmatprep.subr.mxu0 0.0
    %2282 = vmatpush1.msra.mxu0 0.0
    %2283 = vmatprep.subr.mxu0 0.0
    %2284 = vmatpush1.msra.mxu0 0.0
    %2285 = vmatprep.subr.mxu0 0.0
    %2286 = vmatpush1.msra.mxu0 0.0
    %2287 = vmatprep.subr.mxu0 0.0
    %2288 = vmatpush1.msra.mxu0 0.0
    %2289 = vmatprep.subr.mxu0 0.0
    %2290 = vmatpush1.msra.mxu0 0.0
    %2291 = vmatprep.subr.mxu0 0.0
    %2292 = vmatpush1.msra.mxu0 0.0
    %2293 = vmatprep.subr.mxu0 0.0
    %2294 = vmatpush1.msra.mxu0 0.0
    %2295 = vmatprep.subr.mxu0 0.0
    %2296 = vmatpush1.msra.mxu0 0.0
    %2297 = vmatprep.subr.mxu0 0.0
    %2298 = vmatpush1.msra.mxu0 0.0
    %2299 = vmatprep.subr.mxu0 0.0
    %2300 = vmatpush1.msra.mxu0 0.0
    %2301 = vmatprep.subr.mxu0 0.0
    %2302 = vmatpush1.msra.mxu0 0.0
    %2303 = vmatprep.subr.mxu0 0.0
    %2304 = vmatpush1.msra.mxu0 0.0
    %2305 = vmatprep.subr.mxu0 0.0
    %2306 = vmatpush1.msra.mxu0 0.0
    %2307 = vmatprep.subr.mxu0 0.0
    %2308 = vmatpush1.msra.mxu0 0.0
    %2309 = vmatprep.subr.mxu0 0.0
    %2310 = vmatpush1.msra.mxu0 0.0
    %2311 = vmatprep.subr.mxu0 0.0
    %2312 = vmatpush1.msra.mxu0 0.0
    %2313 = vmatprep.subr.mxu0 0.0
    %2314 = vmatpush1.msra.mxu0 0.0
    %2315 = vmatprep.subr.mxu0 0.0
    %2316 = vmatpush1.msra.mxu0 0.0
    %2317 = vmatprep.subr.mxu0 0.0
    %2318 = vmatpush1.msra.mxu0 0.0
    %2319 = vmatprep.subr.mxu0 0.0
    %2320 = vmatpush1.msra.mxu0 0.0
    %2321 = vmatprep.subr.mxu0 0.0
    %2322 = vmatpush1.msra.mxu0 0.0
    %2323 = vmatprep.subr.mxu0 0.0
    %2324 = vmatpush1.msra.mxu0 0.0
    %2325 = vmatprep.subr.mxu0 0.0
    %2326 = vmatpush1.msra.mxu0 0.0
    %2327 = vmatprep.subr.mxu0 0.0
    %2328 = vmatpush1.msra.mxu0 0.0
    %2329 = vmatprep.subr.mxu0 0.0
    %2330 = vmatpush1.msra.mxu0 0.0
    %2331 = vmatprep.subr.mxu0 0.0
    %2332 = vmatpush1.msra.mxu0 0.0
    %2333 = vmatprep.subr.mxu0 0.0
    %2334 = vmatpush1.msra.mxu0 0.0
    %2335 = vmatprep.subr.mxu0 0.0
    %2336 = vmatpush1.msra.mxu0 0.0
    %2337 = vmatprep.subr.mxu0 0.0
    %2338 = vmatpush1.msra.mxu0 0.0
    %2339 = vmatprep.subr.mxu0 0.0
    %2340 = vmatpush1.msra.mxu0 0.0
    %2341 = vmatprep.mubr.f32.mxu0 0.0
    %2342 = vmatmul.mubr.f32.gmra.mrb[0].mxu0 %v2272
    %v2343 = vpop.f32.mrb[0].mxu0
    %v2344 = vadd.f32 0.0, %v2343
    %v2345 = vpop.f32.mrb[0].mxu0
    %2346 = vmatprep.mubr.f32.mxu0 0.0
    %2347 = vmatmul.mubr.f32.gmra.mrb[0].mxu0 %v2275
    %v2348 = vpop.f32.mrb[0].mxu0
    %v2349 = vadd.f32 0.0, %v2348
    %v2350 = vpop.f32.mrb[0].mxu0
    %2351 = vdwg.mxu0
    %2352 = vrot.lane.b32.xlu0 %v1743, 64
    %v2353 = vpop.permute.xlu0 %2352
    %2354 = vrot.lane.b32.xlu0 %v1745, 64
    %v2355 = vpop.permute.xlu0 %2354
    %v2359 = vsel %vm592, %v2174, 0
    %v2362 = vsel %vm592, %v2175, 0
    %2364 = vmatprep.subr.mxu0 0.0
    %2365 = vmatpush1.msra.mxu0 %v2353
    %2366 = vmatprep.subr.mxu0 0.0
    %2367 = vmatpush1.msra.mxu0 %v2355
    %2368 = vmatprep.subr.mxu0 0.0
    %2369 = vmatpush1.msra.mxu0 0.0
    %2370 = vmatprep.subr.mxu0 0.0
    %2371 = vmatpush1.msra.mxu0 0.0
    %2372 = vmatprep.subr.mxu0 0.0
    %2373 = vmatpush1.msra.mxu0 0.0
    %2374 = vmatprep.subr.mxu0 0.0
    %2375 = vmatpush1.msra.mxu0 0.0
    %2376 = vmatprep.subr.mxu0 0.0
    %2377 = vmatpush1.msra.mxu0 0.0
    %2378 = vmatprep.subr.mxu0 0.0
    %2379 = vmatpush1.msra.mxu0 0.0
    %2380 = vmatprep.subr.mxu0 0.0
    %2381 = vmatpush1.msra.mxu0 0.0
    %2382 = vmatprep.subr.mxu0 0.0
    %2383 = vmatpush1.msra.mxu0 0.0
    %2384 = vmatprep.subr.mxu0 0.0
    %2385 = vmatpush1.msra.mxu0 0.0
    %2386 = vmatprep.subr.mxu0 0.0
    %2387 = vmatpush1.msra.mxu0 0.0
    %2388 = vmatprep.subr.mxu0 0.0
    %2389 = vmatpush1.msra.mxu0 0.0
    %2390 = vmatprep.subr.mxu0 0.0
    %2391 = vmatpush1.msra.mxu0 0.0
    %2392 = vmatprep.subr.mxu0 0.0
    %2393 = vmatpush1.msra.mxu0 0.0
    %2394 = vmatprep.subr.mxu0 0.0
    %2395 = vmatpush1.msra.mxu0 0.0
    %2396 = vmatprep.subr.mxu0 0.0
    %2397 = vmatpush1.msra.mxu0 0.0
    %2398 = vmatprep.subr.mxu0 0.0
    %2399 = vmatpush1.msra.mxu0 0.0
    %2400 = vmatprep.subr.mxu0 0.0
    %2401 = vmatpush1.msra.mxu0 0.0
    %2402 = vmatprep.subr.mxu0 0.0
    %2403 = vmatpush1.msra.mxu0 0.0
    %2404 = vmatprep.subr.mxu0 0.0
    %2405 = vmatpush1.msra.mxu0 0.0
    %2406 = vmatprep.subr.mxu0 0.0
    %2407 = vmatpush1.msra.mxu0 0.0
    %2408 = vmatprep.subr.mxu0 0.0
    %2409 = vmatpush1.msra.mxu0 0.0
    %2410 = vmatprep.subr.mxu0 0.0
    %2411 = vmatpush1.msra.mxu0 0.0
    %2412 = vmatprep.subr.mxu0 0.0
    %2413 = vmatpush1.msra.mxu0 0.0
    %2414 = vmatprep.subr.mxu0 0.0
    %2415 = vmatpush1.msra.mxu0 0.0
    %2416 = vmatprep.subr.mxu0 0.0
    %2417 = vmatpush1.msra.mxu0 0.0
    %2418 = vmatprep.subr.mxu0 0.0
    %2419 = vmatpush1.msra.mxu0 0.0
    %2420 = vmatprep.subr.mxu0 0.0
    %2421 = vmatpush1.msra.mxu0 0.0
    %2422 = vmatprep.subr.mxu0 0.0
    %2423 = vmatpush1.msra.mxu0 0.0
    %2424 = vmatprep.subr.mxu0 0.0
    %2425 = vmatpush1.msra.mxu0 0.0
    %2426 = vmatprep.subr.mxu0 0.0
    %2427 = vmatpush1.msra.mxu0 0.0
    %2428 = vmatprep.mubr.f32.mxu0 0.0
    %2429 = vmatmul.mubr.f32.gmra.mrb[0].mxu0 %v2359
    %v2430 = vpop.f32.mrb[0].mxu0
    %v2431 = vadd.f32 0.0, %v2430
    %v2432 = vpop.f32.mrb[0].mxu0
    %2433 = vmatprep.mubr.f32.mxu0 0.0
    %2434 = vmatmul.mubr.f32.gmra.mrb[0].mxu0 %v2362
    %v2435 = vpop.f32.mrb[0].mxu0
    %v2436 = vadd.f32 0.0, %v2435
    %v2437 = vpop.f32.mrb[0].mxu0
    %2438 = vdwg.mxu0
    %2439 = vrot.lane.b32.xlu0 %v1747, 64
    %v2440 = vpop.permute.xlu0 %2439
    %2441 = vrot.lane.b32.xlu0 %v1749, 64
    %v2442 = vpop.permute.xlu0 %2441
    %v2446 = vsel %vm592, %v2176, 0
    %v2449 = vsel %vm592, %v2177, 0
    %2451 = vmatprep.subr.mxu0 0.0
    %2452 = vmatpush1.msra.mxu0 %v2440
    %2453 = vmatprep.subr.mxu0 0.0
    %2454 = vmatpush1.msra.mxu0 %v2442
    %2455 = vmatprep.subr.mxu0 0.0
    %2456 = vmatpush1.msra.mxu0 0.0
    %2457 = vmatprep.subr.mxu0 0.0
    %2458 = vmatpush1.msra.mxu0 0.0
    %2459 = vmatprep.subr.mxu0 0.0
    %2460 = vmatpush1.msra.mxu0 0.0
    %2461 = vmatprep.subr.mxu0 0.0
    %2462 = vmatpush1.msra.mxu0 0.0
    %2463 = vmatprep.subr.mxu0 0.0
    %2464 = vmatpush1.msra.mxu0 0.0
    %2465 = vmatprep.subr.mxu0 0.0
    %2466 = vmatpush1.msra.mxu0 0.0
    %2467 = vmatprep.subr.mxu0 0.0
    %2468 = vmatpush1.msra.mxu0 0.0
    %2469 = vmatprep.subr.mxu0 0.0
    %2470 = vmatpush1.msra.mxu0 0.0
    %2471 = vmatprep.subr.mxu0 0.0
    %2472 = vmatpush1.msra.mxu0 0.0
    %2473 = vmatprep.subr.mxu0 0.0
    %2474 = vmatpush1.msra.mxu0 0.0
    %2475 = vmatprep.subr.mxu0 0.0
    %2476 = vmatpush1.msra.mxu0 0.0
    %2477 = vmatprep.subr.mxu0 0.0
    %2478 = vmatpush1.msra.mxu0 0.0
    %2479 = vmatprep.subr.mxu0 0.0
    %2480 = vmatpush1.msra.mxu0 0.0
    %2481 = vmatprep.subr.mxu0 0.0
    %2482 = vmatpush1.msra.mxu0 0.0
    %2483 = vmatprep.subr.mxu0 0.0
    %2484 = vmatpush1.msra.mxu0 0.0
    %2485 = vmatprep.subr.mxu0 0.0
    %2486 = vmatpush1.msra.mxu0 0.0
    %2487 = vmatprep.subr.mxu0 0.0
    %2488 = vmatpush1.msra.mxu0 0.0
    %2489 = vmatprep.subr.mxu0 0.0
    %2490 = vmatpush1.msra.mxu0 0.0
    %2491 = vmatprep.subr.mxu0 0.0
    %2492 = vmatpush1.msra.mxu0 0.0
    %2493 = vmatprep.subr.mxu0 0.0
    %2494 = vmatpush1.msra.mxu0 0.0
    %2495 = vmatprep.subr.mxu0 0.0
    %2496 = vmatpush1.msra.mxu0 0.0
    %2497 = vmatprep.subr.mxu0 0.0
    %2498 = vmatpush1.msra.mxu0 0.0
    %2499 = vmatprep.subr.mxu0 0.0
    %2500 = vmatpush1.msra.mxu0 0.0
    %2501 = vmatprep.subr.mxu0 0.0
    %2502 = vmatpush1.msra.mxu0 0.0
    %2503 = vmatprep.subr.mxu0 0.0
    %2504 = vmatpush1.msra.mxu0 0.0
    %2505 = vmatprep.subr.mxu0 0.0
    %2506 = vmatpush1.msra.mxu0 0.0
    %2507 = vmatprep.subr.mxu0 0.0
    %2508 = vmatpush1.msra.mxu0 0.0
    %2509 = vmatprep.subr.mxu0 0.0
    %2510 = vmatpush1.msra.mxu0 0.0
    %2511 = vmatprep.subr.mxu0 0.0
    %2512 = vmatpush1.msra.mxu0 0.0
    %2513 = vmatprep.subr.mxu0 0.0
    %2514 = vmatpush1.msra.mxu0 0.0
    %2515 = vmatprep.mubr.f32.mxu0 0.0
    %2516 = vmatmul.mubr.f32.gmra.mrb[0].mxu0 %v2446
    %v2517 = vpop.f32.mrb[0].mxu0
    %v2518 = vadd.f32 0.0, %v2517
    %v2519 = vpop.f32.mrb[0].mxu0
    %2520 = vmatprep.mubr.f32.mxu0 0.0
    %2521 = vmatmul.mubr.f32.gmra.mrb[0].mxu0 %v2449
    %v2522 = vpop.f32.mrb[0].mxu0
    %v2523 = vadd.f32 0.0, %v2522
    %v2524 = vpop.f32.mrb[0].mxu0
    %2525 = vdwg.mxu0
    %s2526 = scalar_lea.vmem %s4, 32
    %v2527 = vld [vmem:[%s2526] sm:$0xff]
    %v2528 = vld [vmem:[%s2526 + $0x8] sm:$0xff]
    %v2529 = vld [vmem:[%s2526 + $0x10] sm:$0xff]
    %v2530 = vld [vmem:[%s2526 + $0x18] sm:$0xff]
    %v2532 = vsel %vm231, %v2257, 0
    %v2535 = vsel %vm231, %v2262, 0
    %2537 = vmatprep.subr.mxu0 0.0
    %2538 = vmatpush1.msra.mxu0 %v2527
    %2539 = vmatprep.subr.mxu0 0.0
    %2540 = vmatpush1.msra.mxu0 0.0
    %2541 = vmatprep.subr.mxu0 0.0
    %2542 = vmatpush1.msra.mxu0 0.0
    %2543 = vmatprep.subr.mxu0 0.0
    %2544 = vmatpush1.msra.mxu0 0.0
    %2545 = vmatprep.subr.mxu0 0.0
    %2546 = vmatpush1.msra.mxu0 0.0
    %2547 = vmatprep.subr.mxu0 0.0
    %2548 = vmatpush1.msra.mxu0 0.0
    %2549 = vmatprep.subr.mxu0 0.0
    %2550 = vmatpush1.msra.mxu0 0.0
    %2551 = vmatprep.subr.mxu0 0.0
    %2552 = vmatpush1.msra.mxu0 0.0
    %2553 = vmatprep.subr.mxu0 0.0
    %2554 = vmatpush1.msra.mxu0 0.0
    %2555 = vmatprep.subr.mxu0 0.0
    %2556 = vmatpush1.msra.mxu0 0.0
    %2557 = vmatprep.subr.mxu0 0.0
    %2558 = vmatpush1.msra.mxu0 0.0
    %2559 = vmatprep.subr.mxu0 0.0
    %2560 = vmatpush1.msra.mxu0 0.0
    %2561 = vmatprep.subr.mxu0 0.0
    %2562 = vmatpush1.msra.mxu0 0.0
    %2563 = vmatprep.subr.mxu0 0.0
    %2564 = vmatpush1.msra.mxu0 0.0
    %2565 = vmatprep.subr.mxu0 0.0
    %2566 = vmatpush1.msra.mxu0 0.0
    %2567 = vmatprep.subr.mxu0 0.0
    %2568 = vmatpush1.msra.mxu0 0.0
    %2569 = vmatprep.subr.mxu0 0.0
    %2570 = vmatpush1.msra.mxu0 0.0
    %2571 = vmatprep.subr.mxu0 0.0
    %2572 = vmatpush1.msra.mxu0 0.0
    %2573 = vmatprep.subr.mxu0 0.0
    %2574 = vmatpush1.msra.mxu0 0.0
    %2575 = vmatprep.subr.mxu0 0.0
    %2576 = vmatpush1.msra.mxu0 0.0
    %2577 = vmatprep.subr.mxu0 0.0
    %2578 = vmatpush1.msra.mxu0 0.0
    %2579 = vmatprep.subr.mxu0 0.0
    %2580 = vmatpush1.msra.mxu0 0.0
    %2581 = vmatprep.subr.mxu0 0.0
    %2582 = vmatpush1.msra.mxu0 0.0
    %2583 = vmatprep.subr.mxu0 0.0
    %2584 = vmatpush1.msra.mxu0 0.0
    %2585 = vmatprep.subr.mxu0 0.0
    %2586 = vmatpush1.msra.mxu0 0.0
    %2587 = vmatprep.subr.mxu0 0.0
    %2588 = vmatpush1.msra.mxu0 0.0
    %2589 = vmatprep.subr.mxu0 0.0
    %2590 = vmatpush1.msra.mxu0 0.0
    %2591 = vmatprep.subr.mxu0 0.0
    %2592 = vmatpush1.msra.mxu0 0.0
    %2593 = vmatprep.subr.mxu0 0.0
    %2594 = vmatpush1.msra.mxu0 0.0
    %2595 = vmatprep.subr.mxu0 0.0
    %2596 = vmatpush1.msra.mxu0 0.0
    %2597 = vmatprep.subr.mxu0 0.0
    %2598 = vmatpush1.msra.mxu0 0.0
    %2599 = vmatprep.subr.mxu0 0.0
    %2600 = vmatpush1.msra.mxu0 0.0
    %2601 = vmatprep.mubr.f32.mxu0 0.0
    %2602 = vmatmul.mubr.f32.gmra.mrb[0].mxu0 %v2532
    %v2603 = vpop.f32.mrb[0].mxu0
    %v2604 = vadd.f32 0.0, %v2603
    %v2605 = vpop.f32.mrb[0].mxu0
    %2606 = vmatprep.mubr.f32.mxu0 0.0
    %2607 = vmatmul.mubr.f32.gmra.mrb[0].mxu0 %v2535
    %v2608 = vpop.f32.mrb[0].mxu0
    %v2609 = vadd.f32 0.0, %v2608
    %v2610 = vpop.f32.mrb[0].mxu0
    %2611 = vdwg.mxu0
    %v2613 = vsel %vm231, %v2344, 0
    %v2616 = vsel %vm231, %v2349, 0
    %2618 = vmatprep.subr.mxu0 0.0
    %2619 = vmatpush1.msra.mxu0 %v2528
    %2620 = vmatprep.subr.mxu0 0.0
    %2621 = vmatpush1.msra.mxu0 0.0
    %2622 = vmatprep.subr.mxu0 0.0
    %2623 = vmatpush1.msra.mxu0 0.0
    %2624 = vmatprep.subr.mxu0 0.0
    %2625 = vmatpush1.msra.mxu0 0.0
    %2626 = vmatprep.subr.mxu0 0.0
    %2627 = vmatpush1.msra.mxu0 0.0
    %2628 = vmatprep.subr.mxu0 0.0
    %2629 = vmatpush1.msra.mxu0 0.0
    %2630 = vmatprep.subr.mxu0 0.0
    %2631 = vmatpush1.msra.mxu0 0.0
    %2632 = vmatprep.subr.mxu0 0.0
    %2633 = vmatpush1.msra.mxu0 0.0
    %2634 = vmatprep.subr.mxu0 0.0
    %2635 = vmatpush1.msra.mxu0 0.0
    %2636 = vmatprep.subr.mxu0 0.0
    %2637 = vmatpush1.msra.mxu0 0.0
    %2638 = vmatprep.subr.mxu0 0.0
    %2639 = vmatpush1.msra.mxu0 0.0
    %2640 = vmatprep.subr.mxu0 0.0
    %2641 = vmatpush1.msra.mxu0 0.0
    %2642 = vmatprep.subr.mxu0 0.0
    %2643 = vmatpush1.msra.mxu0 0.0
    %2644 = vmatprep.subr.mxu0 0.0
    %2645 = vmatpush1.msra.mxu0 0.0
    %2646 = vmatprep.subr.mxu0 0.0
    %2647 = vmatpush1.msra.mxu0 0.0
    %2648 = vmatprep.subr.mxu0 0.0
    %2649 = vmatpush1.msra.mxu0 0.0
    %2650 = vmatprep.subr.mxu0 0.0
    %2651 = vmatpush1.msra.mxu0 0.0
    %2652 = vmatprep.subr.mxu0 0.0
    %2653 = vmatpush1.msra.mxu0 0.0
    %2654 = vmatprep.subr.mxu0 0.0
    %2655 = vmatpush1.msra.mxu0 0.0
    %2656 = vmatprep.subr.mxu0 0.0
    %2657 = vmatpush1.msra.mxu0 0.0
    %2658 = vmatprep.subr.mxu0 0.0
    %2659 = vmatpush1.msra.mxu0 0.0
    %2660 = vmatprep.subr.mxu0 0.0
    %2661 = vmatpush1.msra.mxu0 0.0
    %2662 = vmatprep.subr.mxu0 0.0
    %2663 = vmatpush1.msra.mxu0 0.0
    %2664 = vmatprep.subr.mxu0 0.0
    %2665 = vmatpush1.msra.mxu0 0.0
    %2666 = vmatprep.subr.mxu0 0.0
    %2667 = vmatpush1.msra.mxu0 0.0
    %2668 = vmatprep.subr.mxu0 0.0
    %2669 = vmatpush1.msra.mxu0 0.0
    %2670 = vmatprep.subr.mxu0 0.0
    %2671 = vmatpush1.msra.mxu0 0.0
    %2672 = vmatprep.subr.mxu0 0.0
    %2673 = vmatpush1.msra.mxu0 0.0
    %2674 = vmatprep.subr.mxu0 0.0
    %2675 = vmatpush1.msra.mxu0 0.0
    %2676 = vmatprep.subr.mxu0 0.0
    %2677 = vmatpush1.msra.mxu0 0.0
    %2678 = vmatprep.subr.mxu0 0.0
    %2679 = vmatpush1.msra.mxu0 0.0
    %2680 = vmatprep.subr.mxu0 0.0
    %2681 = vmatpush1.msra.mxu0 0.0
    %2682 = vmatprep.mubr.f32.mxu0 0.0
    %2683 = vmatmul.mubr.f32.gmra.mrb[0].mxu0 %v2613
    %v2684 = vpop.f32.mrb[0].mxu0
    %v2685 = vadd.f32 0.0, %v2684
    %v2686 = vpop.f32.mrb[0].mxu0
    %2687 = vmatprep.mubr.f32.mxu0 0.0
    %2688 = vmatmul.mubr.f32.gmra.mrb[0].mxu0 %v2616
    %v2689 = vpop.f32.mrb[0].mxu0
    %v2690 = vadd.f32 0.0, %v2689
    %v2691 = vpop.f32.mrb[0].mxu0
    %2692 = vdwg.mxu0
    %v2694 = vsel %vm231, %v2431, 0
    %v2697 = vsel %vm231, %v2436, 0
    %2699 = vmatprep.subr.mxu0 0.0
    %2700 = vmatpush1.msra.mxu0 %v2529
    %2701 = vmatprep.subr.mxu0 0.0
    %2702 = vmatpush1.msra.mxu0 0.0
    %2703 = vmatprep.subr.mxu0 0.0
    %2704 = vmatpush1.msra.mxu0 0.0
    %2705 = vmatprep.subr.mxu0 0.0
    %2706 = vmatpush1.msra.mxu0 0.0
    %2707 = vmatprep.subr.mxu0 0.0
    %2708 = vmatpush1.msra.mxu0 0.0
    %2709 = vmatprep.subr.mxu0 0.0
    %2710 = vmatpush1.msra.mxu0 0.0
    %2711 = vmatprep.subr.mxu0 0.0
    %2712 = vmatpush1.msra.mxu0 0.0
    %2713 = vmatprep.subr.mxu0 0.0
    %2714 = vmatpush1.msra.mxu0 0.0
    %2715 = vmatprep.subr.mxu0 0.0
    %2716 = vmatpush1.msra.mxu0 0.0
    %2717 = vmatprep.subr.mxu0 0.0
    %2718 = vmatpush1.msra.mxu0 0.0
    %2719 = vmatprep.subr.mxu0 0.0
    %2720 = vmatpush1.msra.mxu0 0.0
    %2721 = vmatprep.subr.mxu0 0.0
    %2722 = vmatpush1.msra.mxu0 0.0
    %2723 = vmatprep.subr.mxu0 0.0
    %2724 = vmatpush1.msra.mxu0 0.0
    %2725 = vmatprep.subr.mxu0 0.0
    %2726 = vmatpush1.msra.mxu0 0.0
    %2727 = vmatprep.subr.mxu0 0.0
    %2728 = vmatpush1.msra.mxu0 0.0
    %2729 = vmatprep.subr.mxu0 0.0
    %2730 = vmatpush1.msra.mxu0 0.0
    %2731 = vmatprep.subr.mxu0 0.0
    %2732 = vmatpush1.msra.mxu0 0.0
    %2733 = vmatprep.subr.mxu0 0.0
    %2734 = vmatpush1.msra.mxu0 0.0
    %2735 = vmatprep.subr.mxu0 0.0
    %2736 = vmatpush1.msra.mxu0 0.0
    %2737 = vmatprep.subr.mxu0 0.0
    %2738 = vmatpush1.msra.mxu0 0.0
    %2739 = vmatprep.subr.mxu0 0.0
    %2740 = vmatpush1.msra.mxu0 0.0
    %2741 = vmatprep.subr.mxu0 0.0
    %2742 = vmatpush1.msra.mxu0 0.0
    %2743 = vmatprep.subr.mxu0 0.0
    %2744 = vmatpush1.msra.mxu0 0.0
    %2745 = vmatprep.subr.mxu0 0.0
    %2746 = vmatpush1.msra.mxu0 0.0
    %2747 = vmatprep.subr.mxu0 0.0
    %2748 = vmatpush1.msra.mxu0 0.0
    %2749 = vmatprep.subr.mxu0 0.0
    %2750 = vmatpush1.msra.mxu0 0.0
    %2751 = vmatprep.subr.mxu0 0.0
    %2752 = vmatpush1.msra.mxu0 0.0
    %2753 = vmatprep.subr.mxu0 0.0
    %2754 = vmatpush1.msra.mxu0 0.0
    %2755 = vmatprep.subr.mxu0 0.0
    %2756 = vmatpush1.msra.mxu0 0.0
    %2757 = vmatprep.subr.mxu0 0.0
    %2758 = vmatpush1.msra.mxu0 0.0
    %2759 = vmatprep.subr.mxu0 0.0
    %2760 = vmatpush1.msra.mxu0 0.0
    %2761 = vmatprep.subr.mxu0 0.0
    %2762 = vmatpush1.msra.mxu0 0.0
    %2763 = vmatprep.mubr.f32.mxu0 0.0
    %2764 = vmatmul.mubr.f32.gmra.mrb[0].mxu0 %v2694
    %v2765 = vpop.f32.mrb[0].mxu0
    %v2766 = vadd.f32 0.0, %v2765
    %v2767 = vpop.f32.mrb[0].mxu0
    %2768 = vmatprep.mubr.f32.mxu0 0.0
    %2769 = vmatmul.mubr.f32.gmra.mrb[0].mxu0 %v2697
    %v2770 = vpop.f32.mrb[0].mxu0
    %v2771 = vadd.f32 0.0, %v2770
    %v2772 = vpop.f32.mrb[0].mxu0
    %2773 = vdwg.mxu0
    %v2775 = vsel %vm231, %v2518, 0
    %v2778 = vsel %vm231, %v2523, 0
    %2780 = vmatprep.subr.mxu0 0.0
    %2781 = vmatpush1.msra.mxu0 %v2530
    %2782 = vmatprep.subr.mxu0 0.0
    %2783 = vmatpush1.msra.mxu0 0.0
    %2784 = vmatprep.subr.mxu0 0.0
    %2785 = vmatpush1.msra.mxu0 0.0
    %2786 = vmatprep.subr.mxu0 0.0
    %2787 = vmatpush1.msra.mxu0 0.0
    %2788 = vmatprep.subr.mxu0 0.0
    %2789 = vmatpush1.msra.mxu0 0.0
    %2790 = vmatprep.subr.mxu0 0.0
    %2791 = vmatpush1.msra.mxu0 0.0
    %2792 = vmatprep.subr.mxu0 0.0
    %2793 = vmatpush1.msra.mxu0 0.0
    %2794 = vmatprep.subr.mxu0 0.0
    %2795 = vmatpush1.msra.mxu0 0.0
    %2796 = vmatprep.subr.mxu0 0.0
    %2797 = vmatpush1.msra.mxu0 0.0
    %2798 = vmatprep.subr.mxu0 0.0
    %2799 = vmatpush1.msra.mxu0 0.0
    %2800 = vmatprep.subr.mxu0 0.0
    %2801 = vmatpush1.msra.mxu0 0.0
    %2802 = vmatprep.subr.mxu0 0.0
    %2803 = vmatpush1.msra.mxu0 0.0
    %2804 = vmatprep.subr.mxu0 0.0
    %2805 = vmatpush1.msra.mxu0 0.0
    %2806 = vmatprep.subr.mxu0 0.0
    %2807 = vmatpush1.msra.mxu0 0.0
    %2808 = vmatprep.subr.mxu0 0.0
    %2809 = vmatpush1.msra.mxu0 0.0
    %2810 = vmatprep.subr.mxu0 0.0
    %2811 = vmatpush1.msra.mxu0 0.0
    %2812 = vmatprep.subr.mxu0 0.0
    %2813 = vmatpush1.msra.mxu0 0.0
    %2814 = vmatprep.subr.mxu0 0.0
    %2815 = vmatpush1.msra.mxu0 0.0
    %2816 = vmatprep.subr.mxu0 0.0
    %2817 = vmatpush1.msra.mxu0 0.0
    %2818 = vmatprep.subr.mxu0 0.0
    %2819 = vmatpush1.msra.mxu0 0.0
    %2820 = vmatprep.subr.mxu0 0.0
    %2821 = vmatpush1.msra.mxu0 0.0
    %2822 = vmatprep.subr.mxu0 0.0
    %2823 = vmatpush1.msra.mxu0 0.0
    %2824 = vmatprep.subr.mxu0 0.0
    %2825 = vmatpush1.msra.mxu0 0.0
    %2826 = vmatprep.subr.mxu0 0.0
    %2827 = vmatpush1.msra.mxu0 0.0
    %2828 = vmatprep.subr.mxu0 0.0
    %2829 = vmatpush1.msra.mxu0 0.0
    %2830 = vmatprep.subr.mxu0 0.0
    %2831 = vmatpush1.msra.mxu0 0.0
    %2832 = vmatprep.subr.mxu0 0.0
    %2833 = vmatpush1.msra.mxu0 0.0
    %2834 = vmatprep.subr.mxu0 0.0
    %2835 = vmatpush1.msra.mxu0 0.0
    %2836 = vmatprep.subr.mxu0 0.0
    %2837 = vmatpush1.msra.mxu0 0.0
    %2838 = vmatprep.subr.mxu0 0.0
    %2839 = vmatpush1.msra.mxu0 0.0
    %2840 = vmatprep.subr.mxu0 0.0
    %2841 = vmatpush1.msra.mxu0 0.0
    %2842 = vmatprep.subr.mxu0 0.0
    %2843 = vmatpush1.msra.mxu0 0.0
    %2844 = vmatprep.mubr.f32.mxu0 0.0
    %2845 = vmatmul.mubr.f32.gmra.mrb[0].mxu0 %v2775
    %v2846 = vpop.f32.mrb[0].mxu0
    %v2847 = vadd.f32 0.0, %v2846
    %v2848 = vpop.f32.mrb[0].mxu0
    %2849 = vmatprep.mubr.f32.mxu0 0.0
    %2850 = vmatmul.mubr.f32.gmra.mrb[0].mxu0 %v2778
    %v2851 = vpop.f32.mrb[0].mxu0
    %v2852 = vadd.f32 0.0, %v2851
    %v2853 = vpop.f32.mrb[0].mxu0
    %2854 = vdwg.mxu0
    %v2855 = vadd.f32 %v2604, %v2685
    %v2856 = vadd.f32 %v2609, %v2690
    %v2857 = vadd.f32 %v2855, %v2766
    %v2858 = vadd.f32 %v2856, %v2771
    %v2859 = vadd.f32 %v2857, %v2847
    %v2860 = vadd.f32 %v2858, %v2852
    %s2861 = scalar_lea.vmem %s5, 1
    %v2862 = vld [vmem:[%s2861] sm:$0x1]
    %v2864 = vlaneseq
    %v2865 = vshrl.u32 %v2864, 7
    %v2866 = vsub.s32 0, %v2865
    %v2867 = vrot.slane %v2862, %v2866
    %v2869 = vadd.f32 %v2859, %v2867
    %v2870 = vadd.f32 %v2860, %v2867
    %v2871 = vadd.f32 %v2869, %v1640
    %v2872 = vadd.f32 %v2870, %v1641
    %s2873 = scalar_lea.vmem %s6, 1
    %v2874 = vld [vmem:[%s2873] sm:$0x1]
    %s2875 = scalar_lea.vmem %s7, 1
    %v2876 = vld [vmem:[%s2875] sm:$0x1]
    %v2877 = vsel %vm131, %v2871, 0.0
    %2878 = vadd.xlane.f32.xlu0 %v2877
    %v2879 = vpop.xlane.xlu0 %2878
    %v2880 = vsel %vm131, %v2872, 0.0
    %2881 = vadd.xlane.f32.xlu0 %v2880
    %v2882 = vpop.xlane.xlu0 %2881
    %v2883 = vmul.f32 %v2879, %v1358
    %v2884 = vmul.f32 %v2882, %v1358
    %v2885 = vsub.f32 %v2871, %v2883
    %v2886 = vsub.f32 %v2872, %v2884
    %v2887 = vmul.f32 %v2885, %v2885
    %v2888 = vmul.f32 %v2886, %v2886
    %v2889 = vsel %vm131, %v2887, 0.0
    %2890 = vadd.xlane.f32.xlu0 %v2889
    %v2891 = vpop.xlane.xlu0 %2890
    %v2892 = vsel %vm131, %v2888, 0.0
    %2893 = vadd.xlane.f32.xlu0 %v2892
    %v2894 = vpop.xlane.xlu0 %2893
    %v2895 = vmul.f32 %v2891, %v1358
    %v2896 = vmul.f32 %v2894, %v1358
    %v2897 = vadd.f32 %v2895, 1e-12
    %v2898 = vadd.f32 %v2896, 1e-12
    %v2899 = vrsqrt.pop %v2897
    %v2900 = vrsqrt.pop %v2898
    %v2901 = vmul.f32 %v2885, %v2899
    %v2902 = vmul.f32 %v2886, %v2900
    %v2904 = vlaneseq
    %v2905 = vshrl.u32 %v2904, 7
    %v2906 = vsub.s32 0, %v2905
    %v2907 = vrot.slane %v2874, %v2906
    %v2909 = vmul.f32 %v2901, %v2907
    %v2910 = vmul.f32 %v2902, %v2907
    %v2912 = vlaneseq
    %v2913 = vshrl.u32 %v2912, 7
    %v2914 = vsub.s32 0, %v2913
    %v2915 = vrot.slane %v2876, %v2914
    %v2917 = vadd.f32 %v2909, %v2915
    %v2918 = vadd.f32 %v2910, %v2915
    %s2919 = scalar_lea.vmem %s8, 32
    %v2920 = vld [vmem:[%s2919] sm:$0xff]
    %v2921 = vld [vmem:[%s2919 + $0x8] sm:$0xff]
    %v2922 = vld [vmem:[%s2919 + $0x10] sm:$0xff]
    %v2923 = vld [vmem:[%s2919 + $0x18] sm:$0xff]
    %s2924 = scalar_lea.vmem %s9, 1
    %v2925 = vld [vmem:[%s2924] sm:$0x1]
    %v2927 = vlaneseq
    %v2928 = vshrl.u32 %v2927, 7
    %v2929 = vsub.s32 0, %v2928
    %v2930 = vrot.slane %v2925, %v2929
    %v2933 = vsel %vm131, %v2917, 0
    %v2936 = vsel %vm131, %v2918, 0
    %2938 = vmatprep.subr.mxu0 0.0
    %2939 = vmatpush1.msra.mxu0 %v2920
    %2940 = vmatprep.subr.mxu0 0.0
    %2941 = vmatpush1.msra.mxu0 %v2921
    %2942 = vmatprep.subr.mxu0 0.0
    %2943 = vmatpush1.msra.mxu0 %v2922
    %2944 = vmatprep.subr.mxu0 0.0
    %2945 = vmatpush1.msra.mxu0 %v2923
    %2946 = vmatprep.subr.mxu0 0.0
    %2947 = vmatpush1.msra.mxu0 0.0
    %2948 = vmatprep.subr.mxu0 0.0
    %2949 = vmatpush1.msra.mxu0 0.0
    %2950 = vmatprep.subr.mxu0 0.0
    %2951 = vmatpush1.msra.mxu0 0.0
    %2952 = vmatprep.subr.mxu0 0.0
    %2953 = vmatpush1.msra.mxu0 0.0
    %2954 = vmatprep.subr.mxu0 0.0
    %2955 = vmatpush1.msra.mxu0 0.0
    %2956 = vmatprep.subr.mxu0 0.0
    %2957 = vmatpush1.msra.mxu0 0.0
    %2958 = vmatprep.subr.mxu0 0.0
    %2959 = vmatpush1.msra.mxu0 0.0
    %2960 = vmatprep.subr.mxu0 0.0
    %2961 = vmatpush1.msra.mxu0 0.0
    %2962 = vmatprep.subr.mxu0 0.0
    %2963 = vmatpush1.msra.mxu0 0.0
    %2964 = vmatprep.subr.mxu0 0.0
    %2965 = vmatpush1.msra.mxu0 0.0
    %2966 = vmatprep.subr.mxu0 0.0
    %2967 = vmatpush1.msra.mxu0 0.0
    %2968 = vmatprep.subr.mxu0 0.0
    %2969 = vmatpush1.msra.mxu0 0.0
    %2970 = vmatprep.subr.mxu0 0.0
    %2971 = vmatpush1.msra.mxu0 0.0
    %2972 = vmatprep.subr.mxu0 0.0
    %2973 = vmatpush1.msra.mxu0 0.0
    %2974 = vmatprep.subr.mxu0 0.0
    %2975 = vmatpush1.msra.mxu0 0.0
    %2976 = vmatprep.subr.mxu0 0.0
    %2977 = vmatpush1.msra.mxu0 0.0
    %2978 = vmatprep.subr.mxu0 0.0
    %2979 = vmatpush1.msra.mxu0 0.0
    %2980 = vmatprep.subr.mxu0 0.0
    %2981 = vmatpush1.msra.mxu0 0.0
    %2982 = vmatprep.subr.mxu0 0.0
    %2983 = vmatpush1.msra.mxu0 0.0
    %2984 = vmatprep.subr.mxu0 0.0
    %2985 = vmatpush1.msra.mxu0 0.0
    %2986 = vmatprep.subr.mxu0 0.0
    %2987 = vmatpush1.msra.mxu0 0.0
    %2988 = vmatprep.subr.mxu0 0.0
    %2989 = vmatpush1.msra.mxu0 0.0
    %2990 = vmatprep.subr.mxu0 0.0
    %2991 = vmatpush1.msra.mxu0 0.0
    %2992 = vmatprep.subr.mxu0 0.0
    %2993 = vmatpush1.msra.mxu0 0.0
    %2994 = vmatprep.subr.mxu0 0.0
    %2995 = vmatpush1.msra.mxu0 0.0
    %2996 = vmatprep.subr.mxu0 0.0
    %2997 = vmatpush1.msra.mxu0 0.0
    %2998 = vmatprep.subr.mxu0 0.0
    %2999 = vmatpush1.msra.mxu0 0.0
    %3000 = vmatprep.subr.mxu0 0.0
    %3001 = vmatpush1.msra.mxu0 0.0
    %3002 = vmatprep.mubr.f32.mxu0 0.0
    %3003 = vmatmul.mubr.f32.gmra.mrb[0].mxu0 %v2933
    %v3004 = vpop.f32.mrb[0].mxu0
    %v3005 = vadd.f32 %v2930, %v3004
    %v3006 = vpop.f32.mrb[0].mxu0
    %3007 = vmatprep.mubr.f32.mxu0 0.0
    %3008 = vmatmul.mubr.f32.gmra.mrb[0].mxu0 %v2936
    %v3009 = vpop.f32.mrb[0].mxu0
    %v3010 = vadd.f32 %v2930, %v3009
    %v3011 = vpop.f32.mrb[0].mxu0
    %3012 = vdwg.mxu0
    %v3013 = vmul.f32 %v3005, 0.5
    %v3014 = vmul.f32 %v3010, 0.5
    %v3015 = vmul.f32 %v3005, %v1489
    %v3016 = vmul.f32 %v3010, %v1489
    %v3017 = verf.f32.pop %v3015
    %v3018 = verf.f32.pop %v3016
    %v3019 = vadd.f32 %v3017, 1.0
    %v3020 = vadd.f32 %v3018, 1.0
    %v3021 = vmul.f32 %v3013, %v3019
    %v3022 = vmul.f32 %v3014, %v3020
    %s3023 = scalar_lea.vmem %s10, 128
    %v3024 = vld [vmem:[%s3023] sm:$0xff]
    %v3025 = vld [vmem:[%s3023 + $0x8] sm:$0xff]
    %v3026 = vld [vmem:[%s3023 + $0x10] sm:$0xff]
    %v3027 = vld [vmem:[%s3023 + $0x18] sm:$0xff]
    %v3028 = vld [vmem:[%s3023 + $0x20] sm:$0xff]
    %v3029 = vld [vmem:[%s3023 + $0x28] sm:$0xff]
    %v3030 = vld [vmem:[%s3023 + $0x30] sm:$0xff]
    %v3031 = vld [vmem:[%s3023 + $0x38] sm:$0xff]
    %v3032 = vld [vmem:[%s3023 + $0x40] sm:$0xff]
    %v3033 = vld [vmem:[%s3023 + $0x48] sm:$0xff]
    %v3034 = vld [vmem:[%s3023 + $0x50] sm:$0xff]
    %v3035 = vld [vmem:[%s3023 + $0x58] sm:$0xff]
    %v3036 = vld [vmem:[%s3023 + $0x60] sm:$0xff]
    %v3037 = vld [vmem:[%s3023 + $0x68] sm:$0xff]
    %v3038 = vld [vmem:[%s3023 + $0x70] sm:$0xff]
    %v3039 = vld [vmem:[%s3023 + $0x78] sm:$0xff]
    %s3040 = scalar_lea.vmem %s11, 1
    %v3041 = vld [vmem:[%s3040] sm:$0x1]
    %v3043 = vlaneseq
    %v3044 = vshrl.u32 %v3043, 7
    %v3045 = vsub.s32 0, %v3044
    %v3046 = vrot.slane %v3041, %v3045
    %3048 = vmatprep.subr.mxu0 0.0
    %3049 = vmatpush1.msra.mxu0 %v3024
    %3050 = vmatprep.subr.mxu0 0.0
    %3051 = vmatpush1.msra.mxu0 %v3025
    %3052 = vmatprep.subr.mxu0 0.0
    %3053 = vmatpush1.msra.mxu0 %v3026
    %3054 = vmatprep.subr.mxu0 0.0
    %3055 = vmatpush1.msra.mxu0 %v3027
    %3056 = vmatprep.subr.mxu0 0.0
    %3057 = vmatpush1.msra.mxu0 %v3028
    %3058 = vmatprep.subr.mxu0 0.0
    %3059 = vmatpush1.msra.mxu0 %v3029
    %3060 = vmatprep.subr.mxu0 0.0
    %3061 = vmatpush1.msra.mxu0 %v3030
    %3062 = vmatprep.subr.mxu0 0.0
    %3063 = vmatpush1.msra.mxu0 %v3031
    %3064 = vmatprep.subr.mxu0 0.0
    %3065 = vmatpush1.msra.mxu0 %v3032
    %3066 = vmatprep.subr.mxu0 0.0
    %3067 = vmatpush1.msra.mxu0 %v3033
    %3068 = vmatprep.subr.mxu0 0.0
    %3069 = vmatpush1.msra.mxu0 %v3034
    %3070 = vmatprep.subr.mxu0 0.0
    %3071 = vmatpush1.msra.mxu0 %v3035
    %3072 = vmatprep.subr.mxu0 0.0
    %3073 = vmatpush1.msra.mxu0 %v3036
    %3074 = vmatprep.subr.mxu0 0.0
    %3075 = vmatpush1.msra.mxu0 %v3037
    %3076 = vmatprep.subr.mxu0 0.0
    %3077 = vmatpush1.msra.mxu0 %v3038
    %3078 = vmatprep.subr.mxu0 0.0
    %3079 = vmatpush1.msra.mxu0 %v3039
    %3080 = vmatprep.subr.mxu0 0.0
    %3081 = vmatpush1.msra.mxu0 0.0
    %3082 = vmatprep.subr.mxu0 0.0
    %3083 = vmatpush1.msra.mxu0 0.0
    %3084 = vmatprep.subr.mxu0 0.0
    %3085 = vmatpush1.msra.mxu0 0.0
    %3086 = vmatprep.subr.mxu0 0.0
    %3087 = vmatpush1.msra.mxu0 0.0
    %3088 = vmatprep.subr.mxu0 0.0
    %3089 = vmatpush1.msra.mxu0 0.0
    %3090 = vmatprep.subr.mxu0 0.0
    %3091 = vmatpush1.msra.mxu0 0.0
    %3092 = vmatprep.subr.mxu0 0.0
    %3093 = vmatpush1.msra.mxu0 0.0
    %3094 = vmatprep.subr.mxu0 0.0
    %3095 = vmatpush1.msra.mxu0 0.0
    %3096 = vmatprep.subr.mxu0 0.0
    %3097 = vmatpush1.msra.mxu0 0.0
    %3098 = vmatprep.subr.mxu0 0.0
    %3099 = vmatpush1.msra.mxu0 0.0
    %3100 = vmatprep.subr.mxu0 0.0
    %3101 = vmatpush1.msra.mxu0 0.0
    %3102 = vmatprep.subr.mxu0 0.0
    %3103 = vmatpush1.msra.mxu0 0.0
    %3104 = vmatprep.subr.mxu0 0.0
    %3105 = vmatpush1.msra.mxu0 0.0
    %3106 = vmatprep.subr.mxu0 0.0
    %3107 = vmatpush1.msra.mxu0 0.0
    %3108 = vmatprep.subr.mxu0 0.0
    %3109 = vmatpush1.msra.mxu0 0.0
    %3110 = vmatprep.subr.mxu0 0.0
    %3111 = vmatpush1.msra.mxu0 0.0
    %3112 = vmatprep.mubr.f32.mxu0 0.0
    %3113 = vmatmul.mubr.f32.gmra.mrb[0].mxu0 %v3021
    %v3114 = vpop.f32.mrb[0].mxu0
    %v3115 = vadd.f32 %v3046, %v3114
    %v3116 = vpop.f32.mrb[0].mxu0
    %3117 = vmatprep.mubr.f32.mxu0 0.0
    %3118 = vmatmul.mubr.f32.gmra.mrb[0].mxu0 %v3022
    %v3119 = vpop.f32.mrb[0].mxu0
    %v3120 = vadd.f32 %v3046, %v3119
    %v3121 = vpop.f32.mrb[0].mxu0
    %3122 = vdwg.mxu0
    %v3123 = vadd.f32 %v3115, %v2917
    %v3124 = vadd.f32 %v3120, %v2918
    %s3125 = scalar_lea.vmem %s12, 1
    %v3126 = vld [vmem:[%s3125] sm:$0x1]
    %s3127 = scalar_lea.vmem %s13, 1
    %v3128 = vld [vmem:[%s3127] sm:$0x1]
    %v3129 = vsel %vm131, %v3123, 0.0
    %3130 = vadd.xlane.f32.xlu0 %v3129
    %v3131 = vpop.xlane.xlu0 %3130
    %v3132 = vsel %vm131, %v3124, 0.0
    %3133 = vadd.xlane.f32.xlu0 %v3132
    %v3134 = vpop.xlane.xlu0 %3133
    %v3135 = vmul.f32 %v3131, %v1358
    %v3136 = vmul.f32 %v3134, %v1358
    %v3137 = vsub.f32 %v3123, %v3135
    %v3138 = vsub.f32 %v3124, %v3136
    %v3139 = vmul.f32 %v3137, %v3137
    %v3140 = vmul.f32 %v3138, %v3138
    %v3141 = vsel %vm131, %v3139, 0.0
    %3142 = vadd.xlane.f32.xlu0 %v3141
    %v3143 = vpop.xlane.xlu0 %3142
    %v3144 = vsel %vm131, %v3140, 0.0
    %3145 = vadd.xlane.f32.xlu0 %v3144
    %v3146 = vpop.xlane.xlu0 %3145
    %v3147 = vmul.f32 %v3143, %v1358
    %v3148 = vmul.f32 %v3146, %v1358
    %v3149 = vadd.f32 %v3147, 1e-12
    %v3150 = vadd.f32 %v3148, 1e-12
    %v3151 = vrsqrt.pop %v3149
    %v3152 = vrsqrt.pop %v3150
    %v3153 = vmul.f32 %v3137, %v3151
    %v3154 = vmul.f32 %v3138, %v3152
    %v3156 = vlaneseq
    %v3157 = vshrl.u32 %v3156, 7
    %v3158 = vsub.s32 0, %v3157
    %v3159 = vrot.slane %v3126, %v3158
    %v3161 = vmul.f32 %v3153, %v3159
    %v3162 = vmul.f32 %v3154, %v3159
    %v3164 = vlaneseq
    %v3165 = vshrl.u32 %v3164, 7
    %v3166 = vsub.s32 0, %v3165
    %v3167 = vrot.slane %v3128, %v3166
    %v3169 = vadd.f32 %v3161, %v3167
    %v3170 = vadd.f32 %v3162, %v3167
    %3171 = vst.msk [vmem:[#allocation2] sm:$0xff] %vm131, %v3169
    %3172 = vst.msk [vmem:[#allocation2 + $0x8] sm:$0xff] %vm131, %v3170
    // Predicated region
    $region58: #{tpu_custom_call.1} parent=1 // pred_check
      _
    $region59: #{tpu_custom_call.1} parent=1 // pred_check_branch
      %3174 = sbr.rel (0) target = $region61
    $region60: #{tpu_custom_call.1} parent=1 // pred_region
      %s3176 = ssub.s32 256, 256
      %3177 = vsyncadd [#allocation3], %s3176
      %s3178 = sshll.u32 [#allocation2], 4
      %s3179 = int_to_ptr.vmem [resolvable:$true] %s3178
      %3184 = dma.vmem_to_hbm [thread:$0]  %s3179, 256, %s14, [#allocation3], 128, 128, 8
    $region61: #{tpu_custom_call.1} parent=1 // pred_fallthru
      _
    // Predicated region
    $region62: #{tpu_custom_call.1} parent=1 // pred_check
      _
    $region63: #{tpu_custom_call.1} parent=1 // pred_check_branch
      %3186 = sbr.rel (0) target = $region65
    $region64: #{tpu_custom_call.1} parent=1 // pred_region
      %3187 = dma.done [#allocation3], 256
    $region65: #{tpu_custom_call.1} parent=1 // pred_fallthru
      _
    %3188 = vsyncpa [#allocation3], 1

</llo_original>
